<compile_context>
chip_gen: v7x
topology: tpu7x:2x2x1
jax: 0.10.0
libtpu: 0.0.40
codegen_flags: <defaults>
</compile_context>

<pallas_src>
import functools

import jax
import jax.numpy as jnp
from jax.experimental import pallas as pl
from jax.experimental.pallas import tpu as pltpu


def _round_up(v, m):
    return ((v + m - 1) // m) * m


def _const_spec(shape):
    """BlockSpec for a small parameter kept fully resident at every grid step."""
    zeros = (0,) * len(shape)
    return pl.BlockSpec(shape, lambda n, _z=zeros: _z)


# ----------------------------------------------------------------------------
# Fused Bottleneck kernel: one image (one grid step) per invocation.
# ----------------------------------------------------------------------------
def _bottleneck_kernel(x_ref, w1_ref, w2_ref, w3_ref,
                       s1_ref, b1_ref, s2_ref, b2_ref, s3_ref, b3_ref,
                       cfc0_ref, cfc1_ref, srm_s_ref, srm_b_ref,
                       o_ref, acc_ref, *, inv_hw, inv_hw_m1):
    _, h, w, cin = x_ref.shape
    width_p = w1_ref.shape[1]          # padded inner width (multiple of 128)
    cout = w3_ref.shape[1]
    hw = h * w
    dn2 = (((1,), (0,)), ((), ()))     # (M, K) x (K, N) contraction

    x2 = x_ref[0].reshape(hw, cin)                                  # f32

    # ---- conv1 (1x1) + bn1 + ReLU  (bf16 MXU inputs, f32 accumulate) -------
    y1 = jax.lax.dot_general(x2.astype(jnp.bfloat16), w1_ref[...], dn2,
                             preferred_element_type=jnp.float32)    # (HW, Wp)
    y1 = jnp.maximum(y1 * s1_ref[...] + b1_ref[...], 0.0)

    # ---- conv2 (3x3, stride 1, pad 1, groups=1) + bn2 + ReLU ---------------
    # kx taps folded into the contraction: build the two W-axis shifted
    # variants (zero boundary == padding=1) once in f32, concatenate along
    # channels -> K = 3*width_p, then 3 matmuls (one per ky).
    y1_3d = y1.reshape(h, w, width_p)
    zcol = jnp.zeros((h, 1, width_p), jnp.float32)
    v_m1 = jnp.concatenate([zcol, y1_3d[:, :w - 1, :]], axis=1)     # in[:, j-1]
    v_p1 = jnp.concatenate([y1_3d[:, 1:, :], zcol], axis=1)         # in[:, j+1]
    xcat = jnp.concatenate([v_m1, y1_3d, v_p1], axis=-1).astype(jnp.bfloat16)
    xcat2 = xcat.reshape(hw, 3 * width_p)                           # (HW, 3Wp)

    # ky = 1 (center): initializes every accumulator row.
    acc_ref[...] = jax.lax.dot_general(
        xcat2, w2_ref[1], dn2, preferred_element_type=jnp.float32)
    # ky = 0: out[i] += in[i-1] * w[0]  -> output rows 1..h-1 (w rows/step).
    acc_ref[pl.ds(w, hw - w), :] += jax.lax.dot_general(
        xcat2[:hw - w], w2_ref[0], dn2, preferred_element_type=jnp.float32)
    # ky = 2: out[i] += in[i+1] * w[2]  -> output rows 0..h-2.
    acc_ref[pl.ds(0, hw - w), :] += jax.lax.dot_general(
        xcat2[w:], w2_ref[2], dn2, preferred_element_type=jnp.float32)

    y2 = jnp.maximum(acc_ref[...] * s2_ref[...] + b2_ref[...], 0.0)  # (HW, Wp)

    # ---- conv3 (1x1) + bn3 (no ReLU yet) -----------------------------------
    y3 = jax.lax.dot_general(y2.astype(jnp.bfloat16), w3_ref[...], dn2,
                             preferred_element_type=jnp.float32)     # (HW, C)
    y3 = y3 * s3_ref[...] + b3_ref[...]

    # ---- SRM (style pooling + integration) + residual add + ReLU -----------
    # One-pass stats: sum & sumsq together; unbiased variance (HW - 1).
    s = jnp.sum(y3, axis=0, keepdims=True)                           # (1, C)
    ssq = jnp.sum(y3 * y3, axis=0, keepdims=True)                    # (1, C)
    mean = s * inv_hw
    var = jnp.maximum(ssq - mean * s, 0.0) * inv_hw_m1
    std = jnp.sqrt(var)
    z = mean * cfc0_ref[...] + std * cfc1_ref[...]
    z_hat = z * srm_s_ref[...] + srm_b_ref[...]                      # folded SRM BN
    g = 1.0 / (1.0 + jnp.exp(-z_hat))                                # sigmoid gate
    out = jnp.maximum(y3 * g + x2, 0.0)                              # identity skip
    o_ref[0] = out.reshape(h, w, cout)


# ----------------------------------------------------------------------------
# NHWC kernel entry point (recommended production boundary — no transposes)
# ----------------------------------------------------------------------------
def bottleneck_forward_nhwc(x_nhwc, p):
    n, h, w, cin = x_nhwc.shape
    width = p["w1"].shape[1]
    cout = p["w3"].shape[1]
    assert cin == cout, "downsample=None requires inplanes == planes*expansion"
    width_p = _round_up(width, 128)    # lane-dense internal channel dim
    hw = h * w
    f32 = jnp.float32

    # Host-side weight prep: zero-pad inner width to width_p (numerically a
    # no-op: padded channels stay exactly 0 through ReLU), fold kx into K.
    w1 = jnp.zeros((cin, width_p), f32).at[:, :width].set(p["w1"]).astype(jnp.bfloat16)
    w2p = jnp.zeros((3, 3, width_p, width_p), f32).at[:, :, :width, :width].set(p["w2"])
    w2cat = w2p.reshape(3, 3 * width_p, width_p).astype(jnp.bfloat16)   # (ky, kx*Cin, Cout)
    w3 = jnp.zeros((width_p, cout), f32).at[:width, :].set(p["w3"]).astype(jnp.bfloat16)

    def pad_vec(v):
        return jnp.zeros((1, width_p), f32).at[0, :width].set(v)

    s1, b1 = pad_vec(p["s1"]), pad_vec(p["b1"])
    s2, b2 = pad_vec(p["s2"]), pad_vec(p["b2"])
    s3, b3 = p["s3"].reshape(1, cout), p["b3"].reshape(1, cout)
    cfc0 = p["cfc"][:, 0].reshape(1, cout)
    cfc1 = p["cfc"][:, 1].reshape(1, cout)
    srm_s = p["srm_s"].reshape(1, cout)
    srm_b = p["srm_b"].reshape(1, cout)

    kernel = functools.partial(_bottleneck_kernel,
                               inv_hw=1.0 / hw,
                               inv_hw_m1=1.0 / max(hw - 1, 1))       # HW==1 guard

    return pl.pallas_call(
        kernel,
        out_shape=jax.ShapeDtypeStruct((n, h, w, cout), jnp.float32),
        grid=(n,),
        in_specs=[
            pl.BlockSpec((1, h, w, cin), lambda i: (i, 0, 0, 0)),    # x (per image)
            _const_spec((cin, width_p)),                             # w1
            _const_spec((3, 3 * width_p, width_p)),                  # w2 (kx-folded)
            _const_spec((width_p, cout)),                            # w3
            _const_spec((1, width_p)), _const_spec((1, width_p)),    # s1, b1
            _const_spec((1, width_p)), _const_spec((1, width_p)),    # s2, b2
            _const_spec((1, cout)), _const_spec((1, cout)),          # s3, b3
            _const_spec((1, cout)), _const_spec((1, cout)),          # cfc0, cfc1
            _const_spec((1, cout)), _const_spec((1, cout)),          # srm_s, srm_b
        ],
        out_specs=pl.BlockSpec((1, h, w, cout), lambda i: (i, 0, 0, 0)),
        scratch_shapes=[pltpu.VMEM((hw, width_p), jnp.float32)],     # conv2 acc
        compiler_params=pltpu.CompilerParams(
            dimension_semantics=("parallel",),      # 2x on v7x (2 TC/chip)
            vmem_limit_bytes=48 * 1024 * 1024),
    )(x_nhwc.astype(jnp.float32), w1, w2cat, w3,
      s1, b1, s2, b2, s3, b3, cfc0, cfc1, srm_s, srm_b)


# ----------------------------------------------------------------------------
# NCHW adapter (matches the PyTorch module interface)
# ----------------------------------------------------------------------------
def bottleneck_forward(x_nchw, p):
    # TODO(synk): in an NHWC end-to-end model these boundary transposes vanish
    # (use bottleneck_forward_nhwc directly); kept here only to mirror PyTorch.
    x = jnp.transpose(x_nchw, (0, 2, 3, 1))
    out = bottleneck_forward_nhwc(x, p)
    return jnp.transpose(out, (0, 3, 1, 2))


# ----------------------------------------------------------------------------
# Pure-JAX reference (numerics-matched: same bf16 matmul inputs, f32 accumulate)
# ----------------------------------------------------------------------------
def bottleneck_reference(x_nchw, p):
    x = jnp.transpose(x_nchw, (0, 2, 3, 1)).astype(jnp.float32)
    w1 = p["w1"].astype(jnp.bfloat16)
    w2 = p["w2"].astype(jnp.bfloat16)
    w3 = p["w3"].astype(jnp.bfloat16)

    y = jax.lax.dot_general(x.astype(jnp.bfloat16), w1,
                            dimension_numbers=(((3,), (0,)), ((), ())),
                            preferred_element_type=jnp.float32)
    y = jax.nn.relu(y * p["s1"] + p["b1"])
    y = jax.lax.conv_general_dilated(
        y.astype(jnp.bfloat16), w2, window_strides=(1, 1), padding="SAME",
        dimension_numbers=("NHWC", "HWIO", "NHWC"),
        preferred_element_type=jnp.float32)
    y = jax.nn.relu(y * p["s2"] + p["b2"])
    y = jax.lax.dot_general(y.astype(jnp.bfloat16), w3,
                            dimension_numbers=(((3,), (0,)), ((), ())),
                            preferred_element_type=jnp.float32)
    y = y * p["s3"] + p["b3"]

    n, h, w, c = y.shape
    yf = y.reshape(n, h * w, c)
    mean = yf.mean(axis=1)
    std = jnp.sqrt(((yf - mean[:, None, :]) ** 2).sum(axis=1) / max(h * w - 1, 1))
    z = mean * p["cfc"][:, 0] + std * p["cfc"][:, 1]
    g = jax.nn.sigmoid(z * p["srm_s"] + p["srm_b"])
    out = jax.nn.relu(y * g[:, None, None, :] + x)
    return jnp.transpose(out, (0, 3, 1, 2))


# ----------------------------------------------------------------------------
# Deterministic synthetic parameters (shapes from Bottleneck.__init__)
# ----------------------------------------------------------------------------
def init_params(key, inplanes, planes, base_width=64, groups=1):
    expansion = 4
    width = int(planes * (base_width / 64.0)) * groups
    cout = planes * expansion
    ks = jax.random.split(key, 20)

    def bn_fold(k0, k1, k2, k3, c):
        gamma = 1.0 + 0.1 * jax.random.normal(k0, (c,), jnp.float32)
        beta = 0.1 * jax.random.normal(k1, (c,), jnp.float32)
        rmean = 0.1 * jax.random.normal(k2, (c,), jnp.float32)
        rvar = 1.0 + 0.1 * jnp.abs(jax.random.normal(k3, (c,), jnp.float32))
        scale = gamma / jnp.sqrt(rvar + 1e-5)
        bias = beta - rmean * scale
        return scale, bias

    s1, b1 = bn_fold(ks[0], ks[1], ks[2], ks[3], width)
    s2, b2 = bn_fold(ks[4], ks[5], ks[6], ks[7], width)
    s3, b3 = bn_fold(ks[8], ks[9], ks[10], ks[11], cout)
    srm_s, srm_b = bn_fold(ks[12], ks[13], ks[14], ks[15], cout)

    return {
        # conv weights stored channels-last: (Cin, Cout) / (3, 3, Cin, Cout)
        "w1": 0.2 * jax.random.normal(ks[16], (inplanes, width), jnp.float32),
        "w2": 0.2 * jax.random.normal(ks[17], (3, 3, width, width), jnp.float32),
        "w3": 0.2 * jax.random.normal(ks[18], (width, cout), jnp.float32),
        "s1": s1, "b1": b1, "s2": s2, "b2": b2, "s3": s3, "b3": b3,
        # PyTorch init fills cfc with 0; use random values to exercise the path.
        "cfc": 0.5 * jax.random.normal(ks[19], (cout, 2), jnp.float32),
        "srm_s": srm_s, "srm_b": srm_b,
    }


if __name__ == "__main__":
    key = jax.random.PRNGKey(0)
    k_x, k_p = jax.random.split(key)

    # Bottleneck(inplanes=64, planes=16): width=16, out channels=64 (identity skip)
    inplanes, planes = 64, 16
    N, H, W = 2, 16, 16
    x = jax.random.normal(k_x, (N, inplanes, H, W), jnp.float32)   # NCHW, like PyTorch
    params = init_params(k_p, inplanes, planes)

    out = jax.block_until_ready(bottleneck_forward(x, params))
    ref = jax.block_until_ready(bottleneck_reference(x, params))

    assert out.shape == (N, planes * 4, H, W), out.shape
    assert bool(jnp.all(jnp.isfinite(out)))
    err = float(jnp.max(jnp.abs(out - ref)))
    assert jnp.allclose(out, ref, atol=2e-2, rtol=2e-2), err
    print("KERNEL_OK")
</pallas_src>

<mosaic_0001>
module attributes {stable_mosaic.version = 11 : i64} {
  func.func @_bottleneck_kernel(%arg0: i32, %arg1: memref<1x16x16x64xf32, #tpu.memory_space<vmem>>, %arg2: memref<64x128xbf16, #tpu.memory_space<vmem>>, %arg3: memref<3x384x128xbf16, #tpu.memory_space<vmem>>, %arg4: memref<128x64xbf16, #tpu.memory_space<vmem>>, %arg5: memref<1x128xf32, #tpu.memory_space<vmem>>, %arg6: memref<1x128xf32, #tpu.memory_space<vmem>>, %arg7: memref<1x128xf32, #tpu.memory_space<vmem>>, %arg8: memref<1x128xf32, #tpu.memory_space<vmem>>, %arg9: memref<1x64xf32, #tpu.memory_space<vmem>>, %arg10: memref<1x64xf32, #tpu.memory_space<vmem>>, %arg11: memref<1x64xf32, #tpu.memory_space<vmem>>, %arg12: memref<1x64xf32, #tpu.memory_space<vmem>>, %arg13: memref<1x64xf32, #tpu.memory_space<vmem>>, %arg14: memref<1x64xf32, #tpu.memory_space<vmem>>, %arg15: memref<1x16x16x64xf32, #tpu.memory_space<vmem>>, %arg16: memref<256x128xf32, #tpu.memory_space<vmem>>) attributes {dimension_semantics = [#tpu.dimension_semantics<parallel>], iteration_bounds = array<i64: 2>, scalar_prefetch = 0 : i64, scratch_operands = 1 : i64, tpu.core_type = #tpu.core_type<tc>, window_params = [{transform_indices = @transform_0, window_bounds = array<i64: 1, 16, 16, 64>}, {pipeline_mode = #tpu.pipeline_mode<synchronous>, transform_indices = @transform_1, window_bounds = array<i64: 64, 128>}, {pipeline_mode = #tpu.pipeline_mode<synchronous>, transform_indices = @transform_2, window_bounds = array<i64: 3, 384, 128>}, {pipeline_mode = #tpu.pipeline_mode<synchronous>, transform_indices = @transform_3, window_bounds = array<i64: 128, 64>}, {pipeline_mode = #tpu.pipeline_mode<synchronous>, transform_indices = @transform_4, window_bounds = array<i64: 1, 128>}, {pipeline_mode = #tpu.pipeline_mode<synchronous>, transform_indices = @transform_5, window_bounds = array<i64: 1, 128>}, {pipeline_mode = #tpu.pipeline_mode<synchronous>, transform_indices = @transform_6, window_bounds = array<i64: 1, 128>}, {pipeline_mode = #tpu.pipeline_mode<synchronous>, transform_indices = @transform_7, window_bounds = array<i64: 1, 128>}, {pipeline_mode = #tpu.pipeline_mode<synchronous>, transform_indices = @transform_8, window_bounds = array<i64: 1, 64>}, {pipeline_mode = #tpu.pipeline_mode<synchronous>, transform_indices = @transform_9, window_bounds = array<i64: 1, 64>}, {pipeline_mode = #tpu.pipeline_mode<synchronous>, transform_indices = @transform_10, window_bounds = array<i64: 1, 64>}, {pipeline_mode = #tpu.pipeline_mode<synchronous>, transform_indices = @transform_11, window_bounds = array<i64: 1, 64>}, {pipeline_mode = #tpu.pipeline_mode<synchronous>, transform_indices = @transform_12, window_bounds = array<i64: 1, 64>}, {pipeline_mode = #tpu.pipeline_mode<synchronous>, transform_indices = @transform_13, window_bounds = array<i64: 1, 64>}, {transform_indices = @transform_14, window_bounds = array<i64: 1, 16, 16, 64>}]} {
    %c0 = arith.constant 0 : index
    %c0_0 = arith.constant 0 : index
    %c0_1 = arith.constant 0 : index
    %c0_2 = arith.constant 0 : index
    %0 = vector.load %arg1[%c0, %c0_0, %c0_1, %c0_2] : memref<1x16x16x64xf32, #tpu.memory_space<vmem>>, vector<1x16x16x64xf32>
    %1 = vector.shape_cast %0 : vector<1x16x16x64xf32> to vector<16x16x64xf32>
    %2 = vector.shape_cast %1 : vector<16x16x64xf32> to vector<256x64xf32>
    %3 = arith.truncf %2 : vector<256x64xf32> to vector<256x64xbf16>
    %c0_3 = arith.constant 0 : index
    %c0_4 = arith.constant 0 : index
    %4 = vector.load %arg2[%c0_3, %c0_4] : memref<64x128xbf16, #tpu.memory_space<vmem>>, vector<64x128xbf16>
    %cst = arith.constant dense<0.000000e+00> : vector<256x128xf32>
    %5 = tpu.matmul %3, %4, %cst {dimension_numbers = #tpu.dot_dimension_numbers<[1], [0], [0], [1], [0, 0, 1, 1], [], []>} : vector<256x64xbf16>, vector<64x128xbf16>, vector<256x128xf32> -> vector<256x128xf32>
    %c0_5 = arith.constant 0 : index
    %c0_6 = arith.constant 0 : index
    %6 = vector.load %arg5[%c0_5, %c0_6] : memref<1x128xf32, #tpu.memory_space<vmem>>, vector<1x128xf32>
    %7 = vector.broadcast %6 : vector<1x128xf32> to vector<256x128xf32>
    %8 = arith.mulf %5, %7 : vector<256x128xf32>
    %c0_7 = arith.constant 0 : index
    %c0_8 = arith.constant 0 : index
    %9 = vector.load %arg6[%c0_7, %c0_8] : memref<1x128xf32, #tpu.memory_space<vmem>>, vector<1x128xf32>
    %10 = vector.broadcast %9 : vector<1x128xf32> to vector<256x128xf32>
    %11 = arith.addf %8, %10 : vector<256x128xf32>
    %cst_9 = arith.constant 0.000000e+00 : f32
    %12 = vector.broadcast %cst_9 : f32 to vector<256x128xf32>
    %13 = arith.maximumf %11, %12 : vector<256x128xf32>
    %14 = vector.shape_cast %13 : vector<256x128xf32> to vector<16x16x128xf32>
    %cst_10 = arith.constant 0.000000e+00 : f32
    %15 = vector.broadcast %cst_10 : f32 to vector<16x1x128xf32>
    %16 = vector.extract_strided_slice %14 {offsets = [0, 0, 0], sizes = [16, 15, 128], strides = [1, 1, 1]} : vector<16x16x128xf32> to vector<16x15x128xf32>
    %17 = tpu.concatenate %15, %16 in 1 : vector<16x1x128xf32>, vector<16x15x128xf32> -> vector<16x16x128xf32>
    %18 = vector.extract_strided_slice %14 {offsets = [0, 1, 0], sizes = [16, 15, 128], strides = [1, 1, 1]} : vector<16x16x128xf32> to vector<16x15x128xf32>
    %19 = tpu.concatenate %18, %15 in 1 : vector<16x15x128xf32>, vector<16x1x128xf32> -> vector<16x16x128xf32>
    %20 = tpu.concatenate %17, %14, %19 in 2 : vector<16x16x128xf32>, vector<16x16x128xf32>, vector<16x16x128xf32> -> vector<16x16x384xf32>
    %21 = arith.truncf %20 : vector<16x16x384xf32> to vector<16x16x384xbf16>
    %22 = vector.shape_cast %21 : vector<16x16x384xbf16> to vector<256x384xbf16>
    %c1 = arith.constant 1 : index
    %c0_11 = arith.constant 0 : index
    %c0_12 = arith.constant 0 : index
    %23 = vector.load %arg3[%c1, %c0_11, %c0_12] : memref<3x384x128xbf16, #tpu.memory_space<vmem>>, vector<1x384x128xbf16>
    %24 = vector.shape_cast %23 : vector<1x384x128xbf16> to vector<384x128xbf16>
    %cst_13 = arith.constant dense<0.000000e+00> : vector<256x128xf32>
    %25 = tpu.matmul %22, %24, %cst_13 {dimension_numbers = #tpu.dot_dimension_numbers<[1], [0], [0], [1], [0, 0, 1, 1], [], []>} : vector<256x384xbf16>, vector<384x128xbf16>, vector<256x128xf32> -> vector<256x128xf32>
    %c0_14 = arith.constant 0 : index
    %c0_15 = arith.constant 0 : index
    %26 = vector.load %arg16[%c0_14, %c0_15] : memref<256x128xf32, #tpu.memory_space<vmem>>, vector<256x128xf32>
    tpu.vector_store %arg16[%c0_14, %c0_15], %25 {strides = array<i32>} : memref<256x128xf32, #tpu.memory_space<vmem>>, vector<256x128xf32>,
    %c16 = arith.constant 16 : index
    %c0_16 = arith.constant 0 : index
    %27 = vector.load %arg16[%c16, %c0_16] : memref<256x128xf32, #tpu.memory_space<vmem>>, vector<240x128xf32>
    %28 = vector.extract_strided_slice %22 {offsets = [0, 0], sizes = [240, 384], strides = [1, 1]} : vector<256x384xbf16> to vector<240x384xbf16>
    %c0_17 = arith.constant 0 : index
    %c0_18 = arith.constant 0 : index
    %c0_19 = arith.constant 0 : index
    %29 = vector.load %arg3[%c0_17, %c0_18, %c0_19] : memref<3x384x128xbf16, #tpu.memory_space<vmem>>, vector<1x384x128xbf16>
    %30 = vector.shape_cast %29 : vector<1x384x128xbf16> to vector<384x128xbf16>
    %cst_20 = arith.constant dense<0.000000e+00> : vector<240x128xf32>
    %31 = tpu.matmul %28, %30, %cst_20 {dimension_numbers = #tpu.dot_dimension_numbers<[1], [0], [0], [1], [0, 0, 1, 1], [], []>} : vector<240x384xbf16>, vector<384x128xbf16>, vector<240x128xf32> -> vector<240x128xf32>
    %32 = arith.addf %27, %31 : vector<240x128xf32>
    %c16_21 = arith.constant 16 : index
    %c0_22 = arith.constant 0 : index
    %33 = vector.load %arg16[%c16_21, %c0_22] : memref<256x128xf32, #tpu.memory_space<vmem>>, vector<240x128xf32>
    tpu.vector_store %arg16[%c16_21, %c0_22], %32 {strides = array<i32>} : memref<256x128xf32, #tpu.memory_space<vmem>>, vector<240x128xf32>,
    %c0_23 = arith.constant 0 : index
    %c0_24 = arith.constant 0 : index
    %34 = vector.load %arg16[%c0_23, %c0_24] : memref<256x128xf32, #tpu.memory_space<vmem>>, vector<240x128xf32>
    %35 = vector.extract_strided_slice %22 {offsets = [16, 0], sizes = [240, 384], strides = [1, 1]} : vector<256x384xbf16> to vector<240x384xbf16>
    %c2 = arith.constant 2 : index
    %c0_25 = arith.constant 0 : index
    %c0_26 = arith.constant 0 : index
    %36 = vector.load %arg3[%c2, %c0_25, %c0_26] : memref<3x384x128xbf16, #tpu.memory_space<vmem>>, vector<1x384x128xbf16>
    %37 = vector.shape_cast %36 : vector<1x384x128xbf16> to vector<384x128xbf16>
    %cst_27 = arith.constant dense<0.000000e+00> : vector<240x128xf32>
    %38 = tpu.matmul %35, %37, %cst_27 {dimension_numbers = #tpu.dot_dimension_numbers<[1], [0], [0], [1], [0, 0, 1, 1], [], []>} : vector<240x384xbf16>, vector<384x128xbf16>, vector<240x128xf32> -> vector<240x128xf32>
    %39 = arith.addf %34, %38 : vector<240x128xf32>
    %c0_28 = arith.constant 0 : index
    %c0_29 = arith.constant 0 : index
    %40 = vector.load %arg16[%c0_28, %c0_29] : memref<256x128xf32, #tpu.memory_space<vmem>>, vector<240x128xf32>
    tpu.vector_store %arg16[%c0_28, %c0_29], %39 {strides = array<i32>} : memref<256x128xf32, #tpu.memory_space<vmem>>, vector<240x128xf32>,
    %c0_30 = arith.constant 0 : index
    %c0_31 = arith.constant 0 : index
    %41 = vector.load %arg16[%c0_30, %c0_31] : memref<256x128xf32, #tpu.memory_space<vmem>>, vector<256x128xf32>
    %c0_32 = arith.constant 0 : index
    %c0_33 = arith.constant 0 : index
    %42 = vector.load %arg7[%c0_32, %c0_33] : memref<1x128xf32, #tpu.memory_space<vmem>>, vector<1x128xf32>
    %43 = vector.broadcast %42 : vector<1x128xf32> to vector<256x128xf32>
    %44 = arith.mulf %41, %43 : vector<256x128xf32>
    %c0_34 = arith.constant 0 : index
    %c0_35 = arith.constant 0 : index
    %45 = vector.load %arg8[%c0_34, %c0_35] : memref<1x128xf32, #tpu.memory_space<vmem>>, vector<1x128xf32>
    %46 = vector.broadcast %45 : vector<1x128xf32> to vector<256x128xf32>
    %47 = arith.addf %44, %46 : vector<256x128xf32>
    %cst_36 = arith.constant 0.000000e+00 : f32
    %48 = vector.broadcast %cst_36 : f32 to vector<256x128xf32>
    %49 = arith.maximumf %47, %48 : vector<256x128xf32>
    %50 = arith.truncf %49 : vector<256x128xf32> to vector<256x128xbf16>
    %c0_37 = arith.constant 0 : index
    %c0_38 = arith.constant 0 : index
    %51 = vector.load %arg4[%c0_37, %c0_38] : memref<128x64xbf16, #tpu.memory_space<vmem>>, vector<128x64xbf16>
    %cst_39 = arith.constant dense<0.000000e+00> : vector<256x64xf32>
    %52 = tpu.matmul %50, %51, %cst_39 {dimension_numbers = #tpu.dot_dimension_numbers<[1], [0], [0], [1], [0, 0, 1, 1], [], []>} : vector<256x128xbf16>, vector<128x64xbf16>, vector<256x64xf32> -> vector<256x64xf32>
    %c0_40 = arith.constant 0 : index
    %c0_41 = arith.constant 0 : index
    %53 = vector.load %arg9[%c0_40, %c0_41] : memref<1x64xf32, #tpu.memory_space<vmem>>, vector<1x64xf32>
    %54 = vector.broadcast %53 : vector<1x64xf32> to vector<256x64xf32>
    %55 = arith.mulf %52, %54 : vector<256x64xf32>
    %c0_42 = arith.constant 0 : index
    %c0_43 = arith.constant 0 : index
    %56 = vector.load %arg10[%c0_42, %c0_43] : memref<1x64xf32, #tpu.memory_space<vmem>>, vector<1x64xf32>
    %57 = vector.broadcast %56 : vector<1x64xf32> to vector<256x64xf32>
    %58 = arith.addf %55, %57 : vector<256x64xf32>
    %cst_44 = arith.constant dense<0.000000e+00> : vector<64xf32>
    %59 = vector.multi_reduction <add>, %58, %cst_44 [0] : vector<256x64xf32> to vector<64xf32>
    %60 = vector.shape_cast %59 : vector<64xf32> to vector<1x64xf32>
    %61 = arith.mulf %58, %58 : vector<256x64xf32>
    %cst_45 = arith.constant dense<0.000000e+00> : vector<64xf32>
    %62 = vector.multi_reduction <add>, %61, %cst_45 [0] : vector<256x64xf32> to vector<64xf32>
    %63 = vector.shape_cast %62 : vector<64xf32> to vector<1x64xf32>
    %cst_46 = arith.constant 3.906250e-03 : f32
    %64 = vector.broadcast %cst_46 : f32 to vector<1x64xf32>
    %65 = arith.mulf %60, %64 : vector<1x64xf32>
    %66 = arith.mulf %65, %60 : vector<1x64xf32>
    %67 = arith.subf %63, %66 : vector<1x64xf32>
    %cst_47 = arith.constant 0.000000e+00 : f32
    %68 = vector.broadcast %cst_47 : f32 to vector<1x64xf32>
    %69 = arith.maximumf %67, %68 : vector<1x64xf32>
    %cst_48 = arith.constant 0.00392156886 : f32
    %70 = vector.broadcast %cst_48 : f32 to vector<1x64xf32>
    %71 = arith.mulf %69, %70 : vector<1x64xf32>
    %72 = math.sqrt %71 : vector<1x64xf32>
    %c0_49 = arith.constant 0 : index
    %c0_50 = arith.constant 0 : index
    %73 = vector.load %arg11[%c0_49, %c0_50] : memref<1x64xf32, #tpu.memory_space<vmem>>, vector<1x64xf32>
    %74 = arith.mulf %65, %73 : vector<1x64xf32>
    %c0_51 = arith.constant 0 : index
    %c0_52 = arith.constant 0 : index
    %75 = vector.load %arg12[%c0_51, %c0_52] : memref<1x64xf32, #tpu.memory_space<vmem>>, vector<1x64xf32>
    %76 = arith.mulf %72, %75 : vector<1x64xf32>
    %77 = arith.addf %74, %76 : vector<1x64xf32>
    %c0_53 = arith.constant 0 : index
    %c0_54 = arith.constant 0 : index
    %78 = vector.load %arg13[%c0_53, %c0_54] : memref<1x64xf32, #tpu.memory_space<vmem>>, vector<1x64xf32>
    %79 = arith.mulf %77, %78 : vector<1x64xf32>
    %c0_55 = arith.constant 0 : index
    %c0_56 = arith.constant 0 : index
    %80 = vector.load %arg14[%c0_55, %c0_56] : memref<1x64xf32, #tpu.memory_space<vmem>>, vector<1x64xf32>
    %81 = arith.addf %79, %80 : vector<1x64xf32>
    %cst_57 = arith.constant 0.000000e+00 : f32
    %82 = vector.broadcast %cst_57 : f32 to vector<1x64xf32>
    %83 = arith.subf %82, %81 : vector<1x64xf32>
    %84 = math.exp %83 : vector<1x64xf32>
    %cst_58 = arith.constant 1.000000e+00 : f32
    %85 = vector.broadcast %cst_58 : f32 to vector<1x64xf32>
    %86 = arith.addf %85, %84 : vector<1x64xf32>
    %cst_59 = arith.constant 1.000000e+00 : f32
    %87 = vector.broadcast %cst_59 : f32 to vector<1x64xf32>
    %88 = arith.divf %87, %86 : vector<1x64xf32>
    %89 = vector.broadcast %88 : vector<1x64xf32> to vector<256x64xf32>
    %90 = arith.mulf %58, %89 : vector<256x64xf32>
    %91 = arith.addf %90, %2 : vector<256x64xf32>
    %cst_60 = arith.constant 0.000000e+00 : f32
    %92 = vector.broadcast %cst_60 : f32 to vector<256x64xf32>
    %93 = arith.maximumf %91, %92 : vector<256x64xf32>
    %94 = vector.shape_cast %93 : vector<256x64xf32> to vector<16x16x64xf32>
    %c0_61 = arith.constant 0 : index
    %c0_62 = arith.constant 0 : index
    %c0_63 = arith.constant 0 : index
    %c0_64 = arith.constant 0 : index
    %95 = vector.load %arg15[%c0_61, %c0_62, %c0_63, %c0_64] : memref<1x16x16x64xf32, #tpu.memory_space<vmem>>, vector<1x16x16x64xf32>
    %96 = vector.shape_cast %95 : vector<1x16x16x64xf32> to vector<16x16x64xf32>
    %97 = vector.shape_cast %94 : vector<16x16x64xf32> to vector<1x16x16x64xf32>
    tpu.vector_store %arg15[%c0_61, %c0_62, %c0_63, %c0_64], %97 {strides = array<i32>} : memref<1x16x16x64xf32, #tpu.memory_space<vmem>>, vector<1x16x16x64xf32>,
    return
  }
  func.func @transform_0(%arg0: i32) -> (i32, i32, i32, i32) {
    %c0_i32 = arith.constant 0 : i32
    %c0_i32_0 = arith.constant 0 : i32
    %c0_i32_1 = arith.constant 0 : i32
    %c0_i32_2 = arith.constant 0 : i32
    return %arg0, %c0_i32, %c0_i32_0, %c0_i32_1 : i32, i32, i32, i32
  }
  func.func @transform_1(%arg0: i32) -> (i32, i32) {
    %c0_i32 = arith.constant 0 : i32
    %c0_i32_0 = arith.constant 0 : i32
    %c0_i32_1 = arith.constant 0 : i32
    return %c0_i32, %c0_i32_0 : i32, i32
  }
  func.func @transform_2(%arg0: i32) -> (i32, i32, i32) {
    %c0_i32 = arith.constant 0 : i32
    %c0_i32_0 = arith.constant 0 : i32
    %c0_i32_1 = arith.constant 0 : i32
    %c0_i32_2 = arith.constant 0 : i32
    return %c0_i32, %c0_i32_0, %c0_i32_1 : i32, i32, i32
  }
  func.func @transform_3(%arg0: i32) -> (i32, i32) {
    %c0_i32 = arith.constant 0 : i32
    %c0_i32_0 = arith.constant 0 : i32
    %c0_i32_1 = arith.constant 0 : i32
    return %c0_i32, %c0_i32_0 : i32, i32
  }
  func.func @transform_4(%arg0: i32) -> (i32, i32) {
    %c0_i32 = arith.constant 0 : i32
    %c0_i32_0 = arith.constant 0 : i32
    %c0_i32_1 = arith.constant 0 : i32
    return %c0_i32, %c0_i32_0 : i32, i32
  }
  func.func @transform_5(%arg0: i32) -> (i32, i32) {
    %c0_i32 = arith.constant 0 : i32
    %c0_i32_0 = arith.constant 0 : i32
    %c0_i32_1 = arith.constant 0 : i32
    return %c0_i32, %c0_i32_0 : i32, i32
  }
  func.func @transform_6(%arg0: i32) -> (i32, i32) {
    %c0_i32 = arith.constant 0 : i32
    %c0_i32_0 = arith.constant 0 : i32
    %c0_i32_1 = arith.constant 0 : i32
    return %c0_i32, %c0_i32_0 : i32, i32
  }
  func.func @transform_7(%arg0: i32) -> (i32, i32) {
    %c0_i32 = arith.constant 0 : i32
    %c0_i32_0 = arith.constant 0 : i32
    %c0_i32_1 = arith.constant 0 : i32
    return %c0_i32, %c0_i32_0 : i32, i32
  }
  func.func @transform_8(%arg0: i32) -> (i32, i32) {
    %c0_i32 = arith.constant 0 : i32
    %c0_i32_0 = arith.constant 0 : i32
    %c0_i32_1 = arith.constant 0 : i32
    return %c0_i32, %c0_i32_0 : i32, i32
  }
  func.func @transform_9(%arg0: i32) -> (i32, i32) {
    %c0_i32 = arith.constant 0 : i32
    %c0_i32_0 = arith.constant 0 : i32
    %c0_i32_1 = arith.constant 0 : i32
    return %c0_i32, %c0_i32_0 : i32, i32
  }
  func.func @transform_10(%arg0: i32) -> (i32, i32) {
    %c0_i32 = arith.constant 0 : i32
    %c0_i32_0 = arith.constant 0 : i32
    %c0_i32_1 = arith.constant 0 : i32
    return %c0_i32, %c0_i32_0 : i32, i32
  }
  func.func @transform_11(%arg0: i32) -> (i32, i32) {
    %c0_i32 = arith.constant 0 : i32
    %c0_i32_0 = arith.constant 0 : i32
    %c0_i32_1 = arith.constant 0 : i32
    return %c0_i32, %c0_i32_0 : i32, i32
  }
  func.func @transform_12(%arg0: i32) -> (i32, i32) {
    %c0_i32 = arith.constant 0 : i32
    %c0_i32_0 = arith.constant 0 : i32
    %c0_i32_1 = arith.constant 0 : i32
    return %c0_i32, %c0_i32_0 : i32, i32
  }
  func.func @transform_13(%arg0: i32) -> (i32, i32) {
    %c0_i32 = arith.constant 0 : i32
    %c0_i32_0 = arith.constant 0 : i32
    %c0_i32_1 = arith.constant 0 : i32
    return %c0_i32, %c0_i32_0 : i32, i32
  }
  func.func @transform_14(%arg0: i32) -> (i32, i32, i32, i32) {
    %c0_i32 = arith.constant 0 : i32
    %c0_i32_0 = arith.constant 0 : i32
    %c0_i32_1 = arith.constant 0 : i32
    %c0_i32_2 = arith.constant 0 : i32
    return %arg0, %c0_i32, %c0_i32_0, %c0_i32_1 : i32, i32, i32, i32
  }
}

</mosaic_0001>

<llo_original>
// kernel: tpu_custom_call.1
$region0: #{tpu_custom_call.1}
  #allocation0 [shape = 'u32[]', space=smem, size = 0x4, offset = 0x4, fixed_abs, tag = 'smem constant byte address 0x4 - core index']
  #allocation1 [shape = 'u32[144,128]{1,0:T(1,128)}', space=vmem, size = 0x12000, scoped, tag = 'internal scratch']
  #allocation2 [shape = 'f32[256,128]{1,0:T(8,128)}', space=vmem, size = 0x20000, scoped, tag = 'scratch operand']
  %s0 = inlined_call_operand.hbm [shape: f32[2,16,16,64], index: 0, kind: input, shape index: {}]
  %s1 = inlined_call_operand.vmem [shape: bf16[64,128], index: 1, kind: input, shape index: {}]
  %s2 = inlined_call_operand.hbm [shape: bf16[3,384,128], index: 2, kind: input, shape index: {}]
  %s3 = inlined_call_operand.vmem [shape: bf16[128,64], index: 3, kind: input, shape index: {}]
  %s4 = inlined_call_operand.vmem [shape: f32[1,128], index: 4, kind: input, shape index: {}]
  %s5 = inlined_call_operand.vmem [shape: f32[1,128], index: 5, kind: input, shape index: {}]
  %s6 = inlined_call_operand.vmem [shape: f32[1,128], index: 6, kind: input, shape index: {}]
  %s7 = inlined_call_operand.vmem [shape: f32[1,128], index: 7, kind: input, shape index: {}]
  %s8 = inlined_call_operand.vmem [shape: f32[1,64], index: 8, kind: input, shape index: {}]
  %s9 = inlined_call_operand.vmem [shape: f32[1,64], index: 9, kind: input, shape index: {}]
  %s10 = inlined_call_operand.vmem [shape: f32[1,64], index: 10, kind: input, shape index: {}]
  %s11 = inlined_call_operand.vmem [shape: f32[1,64], index: 11, kind: input, shape index: {}]
  %s12 = inlined_call_operand.vmem [shape: f32[1,64], index: 12, kind: input, shape index: {}]
  %s13 = inlined_call_operand.vmem [shape: f32[1,64], index: 13, kind: input, shape index: {}]
  %s14 = inlined_call_operand.hbm [shape: f32[2,16,16,64], index: 14, kind: output, shape index: {}]
  %s15 = sld [smem:[#allocation0]]
  $region97: #{tpu_custom_call.1} parent=0
    _
  %s17 = ssub.s32 1, %s15
  %s18 = scalar_select 0, %s17, %s15
  $region1: #{tpu_custom_call.1} parent=0
    #allocation3 [shape = 'u8[262144]{0}', space=vmem, size = 0x40000, scoped, tag = 'input window, operand 0']
    #allocation4 [shape = 's32[2]{0}', space=sflag, size = 0x8, scoped, tag = 'scoped memory for tpu_custom_call.1']
    #allocation5 [shape = 's32[2]{0}', space=sflag, size = 0x8, scoped, tag = 'scoped memory for tpu_custom_call.1']
    #allocation6 [shape = 'u8[294912]{0}', space=vmem, size = 0x48000, scoped, tag = 'input window, operand 2, single buffered']
    #allocation7 [shape = 's32[1]{0}', space=sflag, size = 0x4, scoped, tag = 'scoped memory for tpu_custom_call.1']
    #allocation8 [shape = 'u8[262144]{0}', space=vmem, size = 0x40000, scoped, tag = 'output window, operand 0']
    %19 = vsyncpa [#allocation4], 0
    %s20 = scalar_lea.sflag [#allocation4], 1
    %21 = vsyncpa %s20, 0
    %22 = vsyncpa [#allocation7], 0
    %23 = vsyncpa [#allocation5], 0
    %s24 = scalar_lea.sflag [#allocation5], 1
    %25 = vsyncpa %s24, 0
    loop: start=0, step=1, limit=4
    $region2: #{tpu_custom_call.1} parent=1 // loop_pre_header
      _
    $region3: #{tpu_custom_call.1} parent=1 // loop_header
      %s27 = sphi 0, %s31
      %p28 = scmp.ge.s32.totalorder %s27, 4
      %s37 = sphi 0, %s39
      %s40 = sphi 0, %s37
      %s41 = sphi 0, %s40
      %s57 = sphi 0, %s41
      %s61 = sphi 0, %s61
      %s63 = sphi 0, %s61
      %s64 = sphi 0, %s63
      %s78 = sphi 0, %s64
      %s82 = sphi 0, %s82
      %s84 = sphi 0, %s82
      %s85 = sphi 0, %s84
      %s99 = sphi 0, %s85
      %s103 = sphi 0, %s103
      %s105 = sphi 0, %s103
      %s106 = sphi 0, %s105
      %s120 = sphi 0, %s106
      %s124 = sphi 0, %s124
      %s126 = sphi 0, %s124
      %s127 = sphi 0, %s126
      %s141 = sphi 0, %s127
      %s145 = sphi 0, %s145
      %s147 = sphi 0, %s145
      %s148 = sphi 0, %s147
      %s162 = sphi 0, %s148
      %s166 = sphi 0, %s166
      %s168 = sphi 0, %s166
      %s169 = sphi 0, %s168
      %s183 = sphi 0, %s169
      %s187 = sphi 0, %s187
      %s189 = sphi 0, %s187
      %s190 = sphi 0, %s189
      %s204 = sphi 0, %s190
      %s208 = sphi 0, %s208
      %s210 = sphi 0, %s208
      %s211 = sphi 0, %s210
      %s225 = sphi 0, %s211
      %s229 = sphi 0, %s229
      %s231 = sphi 0, %s229
      %s232 = sphi 0, %s231
      %s246 = sphi 0, %s232
      %s250 = sphi 0, %s250
      %s252 = sphi 0, %s250
      %s253 = sphi 0, %s252
      %s267 = sphi 0, %s253
      %s271 = sphi 0, %s271
      %s273 = sphi 0, %s271
      %s274 = sphi 0, %s273
      %s288 = sphi 0, %s274
      %s292 = sphi 0, %s292
      %s294 = sphi 0, %s292
      %s295 = sphi 0, %s294
      %s309 = sphi 0, %s295
      %s313 = sphi 0, %s313
      %s315 = sphi 0, %s313
      %s316 = sphi 0, %s315
      %s330 = sphi 0, %s316
      %s336 = sphi 0, %s338
      %s339 = sphi 0, %s336
      %s340 = sphi 0, %s339
      %s356 = sphi 0, %s340
    $region4: #{tpu_custom_call.1} parent=1 // loop_header_branch
      %30 = sbr.rel (%p28) target = $region8
    $region5: #{tpu_custom_call.1} parent=1 // loop_body
      %s32 = ssub.s32 %s27, 1
      %s33 = ssub.s32 %s27, 2
      %s34 = sadd.s32 %s27, 1
      %s35 = ssub.s32 %s27, %s34
      %p36 = scmp.eq.s32.totalorder %s35, 0
      %s38 = sadd.s32 %s37, 1
      %s39 = scalar_select %p36, %s37, %s38
      %p42 = pneg %p36
      %p43 = scmp.eq.s32.totalorder %s27, 1
      %p44 = por %p42, %p43
      %p45 = scmp.ne.s32.totalorder %s37, %s40
      %p46 = scmp.eq.s32.totalorder %s27, 0
      %p47 = por %p45, %p46
      %p48 = scmp.ne.s32.totalorder %s37, %s40
      %p49 = scmp.eq.s32.totalorder %s32, 1
      %p50 = por %p48, %p49
      %p51 = scmp.ne.s32.totalorder %s40, %s41
      %p52 = scmp.eq.s32.totalorder %s32, 0
      %p53 = por %p51, %p52
      %p54 = scmp.ne.s32.totalorder %s40, %s41
      %p55 = scmp.eq.s32.totalorder %s33, 1
      %p56 = por %p54, %p55
      %p58 = scmp.ne.s32.totalorder %s41, %s57
      %p59 = scmp.eq.s32.totalorder %s33, 0
      %p60 = por %p58, %p59
      %s62 = sadd.s32 %s61, 1
      %p65 = scmp.eq.s32.totalorder %s27, 1
      %p66 = scmp.ne.s32.totalorder %s61, %s63
      %p67 = scmp.eq.s32.totalorder %s27, 0
      %p68 = por %p66, %p67
      %p69 = scmp.ne.s32.totalorder %s61, %s63
      %p70 = scmp.eq.s32.totalorder %s32, 1
      %p71 = por %p69, %p70
      %p72 = scmp.ne.s32.totalorder %s63, %s64
      %p73 = scmp.eq.s32.totalorder %s32, 0
      %p74 = por %p72, %p73
      %p75 = scmp.ne.s32.totalorder %s63, %s64
      %p76 = scmp.eq.s32.totalorder %s33, 1
      %p77 = por %p75, %p76
      %p79 = scmp.ne.s32.totalorder %s64, %s78
      %p80 = scmp.eq.s32.totalorder %s33, 0
      %p81 = por %p79, %p80
      %s83 = sadd.s32 %s82, 1
      %p86 = scmp.eq.s32.totalorder %s27, 1
      %p87 = scmp.ne.s32.totalorder %s82, %s84
      %p88 = scmp.eq.s32.totalorder %s27, 0
      %p89 = por %p87, %p88
      %p90 = scmp.ne.s32.totalorder %s82, %s84
      %p91 = scmp.eq.s32.totalorder %s32, 1
      %p92 = por %p90, %p91
      %p93 = scmp.ne.s32.totalorder %s84, %s85
      %p94 = scmp.eq.s32.totalorder %s32, 0
      %p95 = por %p93, %p94
      %p96 = scmp.ne.s32.totalorder %s84, %s85
      %p97 = scmp.eq.s32.totalorder %s33, 1
      %p98 = por %p96, %p97
      %p100 = scmp.ne.s32.totalorder %s85, %s99
      %p101 = scmp.eq.s32.totalorder %s33, 0
      %p102 = por %p100, %p101
      %s104 = sadd.s32 %s103, 1
      %p107 = scmp.eq.s32.totalorder %s27, 1
      %p108 = scmp.ne.s32.totalorder %s103, %s105
      %p109 = scmp.eq.s32.totalorder %s27, 0
      %p110 = por %p108, %p109
      %p111 = scmp.ne.s32.totalorder %s103, %s105
      %p112 = scmp.eq.s32.totalorder %s32, 1
      %p113 = por %p111, %p112
      %p114 = scmp.ne.s32.totalorder %s105, %s106
      %p115 = scmp.eq.s32.totalorder %s32, 0
      %p116 = por %p114, %p115
      %p117 = scmp.ne.s32.totalorder %s105, %s106
      %p118 = scmp.eq.s32.totalorder %s33, 1
      %p119 = por %p117, %p118
      %p121 = scmp.ne.s32.totalorder %s106, %s120
      %p122 = scmp.eq.s32.totalorder %s33, 0
      %p123 = por %p121, %p122
      %s125 = sadd.s32 %s124, 1
      %p128 = scmp.eq.s32.totalorder %s27, 1
      %p129 = scmp.ne.s32.totalorder %s124, %s126
      %p130 = scmp.eq.s32.totalorder %s27, 0
      %p131 = por %p129, %p130
      %p132 = scmp.ne.s32.totalorder %s124, %s126
      %p133 = scmp.eq.s32.totalorder %s32, 1
      %p134 = por %p132, %p133
      %p135 = scmp.ne.s32.totalorder %s126, %s127
      %p136 = scmp.eq.s32.totalorder %s32, 0
      %p137 = por %p135, %p136
      %p138 = scmp.ne.s32.totalorder %s126, %s127
      %p139 = scmp.eq.s32.totalorder %s33, 1
      %p140 = por %p138, %p139
      %p142 = scmp.ne.s32.totalorder %s127, %s141
      %p143 = scmp.eq.s32.totalorder %s33, 0
      %p144 = por %p142, %p143
      %s146 = sadd.s32 %s145, 1
      %p149 = scmp.eq.s32.totalorder %s27, 1
      %p150 = scmp.ne.s32.totalorder %s145, %s147
      %p151 = scmp.eq.s32.totalorder %s27, 0
      %p152 = por %p150, %p151
      %p153 = scmp.ne.s32.totalorder %s145, %s147
      %p154 = scmp.eq.s32.totalorder %s32, 1
      %p155 = por %p153, %p154
      %p156 = scmp.ne.s32.totalorder %s147, %s148
      %p157 = scmp.eq.s32.totalorder %s32, 0
      %p158 = por %p156, %p157
      %p159 = scmp.ne.s32.totalorder %s147, %s148
      %p160 = scmp.eq.s32.totalorder %s33, 1
      %p161 = por %p159, %p160
      %p163 = scmp.ne.s32.totalorder %s148, %s162
      %p164 = scmp.eq.s32.totalorder %s33, 0
      %p165 = por %p163, %p164
      %s167 = sadd.s32 %s166, 1
      %p170 = scmp.eq.s32.totalorder %s27, 1
      %p171 = scmp.ne.s32.totalorder %s166, %s168
      %p172 = scmp.eq.s32.totalorder %s27, 0
      %p173 = por %p171, %p172
      %p174 = scmp.ne.s32.totalorder %s166, %s168
      %p175 = scmp.eq.s32.totalorder %s32, 1
      %p176 = por %p174, %p175
      %p177 = scmp.ne.s32.totalorder %s168, %s169
      %p178 = scmp.eq.s32.totalorder %s32, 0
      %p179 = por %p177, %p178
      %p180 = scmp.ne.s32.totalorder %s168, %s169
      %p181 = scmp.eq.s32.totalorder %s33, 1
      %p182 = por %p180, %p181
      %p184 = scmp.ne.s32.totalorder %s169, %s183
      %p185 = scmp.eq.s32.totalorder %s33, 0
      %p186 = por %p184, %p185
      %s188 = sadd.s32 %s187, 1
      %p191 = scmp.eq.s32.totalorder %s27, 1
      %p192 = scmp.ne.s32.totalorder %s187, %s189
      %p193 = scmp.eq.s32.totalorder %s27, 0
      %p194 = por %p192, %p193
      %p195 = scmp.ne.s32.totalorder %s187, %s189
      %p196 = scmp.eq.s32.totalorder %s32, 1
      %p197 = por %p195, %p196
      %p198 = scmp.ne.s32.totalorder %s189, %s190
      %p199 = scmp.eq.s32.totalorder %s32, 0
      %p200 = por %p198, %p199
      %p201 = scmp.ne.s32.totalorder %s189, %s190
      %p202 = scmp.eq.s32.totalorder %s33, 1
      %p203 = por %p201, %p202
      %p205 = scmp.ne.s32.totalorder %s190, %s204
      %p206 = scmp.eq.s32.totalorder %s33, 0
      %p207 = por %p205, %p206
      %s209 = sadd.s32 %s208, 1
      %p212 = scmp.eq.s32.totalorder %s27, 1
      %p213 = scmp.ne.s32.totalorder %s208, %s210
      %p214 = scmp.eq.s32.totalorder %s27, 0
      %p215 = por %p213, %p214
      %p216 = scmp.ne.s32.totalorder %s208, %s210
      %p217 = scmp.eq.s32.totalorder %s32, 1
      %p218 = por %p216, %p217
      %p219 = scmp.ne.s32.totalorder %s210, %s211
      %p220 = scmp.eq.s32.totalorder %s32, 0
      %p221 = por %p219, %p220
      %p222 = scmp.ne.s32.totalorder %s210, %s211
      %p223 = scmp.eq.s32.totalorder %s33, 1
      %p224 = por %p222, %p223
      %p226 = scmp.ne.s32.totalorder %s211, %s225
      %p227 = scmp.eq.s32.totalorder %s33, 0
      %p228 = por %p226, %p227
      %s230 = sadd.s32 %s229, 1
      %p233 = scmp.eq.s32.totalorder %s27, 1
      %p234 = scmp.ne.s32.totalorder %s229, %s231
      %p235 = scmp.eq.s32.totalorder %s27, 0
      %p236 = por %p234, %p235
      %p237 = scmp.ne.s32.totalorder %s229, %s231
      %p238 = scmp.eq.s32.totalorder %s32, 1
      %p239 = por %p237, %p238
      %p240 = scmp.ne.s32.totalorder %s231, %s232
      %p241 = scmp.eq.s32.totalorder %s32, 0
      %p242 = por %p240, %p241
      %p243 = scmp.ne.s32.totalorder %s231, %s232
      %p244 = scmp.eq.s32.totalorder %s33, 1
      %p245 = por %p243, %p244
      %p247 = scmp.ne.s32.totalorder %s232, %s246
      %p248 = scmp.eq.s32.totalorder %s33, 0
      %p249 = por %p247, %p248
      %s251 = sadd.s32 %s250, 1
      %p254 = scmp.eq.s32.totalorder %s27, 1
      %p255 = scmp.ne.s32.totalorder %s250, %s252
      %p256 = scmp.eq.s32.totalorder %s27, 0
      %p257 = por %p255, %p256
      %p258 = scmp.ne.s32.totalorder %s250, %s252
      %p259 = scmp.eq.s32.totalorder %s32, 1
      %p260 = por %p258, %p259
      %p261 = scmp.ne.s32.totalorder %s252, %s253
      %p262 = scmp.eq.s32.totalorder %s32, 0
      %p263 = por %p261, %p262
      %p264 = scmp.ne.s32.totalorder %s252, %s253
      %p265 = scmp.eq.s32.totalorder %s33, 1
      %p266 = por %p264, %p265
      %p268 = scmp.ne.s32.totalorder %s253, %s267
      %p269 = scmp.eq.s32.totalorder %s33, 0
      %p270 = por %p268, %p269
      %s272 = sadd.s32 %s271, 1
      %p275 = scmp.eq.s32.totalorder %s27, 1
      %p276 = scmp.ne.s32.totalorder %s271, %s273
      %p277 = scmp.eq.s32.totalorder %s27, 0
      %p278 = por %p276, %p277
      %p279 = scmp.ne.s32.totalorder %s271, %s273
      %p280 = scmp.eq.s32.totalorder %s32, 1
      %p281 = por %p279, %p280
      %p282 = scmp.ne.s32.totalorder %s273, %s274
      %p283 = scmp.eq.s32.totalorder %s32, 0
      %p284 = por %p282, %p283
      %p285 = scmp.ne.s32.totalorder %s273, %s274
      %p286 = scmp.eq.s32.totalorder %s33, 1
      %p287 = por %p285, %p286
      %p289 = scmp.ne.s32.totalorder %s274, %s288
      %p290 = scmp.eq.s32.totalorder %s33, 0
      %p291 = por %p289, %p290
      %s293 = sadd.s32 %s292, 1
      %p296 = scmp.eq.s32.totalorder %s27, 1
      %p297 = scmp.ne.s32.totalorder %s292, %s294
      %p298 = scmp.eq.s32.totalorder %s27, 0
      %p299 = por %p297, %p298
      %p300 = scmp.ne.s32.totalorder %s292, %s294
      %p301 = scmp.eq.s32.totalorder %s32, 1
      %p302 = por %p300, %p301
      %p303 = scmp.ne.s32.totalorder %s294, %s295
      %p304 = scmp.eq.s32.totalorder %s32, 0
      %p305 = por %p303, %p304
      %p306 = scmp.ne.s32.totalorder %s294, %s295
      %p307 = scmp.eq.s32.totalorder %s33, 1
      %p308 = por %p306, %p307
      %p310 = scmp.ne.s32.totalorder %s295, %s309
      %p311 = scmp.eq.s32.totalorder %s33, 0
      %p312 = por %p310, %p311
      %s314 = sadd.s32 %s313, 1
      %p317 = scmp.eq.s32.totalorder %s27, 1
      %p318 = scmp.ne.s32.totalorder %s313, %s315
      %p319 = scmp.eq.s32.totalorder %s27, 0
      %p320 = por %p318, %p319
      %p321 = scmp.ne.s32.totalorder %s313, %s315
      %p322 = scmp.eq.s32.totalorder %s32, 1
      %p323 = por %p321, %p322
      %p324 = scmp.ne.s32.totalorder %s315, %s316
      %p325 = scmp.eq.s32.totalorder %s32, 0
      %p326 = por %p324, %p325
      %p327 = scmp.ne.s32.totalorder %s315, %s316
      %p328 = scmp.eq.s32.totalorder %s33, 1
      %p329 = por %p327, %p328
      %p331 = scmp.ne.s32.totalorder %s316, %s330
      %p332 = scmp.eq.s32.totalorder %s33, 0
      %p333 = por %p331, %p332
      %s334 = ssub.s32 %s27, %s34
      %p335 = scmp.eq.s32.totalorder %s334, 0
      %s337 = sadd.s32 %s336, 1
      %s338 = scalar_select %p335, %s336, %s337
      %p341 = pneg %p335
      %p342 = scmp.eq.s32.totalorder %s27, 1
      %p343 = por %p341, %p342
      %p344 = scmp.ne.s32.totalorder %s336, %s339
      %p345 = scmp.eq.s32.totalorder %s27, 0
      %p346 = por %p344, %p345
      %p347 = scmp.ne.s32.totalorder %s336, %s339
      %p348 = scmp.eq.s32.totalorder %s32, 1
      %p349 = por %p347, %p348
      %p350 = scmp.ne.s32.totalorder %s339, %s340
      %p351 = scmp.eq.s32.totalorder %s32, 0
      %p352 = por %p350, %p351
      %p353 = scmp.ne.s32.totalorder %s339, %s340
      %p354 = scmp.eq.s32.totalorder %s33, 1
      %p355 = por %p353, %p354
      %p357 = scmp.ne.s32.totalorder %s340, %s356
      %p358 = scmp.eq.s32.totalorder %s33, 0
      %p359 = por %p357, %p358
      %p360 = scmp.le.s32.totalorder 1, %s27
      %p361 = scmp.lt.s32.totalorder %s27, 3
      %p362 = pnand %p360, %p361
      %p363 = pneg %p362
      // Predicated region
      $region9: #{tpu_custom_call.1} parent=5 // pred_check
        _
      $region10: #{tpu_custom_call.1} parent=5 // pred_check_branch
        %365 = sbr.rel (%p362) target = $region12
      $region11: #{tpu_custom_call.1} parent=5 // pred_region
        %s366 = ssub.s32 %s27, 1
        // Predicated region
        $region13: #{tpu_custom_call.1} parent=11 // pred_check
          %p367 = pneg %p74
        $region14: #{tpu_custom_call.1} parent=11 // pred_check_branch
          %369 = sbr.rel (%p367) target = $region16
        $region15: #{tpu_custom_call.1} parent=11 // pred_region
          _
        $region16: #{tpu_custom_call.1} parent=11 // pred_fallthru
          _
        // Predicated region
        $region17: #{tpu_custom_call.1} parent=11 // pred_check
          %p370 = pneg %p95
        $region18: #{tpu_custom_call.1} parent=11 // pred_check_branch
          %372 = sbr.rel (%p370) target = $region20
        $region19: #{tpu_custom_call.1} parent=11 // pred_region
          %s374 = ssub.s32 9216, 9216
          %375 = vsyncadd [#allocation7], %s374
          %s376 = sshll.u32 [#allocation6], 4
          %s377 = int_to_ptr.vmem [resolvable:$true] %s376
          %382 = dma.hbm_to_vmem [thread:$0]  %s2, 9216, %s377, [#allocation7], 64, 64, 4
        $region20: #{tpu_custom_call.1} parent=11 // pred_fallthru
          _
        // Predicated region
        $region21: #{tpu_custom_call.1} parent=11 // pred_check
          %p383 = pneg %p116
        $region22: #{tpu_custom_call.1} parent=11 // pred_check_branch
          %385 = sbr.rel (%p383) target = $region24
        $region23: #{tpu_custom_call.1} parent=11 // pred_region
          _
        $region24: #{tpu_custom_call.1} parent=11 // pred_fallthru
          _
        // Predicated region
        $region25: #{tpu_custom_call.1} parent=11 // pred_check
          %p386 = pneg %p137
        $region26: #{tpu_custom_call.1} parent=11 // pred_check_branch
          %388 = sbr.rel (%p386) target = $region28
        $region27: #{tpu_custom_call.1} parent=11 // pred_region
          _
        $region28: #{tpu_custom_call.1} parent=11 // pred_fallthru
          _
        // Predicated region
        $region29: #{tpu_custom_call.1} parent=11 // pred_check
          %p389 = pneg %p158
        $region30: #{tpu_custom_call.1} parent=11 // pred_check_branch
          %391 = sbr.rel (%p389) target = $region32
        $region31: #{tpu_custom_call.1} parent=11 // pred_region
          _
        $region32: #{tpu_custom_call.1} parent=11 // pred_fallthru
          _
        // Predicated region
        $region33: #{tpu_custom_call.1} parent=11 // pred_check
          %p392 = pneg %p179
        $region34: #{tpu_custom_call.1} parent=11 // pred_check_branch
          %394 = sbr.rel (%p392) target = $region36
        $region35: #{tpu_custom_call.1} parent=11 // pred_region
          _
        $region36: #{tpu_custom_call.1} parent=11 // pred_fallthru
          _
        // Predicated region
        $region37: #{tpu_custom_call.1} parent=11 // pred_check
          %p395 = pneg %p200
        $region38: #{tpu_custom_call.1} parent=11 // pred_check_branch
          %397 = sbr.rel (%p395) target = $region40
        $region39: #{tpu_custom_call.1} parent=11 // pred_region
          _
        $region40: #{tpu_custom_call.1} parent=11 // pred_fallthru
          _
        // Predicated region
        $region41: #{tpu_custom_call.1} parent=11 // pred_check
          %p398 = pneg %p221
        $region42: #{tpu_custom_call.1} parent=11 // pred_check_branch
          %400 = sbr.rel (%p398) target = $region44
        $region43: #{tpu_custom_call.1} parent=11 // pred_region
          _
        $region44: #{tpu_custom_call.1} parent=11 // pred_fallthru
          _
        // Predicated region
        $region45: #{tpu_custom_call.1} parent=11 // pred_check
          %p401 = pneg %p242
        $region46: #{tpu_custom_call.1} parent=11 // pred_check_branch
          %403 = sbr.rel (%p401) target = $region48
        $region47: #{tpu_custom_call.1} parent=11 // pred_region
          _
        $region48: #{tpu_custom_call.1} parent=11 // pred_fallthru
          _
        // Predicated region
        $region49: #{tpu_custom_call.1} parent=11 // pred_check
          %p404 = pneg %p263
        $region50: #{tpu_custom_call.1} parent=11 // pred_check_branch
          %406 = sbr.rel (%p404) target = $region52
        $region51: #{tpu_custom_call.1} parent=11 // pred_region
          _
        $region52: #{tpu_custom_call.1} parent=11 // pred_fallthru
          _
        // Predicated region
        $region53: #{tpu_custom_call.1} parent=11 // pred_check
          %p407 = pneg %p284
        $region54: #{tpu_custom_call.1} parent=11 // pred_check_branch
          %409 = sbr.rel (%p407) target = $region56
        $region55: #{tpu_custom_call.1} parent=11 // pred_region
          _
        $region56: #{tpu_custom_call.1} parent=11 // pred_fallthru
          _
        // Predicated region
        $region57: #{tpu_custom_call.1} parent=11 // pred_check
          %p410 = pneg %p305
        $region58: #{tpu_custom_call.1} parent=11 // pred_check_branch
          %412 = sbr.rel (%p410) target = $region60
        $region59: #{tpu_custom_call.1} parent=11 // pred_region
          _
        $region60: #{tpu_custom_call.1} parent=11 // pred_fallthru
          _
        // Predicated region
        $region61: #{tpu_custom_call.1} parent=11 // pred_check
          %p413 = pneg %p326
        $region62: #{tpu_custom_call.1} parent=11 // pred_check_branch
          %415 = sbr.rel (%p413) target = $region64
        $region63: #{tpu_custom_call.1} parent=11 // pred_region
          _
        $region64: #{tpu_custom_call.1} parent=11 // pred_fallthru
          _
      $region12: #{tpu_custom_call.1} parent=5 // pred_fallthru
        _
      %p416 = scmp.lt.s32.totalorder %s27, 2
      // Predicated region
      $region65: #{tpu_custom_call.1} parent=5 // pred_check
        %p417 = pneg %p416
      $region66: #{tpu_custom_call.1} parent=5 // pred_check_branch
        %419 = sbr.rel (%p417) target = $region68
      $region67: #{tpu_custom_call.1} parent=5 // pred_region
        // Predicated region
        $region69: #{tpu_custom_call.1} parent=67 // pred_check
          %p420 = pneg %p47
        $region70: #{tpu_custom_call.1} parent=67 // pred_check_branch
          %422 = sbr.rel (%p420) target = $region72
        $region71: #{tpu_custom_call.1} parent=67 // pred_region
          %s423 = sand.u32 %s37, 1
          %s424 = scalar_lea.sflag [#allocation4], %s423
          %s425 = sand.u32 %s37, 1
          %s426 = smul.addr %s425, 256
          %s427 = scalar_lea.vmem [#allocation3], %s426
          %s429 = ssub.s32 4096, 4096
          %430 = vsyncadd %s424, %s429
          %s431 = smul.addr %s27, 32
          %s432 = smul.addr %s431, 128
          %s433 = scalar_lea.hbm %s0, %s432
          %s434 = sshll.u32 %s427, 4
          %s435 = int_to_ptr.vmem [resolvable:$true] %s434
          %440 = dma.hbm_to_vmem [thread:$0]  %s433, 4096, %s435, %s424, 128, 128, 8
        $region72: #{tpu_custom_call.1} parent=67 // pred_fallthru
          _
      $region68: #{tpu_custom_call.1} parent=5 // pred_fallthru
        _
      %p441 = scmp.le.s32.totalorder 1, %s27
      %p442 = scmp.lt.s32.totalorder %s27, 3
      %p443 = pnand %p441, %p442
      %p444 = pneg %p443
      // Predicated region
      $region73: #{tpu_custom_call.1} parent=5 // pred_check
        _
      $region74: #{tpu_custom_call.1} parent=5 // pred_check_branch
        %446 = sbr.rel (%p443) target = $region76
      $region75: #{tpu_custom_call.1} parent=5 // pred_region
        %s447 = ssub.s32 %s27, 1
        %s448 = sand.u32 %s40, 1
        %s449 = scalar_lea.sflag [#allocation4], %s448
        %s450 = sand.u32 %s40, 1
        %s451 = smul.addr %s450, 256
        %s452 = scalar_lea.vmem [#allocation3], %s451
        // Predicated region
        $region77: #{tpu_custom_call.1} parent=75 // pred_check
          %p453 = pneg %p53
        $region78: #{tpu_custom_call.1} parent=75 // pred_check_branch
          %455 = sbr.rel (%p453) target = $region80
        $region79: #{tpu_custom_call.1} parent=75 // pred_region
          %456 = dma.done %s449, 4096
        $region80: #{tpu_custom_call.1} parent=75 // pred_fallthru
          _
        // Predicated region
        $region81: #{tpu_custom_call.1} parent=75 // pred_check
          %p457 = pneg %p95
        $region82: #{tpu_custom_call.1} parent=75 // pred_check_branch
          %459 = sbr.rel (%p457) target = $region84
        $region83: #{tpu_custom_call.1} parent=75 // pred_region
          %460 = dma.done [#allocation7], 9216
        $region84: #{tpu_custom_call.1} parent=75 // pred_fallthru
          _
        %s461 = sand.u32 %s40, 1
        %s462 = scalar_lea.sflag [#allocation4], %s461
        %s463 = sand.u32 %s40, 1
        %s464 = smul.addr %s463, 256
        %s465 = scalar_lea.vmem [#allocation3], %s464
        %p466 = pneg %p53
        %p467 = pneg %p50
        %p468 = pneg %p74
        %p469 = pneg %p71
        %p470 = pneg %p95
        %p471 = pneg %p92
        %p472 = pneg %p116
        %p473 = pneg %p113
        %p474 = pneg %p137
        %p475 = pneg %p134
        %p476 = pneg %p158
        %p477 = pneg %p155
        %p478 = pneg %p179
        %p479 = pneg %p176
        %p480 = pneg %p200
        %p481 = pneg %p197
        %p482 = pneg %p221
        %p483 = pneg %p218
        %p484 = pneg %p242
        %p485 = pneg %p239
        %p486 = pneg %p263
        %p487 = pneg %p260
        %p488 = pneg %p284
        %p489 = pneg %p281
        %p490 = pneg %p305
        %p491 = pneg %p302
        %p492 = pneg %p326
        %p493 = pneg %p323
        %p494 = pneg %p352
        %p495 = pneg %p349
        %s496 = sand.u32 %s339, 1
        %s497 = scalar_lea.sflag [#allocation5], %s496
        %s498 = sand.u32 %s339, 1
        %s499 = smul.addr %s498, 256
        %s500 = scalar_lea.vmem [#allocation8], %s499
        %v502 = vld [vmem:[%s452] sm:$0xff]
        %v503 = vld [vmem:[%s452 + $0x8] sm:$0xff]
        %v504 = vld [vmem:[%s452 + $0x10] sm:$0xff]
        %v505 = vld [vmem:[%s452 + $0x18] sm:$0xff]
        %v506 = vld [vmem:[%s452 + $0x20] sm:$0xff]
        %v507 = vld [vmem:[%s452 + $0x28] sm:$0xff]
        %v508 = vld [vmem:[%s452 + $0x30] sm:$0xff]
        %v509 = vld [vmem:[%s452 + $0x38] sm:$0xff]
        %v510 = vld [vmem:[%s452 + $0x40] sm:$0xff]
        %v511 = vld [vmem:[%s452 + $0x48] sm:$0xff]
        %v512 = vld [vmem:[%s452 + $0x50] sm:$0xff]
        %v513 = vld [vmem:[%s452 + $0x58] sm:$0xff]
        %v514 = vld [vmem:[%s452 + $0x60] sm:$0xff]
        %v515 = vld [vmem:[%s452 + $0x68] sm:$0xff]
        %v516 = vld [vmem:[%s452 + $0x70] sm:$0xff]
        %v517 = vld [vmem:[%s452 + $0x78] sm:$0xff]
        %v518 = vld [vmem:[%s452 + $0x80] sm:$0xff]
        %v519 = vld [vmem:[%s452 + $0x88] sm:$0xff]
        %v520 = vld [vmem:[%s452 + $0x90] sm:$0xff]
        %v521 = vld [vmem:[%s452 + $0x98] sm:$0xff]
        %v522 = vld [vmem:[%s452 + $0xa0] sm:$0xff]
        %v523 = vld [vmem:[%s452 + $0xa8] sm:$0xff]
        %v524 = vld [vmem:[%s452 + $0xb0] sm:$0xff]
        %v525 = vld [vmem:[%s452 + $0xb8] sm:$0xff]
        %v526 = vld [vmem:[%s452 + $0xc0] sm:$0xff]
        %v527 = vld [vmem:[%s452 + $0xc8] sm:$0xff]
        %v528 = vld [vmem:[%s452 + $0xd0] sm:$0xff]
        %v529 = vld [vmem:[%s452 + $0xd8] sm:$0xff]
        %v530 = vld [vmem:[%s452 + $0xe0] sm:$0xff]
        %v531 = vld [vmem:[%s452 + $0xe8] sm:$0xff]
        %v532 = vld [vmem:[%s452 + $0xf0] sm:$0xff]
        %v533 = vld [vmem:[%s452 + $0xf8] sm:$0xff]
        %v534 = vpack.c.bf16 %v503, %v502
        %v535 = vpack.c.bf16 %v505, %v504
        %v536 = vpack.c.bf16 %v507, %v506
        %v537 = vpack.c.bf16 %v509, %v508
        %v538 = vpack.c.bf16 %v511, %v510
        %v539 = vpack.c.bf16 %v513, %v512
        %v540 = vpack.c.bf16 %v515, %v514
        %v541 = vpack.c.bf16 %v517, %v516
        %v542 = vpack.c.bf16 %v519, %v518
        %v543 = vpack.c.bf16 %v521, %v520
        %v544 = vpack.c.bf16 %v523, %v522
        %v545 = vpack.c.bf16 %v525, %v524
        %v546 = vpack.c.bf16 %v527, %v526
        %v547 = vpack.c.bf16 %v529, %v528
        %v548 = vpack.c.bf16 %v531, %v530
        %v549 = vpack.c.bf16 %v533, %v532
        %v550 = vld [vmem:[%s1] sm:$0xf]
        %v551 = vld [vmem:[%s1 + $0x4] sm:$0xf]
        %v552 = vld [vmem:[%s1 + $0x8] sm:$0xf]
        %v553 = vld [vmem:[%s1 + $0xc] sm:$0xf]
        %v554 = vld [vmem:[%s1 + $0x10] sm:$0xf]
        %v555 = vld [vmem:[%s1 + $0x14] sm:$0xf]
        %v556 = vld [vmem:[%s1 + $0x18] sm:$0xf]
        %v557 = vld [vmem:[%s1 + $0x1c] sm:$0xf]
        %v566 = vunpack.c.l.b16 %v550
        %v567 = vunpack.c.l.b16 %v551
        %v568 = vunpack.c.l.b16 %v552
        %v569 = vunpack.c.l.b16 %v553
        %v570 = vunpack.c.l.b16 %v554
        %v571 = vunpack.c.l.b16 %v555
        %v572 = vunpack.c.l.b16 %v556
        %v573 = vunpack.c.l.b16 %v557
        %v574 = vpack.c.b16 %v567, %v566
        %v575 = vpack.c.b16 %v569, %v568
        %v576 = vpack.c.b16 %v571, %v570
        %v577 = vpack.c.b16 %v573, %v572
        %vm582 = vcmask 523264
        %v584 = vsel %vm582, %v534, 0
        %v587 = vsel %vm582, %v535, 0
        %v590 = vsel %vm582, %v536, 0
        %v593 = vsel %vm582, %v537, 0
        %v596 = vsel %vm582, %v538, 0
        %v599 = vsel %vm582, %v539, 0
        %v602 = vsel %vm582, %v540, 0
        %v605 = vsel %vm582, %v541, 0
        %v608 = vsel %vm582, %v542, 0
        %v611 = vsel %vm582, %v543, 0
        %v614 = vsel %vm582, %v544, 0
        %v617 = vsel %vm582, %v545, 0
        %v620 = vsel %vm582, %v546, 0
        %v623 = vsel %vm582, %v547, 0
        %v626 = vsel %vm582, %v548, 0
        %v629 = vsel %vm582, %v549, 0
        %631 = vmatprep.subr.bf16.mxu0 0
        %632 = vmatpush1.bf16.msra.mxu0 %v574
        %633 = vmatprep.subr.bf16.mxu0 0
        %634 = vmatpush1.bf16.msra.mxu0 %v575
        %635 = vmatprep.subr.bf16.mxu0 0
        %636 = vmatpush1.bf16.msra.mxu0 %v576
        %637 = vmatprep.subr.bf16.mxu0 0
        %638 = vmatpush1.bf16.msra.mxu0 %v577
        %639 = vmatprep.subr.bf16.mxu0 0
        %640 = vmatpush1.bf16.msra.mxu0 0
        %641 = vmatprep.subr.bf16.mxu0 0
        %642 = vmatpush1.bf16.msra.mxu0 0
        %643 = vmatprep.subr.bf16.mxu0 0
        %644 = vmatpush1.bf16.msra.mxu0 0
        %645 = vmatprep.subr.bf16.mxu0 0
        %646 = vmatpush1.bf16.msra.mxu0 0
        %647 = vmatprep.subr.bf16.mxu0 0
        %648 = vmatpush1.bf16.msra.mxu0 0
        %649 = vmatprep.subr.bf16.mxu0 0
        %650 = vmatpush1.bf16.msra.mxu0 0
        %651 = vmatprep.subr.bf16.mxu0 0
        %652 = vmatpush1.bf16.msra.mxu0 0
        %653 = vmatprep.subr.bf16.mxu0 0
        %654 = vmatpush1.bf16.msra.mxu0 0
        %655 = vmatprep.subr.bf16.mxu0 0
        %656 = vmatpush1.bf16.msra.mxu0 0
        %657 = vmatprep.subr.bf16.mxu0 0
        %658 = vmatpush1.bf16.msra.mxu0 0
        %659 = vmatprep.subr.bf16.mxu0 0
        %660 = vmatpush1.bf16.msra.mxu0 0
        %661 = vmatprep.subr.bf16.mxu0 0
        %662 = vmatpush1.bf16.msra.mxu0 0
        %663 = vmatprep.mubr.bf16.mxu0 0
        %664 = vmatmul.mubr.bf16.gmra.mrb[0].mxu0 %v584
        %v665 = vpop.f32.mrb[0].mxu0
        %v666 = vadd.f32 0.0, %v665
        %v667 = vpop.f32.mrb[0].mxu0
        %v668 = vpop.f32.mrb[0].mxu0
        %v669 = vadd.f32 0.0, %v668
        %v670 = vpop.f32.mrb[0].mxu0
        %671 = vmatprep.mubr.bf16.mxu0 0
        %672 = vmatmul.mubr.bf16.gmra.mrb[0].mxu0 %v587
        %v673 = vpop.f32.mrb[0].mxu0
        %v674 = vadd.f32 0.0, %v673
        %v675 = vpop.f32.mrb[0].mxu0
        %v676 = vpop.f32.mrb[0].mxu0
        %v677 = vadd.f32 0.0, %v676
        %v678 = vpop.f32.mrb[0].mxu0
        %679 = vmatprep.mubr.bf16.mxu0 0
        %680 = vmatmul.mubr.bf16.gmra.mrb[0].mxu0 %v590
        %v681 = vpop.f32.mrb[0].mxu0
        %v682 = vadd.f32 0.0, %v681
        %v683 = vpop.f32.mrb[0].mxu0
        %v684 = vpop.f32.mrb[0].mxu0
        %v685 = vadd.f32 0.0, %v684
        %v686 = vpop.f32.mrb[0].mxu0
        %687 = vmatprep.mubr.bf16.mxu0 0
        %688 = vmatmul.mubr.bf16.gmra.mrb[0].mxu0 %v593
        %v689 = vpop.f32.mrb[0].mxu0
        %v690 = vadd.f32 0.0, %v689
        %v691 = vpop.f32.mrb[0].mxu0
        %v692 = vpop.f32.mrb[0].mxu0
        %v693 = vadd.f32 0.0, %v692
        %v694 = vpop.f32.mrb[0].mxu0
        %695 = vmatprep.mubr.bf16.mxu0 0
        %696 = vmatmul.mubr.bf16.gmra.mrb[0].mxu0 %v596
        %v697 = vpop.f32.mrb[0].mxu0
        %v698 = vadd.f32 0.0, %v697
        %v699 = vpop.f32.mrb[0].mxu0
        %v700 = vpop.f32.mrb[0].mxu0
        %v701 = vadd.f32 0.0, %v700
        %v702 = vpop.f32.mrb[0].mxu0
        %703 = vmatprep.mubr.bf16.mxu0 0
        %704 = vmatmul.mubr.bf16.gmra.mrb[0].mxu0 %v599
        %v705 = vpop.f32.mrb[0].mxu0
        %v706 = vadd.f32 0.0, %v705
        %v707 = vpop.f32.mrb[0].mxu0
        %v708 = vpop.f32.mrb[0].mxu0
        %v709 = vadd.f32 0.0, %v708
        %v710 = vpop.f32.mrb[0].mxu0
        %711 = vmatprep.mubr.bf16.mxu0 0
        %712 = vmatmul.mubr.bf16.gmra.mrb[0].mxu0 %v602
        %v713 = vpop.f32.mrb[0].mxu0
        %v714 = vadd.f32 0.0, %v713
        %v715 = vpop.f32.mrb[0].mxu0
        %v716 = vpop.f32.mrb[0].mxu0
        %v717 = vadd.f32 0.0, %v716
        %v718 = vpop.f32.mrb[0].mxu0
        %719 = vmatprep.mubr.bf16.mxu0 0
        %720 = vmatmul.mubr.bf16.gmra.mrb[0].mxu0 %v605
        %v721 = vpop.f32.mrb[0].mxu0
        %v722 = vadd.f32 0.0, %v721
        %v723 = vpop.f32.mrb[0].mxu0
        %v724 = vpop.f32.mrb[0].mxu0
        %v725 = vadd.f32 0.0, %v724
        %v726 = vpop.f32.mrb[0].mxu0
        %727 = vmatprep.mubr.bf16.mxu0 0
        %728 = vmatmul.mubr.bf16.gmra.mrb[0].mxu0 %v608
        %v729 = vpop.f32.mrb[0].mxu0
        %v730 = vadd.f32 0.0, %v729
        %v731 = vpop.f32.mrb[0].mxu0
        %v732 = vpop.f32.mrb[0].mxu0
        %v733 = vadd.f32 0.0, %v732
        %v734 = vpop.f32.mrb[0].mxu0
        %735 = vmatprep.mubr.bf16.mxu0 0
        %736 = vmatmul.mubr.bf16.gmra.mrb[0].mxu0 %v611
        %v737 = vpop.f32.mrb[0].mxu0
        %v738 = vadd.f32 0.0, %v737
        %v739 = vpop.f32.mrb[0].mxu0
        %v740 = vpop.f32.mrb[0].mxu0
        %v741 = vadd.f32 0.0, %v740
        %v742 = vpop.f32.mrb[0].mxu0
        %743 = vmatprep.mubr.bf16.mxu0 0
        %744 = vmatmul.mubr.bf16.gmra.mrb[0].mxu0 %v614
        %v745 = vpop.f32.mrb[0].mxu0
        %v746 = vadd.f32 0.0, %v745
        %v747 = vpop.f32.mrb[0].mxu0
        %v748 = vpop.f32.mrb[0].mxu0
        %v749 = vadd.f32 0.0, %v748
        %v750 = vpop.f32.mrb[0].mxu0
        %751 = vmatprep.mubr.bf16.mxu0 0
        %752 = vmatmul.mubr.bf16.gmra.mrb[0].mxu0 %v617
        %v753 = vpop.f32.mrb[0].mxu0
        %v754 = vadd.f32 0.0, %v753
        %v755 = vpop.f32.mrb[0].mxu0
        %v756 = vpop.f32.mrb[0].mxu0
        %v757 = vadd.f32 0.0, %v756
        %v758 = vpop.f32.mrb[0].mxu0
        %759 = vmatprep.mubr.bf16.mxu0 0
        %760 = vmatmul.mubr.bf16.gmra.mrb[0].mxu0 %v620
        %v761 = vpop.f32.mrb[0].mxu0
        %v762 = vadd.f32 0.0, %v761
        %v763 = vpop.f32.mrb[0].mxu0
        %v764 = vpop.f32.mrb[0].mxu0
        %v765 = vadd.f32 0.0, %v764
        %v766 = vpop.f32.mrb[0].mxu0
        %767 = vmatprep.mubr.bf16.mxu0 0
        %768 = vmatmul.mubr.bf16.gmra.mrb[0].mxu0 %v623
        %v769 = vpop.f32.mrb[0].mxu0
        %v770 = vadd.f32 0.0, %v769
        %v771 = vpop.f32.mrb[0].mxu0
        %v772 = vpop.f32.mrb[0].mxu0
        %v773 = vadd.f32 0.0, %v772
        %v774 = vpop.f32.mrb[0].mxu0
        %775 = vmatprep.mubr.bf16.mxu0 0
        %776 = vmatmul.mubr.bf16.gmra.mrb[0].mxu0 %v626
        %v777 = vpop.f32.mrb[0].mxu0
        %v778 = vadd.f32 0.0, %v777
        %v779 = vpop.f32.mrb[0].mxu0
        %v780 = vpop.f32.mrb[0].mxu0
        %v781 = vadd.f32 0.0, %v780
        %v782 = vpop.f32.mrb[0].mxu0
        %783 = vmatprep.mubr.bf16.mxu0 0
        %784 = vmatmul.mubr.bf16.gmra.mrb[0].mxu0 %v629
        %v785 = vpop.f32.mrb[0].mxu0
        %v786 = vadd.f32 0.0, %v785
        %v787 = vpop.f32.mrb[0].mxu0
        %v788 = vpop.f32.mrb[0].mxu0
        %v789 = vadd.f32 0.0, %v788
        %v790 = vpop.f32.mrb[0].mxu0
        %791 = vdwg.mxu0
        %v792 = vld [vmem:[%s4] sm:$0x1]
        %v794 = vlaneseq
        %v795 = vshrl.u32 %v794, 7
        %v796 = vsub.s32 0, %v795
        %v797 = vrot.slane %v792, %v796
        %v799 = vmul.f32 %v666, %v797
        %v800 = vmul.f32 %v669, %v797
        %v801 = vmul.f32 %v674, %v797
        %v802 = vmul.f32 %v677, %v797
        %v803 = vmul.f32 %v682, %v797
        %v804 = vmul.f32 %v685, %v797
        %v805 = vmul.f32 %v690, %v797
        %v806 = vmul.f32 %v693, %v797
        %v807 = vmul.f32 %v698, %v797
        %v808 = vmul.f32 %v701, %v797
        %v809 = vmul.f32 %v706, %v797
        %v810 = vmul.f32 %v709, %v797
        %v811 = vmul.f32 %v714, %v797
        %v812 = vmul.f32 %v717, %v797
        %v813 = vmul.f32 %v722, %v797
        %v814 = vmul.f32 %v725, %v797
        %v815 = vmul.f32 %v730, %v797
        %v816 = vmul.f32 %v733, %v797
        %v817 = vmul.f32 %v738, %v797
        %v818 = vmul.f32 %v741, %v797
        %v819 = vmul.f32 %v746, %v797
        %v820 = vmul.f32 %v749, %v797
        %v821 = vmul.f32 %v754, %v797
        %v822 = vmul.f32 %v757, %v797
        %v823 = vmul.f32 %v762, %v797
        %v824 = vmul.f32 %v765, %v797
        %v825 = vmul.f32 %v770, %v797
        %v826 = vmul.f32 %v773, %v797
        %v827 = vmul.f32 %v778, %v797
        %v828 = vmul.f32 %v781, %v797
        %v829 = vmul.f32 %v786, %v797
        %v830 = vmul.f32 %v789, %v797
        %v831 = vld [vmem:[%s5] sm:$0x1]
        %v833 = vlaneseq
        %v834 = vshrl.u32 %v833, 7
        %v835 = vsub.s32 0, %v834
        %v836 = vrot.slane %v831, %v835
        %v838 = vadd.f32 %v799, %v836
        %v839 = vadd.f32 %v800, %v836
        %v840 = vadd.f32 %v801, %v836
        %v841 = vadd.f32 %v802, %v836
        %v842 = vadd.f32 %v803, %v836
        %v843 = vadd.f32 %v804, %v836
        %v844 = vadd.f32 %v805, %v836
        %v845 = vadd.f32 %v806, %v836
        %v846 = vadd.f32 %v807, %v836
        %v847 = vadd.f32 %v808, %v836
        %v848 = vadd.f32 %v809, %v836
        %v849 = vadd.f32 %v810, %v836
        %v850 = vadd.f32 %v811, %v836
        %v851 = vadd.f32 %v812, %v836
        %v852 = vadd.f32 %v813, %v836
        %v853 = vadd.f32 %v814, %v836
        %v854 = vadd.f32 %v815, %v836
        %v855 = vadd.f32 %v816, %v836
        %v856 = vadd.f32 %v817, %v836
        %v857 = vadd.f32 %v818, %v836
        %v858 = vadd.f32 %v819, %v836
        %v859 = vadd.f32 %v820, %v836
        %v860 = vadd.f32 %v821, %v836
        %v861 = vadd.f32 %v822, %v836
        %v862 = vadd.f32 %v823, %v836
        %v863 = vadd.f32 %v824, %v836
        %v864 = vadd.f32 %v825, %v836
        %v865 = vadd.f32 %v826, %v836
        %v866 = vadd.f32 %v827, %v836
        %v867 = vadd.f32 %v828, %v836
        %v868 = vadd.f32 %v829, %v836
        %v869 = vadd.f32 %v830, %v836
        %v870 = vmax.f32 %v838, 0.0
        %v871 = vmax.f32 %v839, 0.0
        %v872 = vmax.f32 %v840, 0.0
        %v873 = vmax.f32 %v841, 0.0
        %v874 = vmax.f32 %v842, 0.0
        %v875 = vmax.f32 %v843, 0.0
        %v876 = vmax.f32 %v844, 0.0
        %v877 = vmax.f32 %v845, 0.0
        %v878 = vmax.f32 %v846, 0.0
        %v879 = vmax.f32 %v847, 0.0
        %v880 = vmax.f32 %v848, 0.0
        %v881 = vmax.f32 %v849, 0.0
        %v882 = vmax.f32 %v850, 0.0
        %v883 = vmax.f32 %v851, 0.0
        %v884 = vmax.f32 %v852, 0.0
        %v885 = vmax.f32 %v853, 0.0
        %v886 = vmax.f32 %v854, 0.0
        %v887 = vmax.f32 %v855, 0.0
        %v888 = vmax.f32 %v856, 0.0
        %v889 = vmax.f32 %v857, 0.0
        %v890 = vmax.f32 %v858, 0.0
        %v891 = vmax.f32 %v859, 0.0
        %v892 = vmax.f32 %v860, 0.0
        %v893 = vmax.f32 %v861, 0.0
        %v894 = vmax.f32 %v862, 0.0
        %v895 = vmax.f32 %v863, 0.0
        %v896 = vmax.f32 %v864, 0.0
        %v897 = vmax.f32 %v865, 0.0
        %v898 = vmax.f32 %v866, 0.0
        %v899 = vmax.f32 %v867, 0.0
        %v900 = vmax.f32 %v868, 0.0
        %v901 = vmax.f32 %v869, 0.0
        %vm934 = vcmask 1040384
        %v935 = vrot.slane %v870, 7
        %v936 = vrot.slane %v871, 7
        %v937 = vsel %vm934, %v935, %v936
        %v938 = vrot.slane %v872, 7
        %v939 = vrot.slane %v873, 7
        %v940 = vsel %vm934, %v938, %v939
        %v941 = vrot.slane %v874, 7
        %v942 = vrot.slane %v875, 7
        %v943 = vsel %vm934, %v941, %v942
        %v944 = vrot.slane %v876, 7
        %v945 = vrot.slane %v877, 7
        %v946 = vsel %vm934, %v944, %v945
        %v947 = vrot.slane %v878, 7
        %v948 = vrot.slane %v879, 7
        %v949 = vsel %vm934, %v947, %v948
        %v950 = vrot.slane %v880, 7
        %v951 = vrot.slane %v881, 7
        %v952 = vsel %vm934, %v950, %v951
        %v953 = vrot.slane %v882, 7
        %v954 = vrot.slane %v883, 7
        %v955 = vsel %vm934, %v953, %v954
        %v956 = vrot.slane %v884, 7
        %v957 = vrot.slane %v885, 7
        %v958 = vsel %vm934, %v956, %v957
        %v959 = vrot.slane %v886, 7
        %v960 = vrot.slane %v887, 7
        %v961 = vsel %vm934, %v959, %v960
        %v962 = vrot.slane %v888, 7
        %v963 = vrot.slane %v889, 7
        %v964 = vsel %vm934, %v962, %v963
        %v965 = vrot.slane %v890, 7
        %v966 = vrot.slane %v891, 7
        %v967 = vsel %vm934, %v965, %v966
        %v968 = vrot.slane %v892, 7
        %v969 = vrot.slane %v893, 7
        %v970 = vsel %vm934, %v968, %v969
        %v971 = vrot.slane %v894, 7
        %v972 = vrot.slane %v895, 7
        %v973 = vsel %vm934, %v971, %v972
        %v974 = vrot.slane %v896, 7
        %v975 = vrot.slane %v897, 7
        %v976 = vsel %vm934, %v974, %v975
        %v977 = vrot.slane %v898, 7
        %v978 = vrot.slane %v899, 7
        %v979 = vsel %vm934, %v977, %v978
        %v980 = vrot.slane %v900, 7
        %v981 = vrot.slane %v901, 7
        %v982 = vsel %vm934, %v980, %v981
        %v1015 = vsel %vm934, 0.0, %v935
        %v1016 = vsel %vm934, 0.0, %v938
        %v1017 = vsel %vm934, 0.0, %v941
        %v1018 = vsel %vm934, 0.0, %v944
        %v1019 = vsel %vm934, 0.0, %v947
        %v1020 = vsel %vm934, 0.0, %v950
        %v1021 = vsel %vm934, 0.0, %v953
        %v1022 = vsel %vm934, 0.0, %v956
        %v1023 = vsel %vm934, 0.0, %v959
        %v1024 = vsel %vm934, 0.0, %v962
        %v1025 = vsel %vm934, 0.0, %v965
        %v1026 = vsel %vm934, 0.0, %v968
        %v1027 = vsel %vm934, 0.0, %v971
        %v1028 = vsel %vm934, 0.0, %v974
        %v1029 = vsel %vm934, 0.0, %v977
        %v1030 = vsel %vm934, 0.0, %v980
        %vm1031 = vcmask 1046528
        %v1032 = vrot.slane %v870, 1
        %v1033 = vrot.slane %v871, 1
        %v1034 = vsel %vm1031, %v1032, %v1033
        %v1035 = vrot.slane %v872, 1
        %v1036 = vrot.slane %v873, 1
        %v1037 = vsel %vm1031, %v1035, %v1036
        %v1038 = vrot.slane %v874, 1
        %v1039 = vrot.slane %v875, 1
        %v1040 = vsel %vm1031, %v1038, %v1039
        %v1041 = vrot.slane %v876, 1
        %v1042 = vrot.slane %v877, 1
        %v1043 = vsel %vm1031, %v1041, %v1042
        %v1044 = vrot.slane %v878, 1
        %v1045 = vrot.slane %v879, 1
        %v1046 = vsel %vm1031, %v1044, %v1045
        %v1047 = vrot.slane %v880, 1
        %v1048 = vrot.slane %v881, 1
        %v1049 = vsel %vm1031, %v1047, %v1048
        %v1050 = vrot.slane %v882, 1
        %v1051 = vrot.slane %v883, 1
        %v1052 = vsel %vm1031, %v1050, %v1051
        %v1053 = vrot.slane %v884, 1
        %v1054 = vrot.slane %v885, 1
        %v1055 = vsel %vm1031, %v1053, %v1054
        %v1056 = vrot.slane %v886, 1
        %v1057 = vrot.slane %v887, 1
        %v1058 = vsel %vm1031, %v1056, %v1057
        %v1059 = vrot.slane %v888, 1
        %v1060 = vrot.slane %v889, 1
        %v1061 = vsel %vm1031, %v1059, %v1060
        %v1062 = vrot.slane %v890, 1
        %v1063 = vrot.slane %v891, 1
        %v1064 = vsel %vm1031, %v1062, %v1063
        %v1065 = vrot.slane %v892, 1
        %v1066 = vrot.slane %v893, 1
        %v1067 = vsel %vm1031, %v1065, %v1066
        %v1068 = vrot.slane %v894, 1
        %v1069 = vrot.slane %v895, 1
        %v1070 = vsel %vm1031, %v1068, %v1069
        %v1071 = vrot.slane %v896, 1
        %v1072 = vrot.slane %v897, 1
        %v1073 = vsel %vm1031, %v1071, %v1072
        %v1074 = vrot.slane %v898, 1
        %v1075 = vrot.slane %v899, 1
        %v1076 = vsel %vm1031, %v1074, %v1075
        %v1077 = vrot.slane %v900, 1
        %v1078 = vrot.slane %v901, 1
        %v1079 = vsel %vm1031, %v1077, %v1078
        %v1112 = vsel %vm1031, %v1033, 0.0
        %v1113 = vsel %vm1031, %v1036, 0.0
        %v1114 = vsel %vm1031, %v1039, 0.0
        %v1115 = vsel %vm1031, %v1042, 0.0
        %v1116 = vsel %vm1031, %v1045, 0.0
        %v1117 = vsel %vm1031, %v1048, 0.0
        %v1118 = vsel %vm1031, %v1051, 0.0
        %v1119 = vsel %vm1031, %v1054, 0.0
        %v1120 = vsel %vm1031, %v1057, 0.0
        %v1121 = vsel %vm1031, %v1060, 0.0
        %v1122 = vsel %vm1031, %v1063, 0.0
        %v1123 = vsel %vm1031, %v1066, 0.0
        %v1124 = vsel %vm1031, %v1069, 0.0
        %v1125 = vsel %vm1031, %v1072, 0.0
        %v1126 = vsel %vm1031, %v1075, 0.0
        %v1127 = vsel %vm1031, %v1078, 0.0
        %v1128 = vpack.c.bf16 %v937, %v1015
        %v1129 = vpack.c.bf16 %v871, %v870
        %v1130 = vpack.c.bf16 %v1112, %v1034
        %v1131 = vpack.c.bf16 %v940, %v1016
        %v1132 = vpack.c.bf16 %v873, %v872
        %v1133 = vpack.c.bf16 %v1113, %v1037
        %v1134 = vpack.c.bf16 %v943, %v1017
        %v1135 = vpack.c.bf16 %v875, %v874
        %v1136 = vpack.c.bf16 %v1114, %v1040
        %v1137 = vpack.c.bf16 %v946, %v1018
        %v1138 = vpack.c.bf16 %v877, %v876
        %v1139 = vpack.c.bf16 %v1115, %v1043
        %v1140 = vpack.c.bf16 %v949, %v1019
        %v1141 = vpack.c.bf16 %v879, %v878
        %v1142 = vpack.c.bf16 %v1116, %v1046
        %v1143 = vpack.c.bf16 %v952, %v1020
        %v1144 = vpack.c.bf16 %v881, %v880
        %v1145 = vpack.c.bf16 %v1117, %v1049
        %v1146 = vpack.c.bf16 %v955, %v1021
        %v1147 = vpack.c.bf16 %v883, %v882
        %v1148 = vpack.c.bf16 %v1118, %v1052
        %v1149 = vpack.c.bf16 %v958, %v1022
        %v1150 = vpack.c.bf16 %v885, %v884
        %v1151 = vpack.c.bf16 %v1119, %v1055
        %v1152 = vpack.c.bf16 %v961, %v1023
        %v1153 = vpack.c.bf16 %v887, %v886
        %v1154 = vpack.c.bf16 %v1120, %v1058
        %v1155 = vpack.c.bf16 %v964, %v1024
        %v1156 = vpack.c.bf16 %v889, %v888
        %v1157 = vpack.c.bf16 %v1121, %v1061
        %v1158 = vpack.c.bf16 %v967, %v1025
        %v1159 = vpack.c.bf16 %v891, %v890
        %v1160 = vpack.c.bf16 %v1122, %v1064
        %v1161 = vpack.c.bf16 %v970, %v1026
        %v1162 = vpack.c.bf16 %v893, %v892
        %v1163 = vpack.c.bf16 %v1123, %v1067
        %v1164 = vpack.c.bf16 %v973, %v1027
        %v1165 = vpack.c.bf16 %v895, %v894
        %v1166 = vpack.c.bf16 %v1124, %v1070
        %v1167 = vpack.c.bf16 %v976, %v1028
        %v1168 = vpack.c.bf16 %v897, %v896
        %v1169 = vpack.c.bf16 %v1125, %v1073
        %v1170 = vpack.c.bf16 %v979, %v1029
        %v1171 = vpack.c.bf16 %v899, %v898
        %v1172 = vpack.c.bf16 %v1126, %v1076
        %v1173 = vpack.c.bf16 %v982, %v1030
        %v1174 = vpack.c.bf16 %v901, %v900
        %v1175 = vpack.c.bf16 %v1127, %v1079
        %s1176 = scalar_lea.vmem [#allocation6], 192
        %v1177 = vld [vmem:[%s1176] sm:$0xf]
        %v1178 = vld [vmem:[%s1176 + $0x4] sm:$0xf]
        %v1179 = vld [vmem:[%s1176 + $0x8] sm:$0xf]
        %v1180 = vld [vmem:[%s1176 + $0xc] sm:$0xf]
        %v1181 = vld [vmem:[%s1176 + $0x10] sm:$0xf]
        %v1182 = vld [vmem:[%s1176 + $0x14] sm:$0xf]
        %v1183 = vld [vmem:[%s1176 + $0x18] sm:$0xf]
        %v1184 = vld [vmem:[%s1176 + $0x1c] sm:$0xf]
        %v1185 = vld [vmem:[%s1176 + $0x20] sm:$0xf]
        %v1186 = vld [vmem:[%s1176 + $0x24] sm:$0xf]
        %v1187 = vld [vmem:[%s1176 + $0x28] sm:$0xf]
        %v1188 = vld [vmem:[%s1176 + $0x2c] sm:$0xf]
        %v1189 = vld [vmem:[%s1176 + $0x30] sm:$0xf]
        %v1190 = vld [vmem:[%s1176 + $0x34] sm:$0xf]
        %v1191 = vld [vmem:[%s1176 + $0x38] sm:$0xf]
        %v1192 = vld [vmem:[%s1176 + $0x3c] sm:$0xf]
        %v1193 = vld [vmem:[%s1176 + $0x40] sm:$0xf]
        %v1194 = vld [vmem:[%s1176 + $0x44] sm:$0xf]
        %v1195 = vld [vmem:[%s1176 + $0x48] sm:$0xf]
        %v1196 = vld [vmem:[%s1176 + $0x4c] sm:$0xf]
        %v1197 = vld [vmem:[%s1176 + $0x50] sm:$0xf]
        %v1198 = vld [vmem:[%s1176 + $0x54] sm:$0xf]
        %v1199 = vld [vmem:[%s1176 + $0x58] sm:$0xf]
        %v1200 = vld [vmem:[%s1176 + $0x5c] sm:$0xf]
        %v1201 = vld [vmem:[%s1176 + $0x60] sm:$0xf]
        %v1202 = vld [vmem:[%s1176 + $0x64] sm:$0xf]
        %v1203 = vld [vmem:[%s1176 + $0x68] sm:$0xf]
        %v1204 = vld [vmem:[%s1176 + $0x6c] sm:$0xf]
        %v1205 = vld [vmem:[%s1176 + $0x70] sm:$0xf]
        %v1206 = vld [vmem:[%s1176 + $0x74] sm:$0xf]
        %v1207 = vld [vmem:[%s1176 + $0x78] sm:$0xf]
        %v1208 = vld [vmem:[%s1176 + $0x7c] sm:$0xf]
        %v1209 = vld [vmem:[%s1176 + $0x80] sm:$0xf]
        %v1210 = vld [vmem:[%s1176 + $0x84] sm:$0xf]
        %v1211 = vld [vmem:[%s1176 + $0x88] sm:$0xf]
        %v1212 = vld [vmem:[%s1176 + $0x8c] sm:$0xf]
        %v1213 = vld [vmem:[%s1176 + $0x90] sm:$0xf]
        %v1214 = vld [vmem:[%s1176 + $0x94] sm:$0xf]
        %v1215 = vld [vmem:[%s1176 + $0x98] sm:$0xf]
        %v1216 = vld [vmem:[%s1176 + $0x9c] sm:$0xf]
        %v1217 = vld [vmem:[%s1176 + $0xa0] sm:$0xf]
        %v1218 = vld [vmem:[%s1176 + $0xa4] sm:$0xf]
        %v1219 = vld [vmem:[%s1176 + $0xa8] sm:$0xf]
        %v1220 = vld [vmem:[%s1176 + $0xac] sm:$0xf]
        %v1221 = vld [vmem:[%s1176 + $0xb0] sm:$0xf]
        %v1222 = vld [vmem:[%s1176 + $0xb4] sm:$0xf]
        %v1223 = vld [vmem:[%s1176 + $0xb8] sm:$0xf]
        %v1224 = vld [vmem:[%s1176 + $0xbc] sm:$0xf]
        %v1273 = vunpack.c.l.b16 %v1177
        %v1274 = vunpack.c.l.b16 %v1178
        %v1275 = vunpack.c.l.b16 %v1179
        %v1276 = vunpack.c.l.b16 %v1180
        %v1277 = vunpack.c.l.b16 %v1181
        %v1278 = vunpack.c.l.b16 %v1182
        %v1279 = vunpack.c.l.b16 %v1183
        %v1280 = vunpack.c.l.b16 %v1184
        %v1281 = vunpack.c.l.b16 %v1185
        %v1282 = vunpack.c.l.b16 %v1186
        %v1283 = vunpack.c.l.b16 %v1187
        %v1284 = vunpack.c.l.b16 %v1188
        %v1285 = vunpack.c.l.b16 %v1189
        %v1286 = vunpack.c.l.b16 %v1190
        %v1287 = vunpack.c.l.b16 %v1191
        %v1288 = vunpack.c.l.b16 %v1192
        %v1289 = vunpack.c.l.b16 %v1193
        %v1290 = vunpack.c.l.b16 %v1194
        %v1291 = vunpack.c.l.b16 %v1195
        %v1292 = vunpack.c.l.b16 %v1196
        %v1293 = vunpack.c.l.b16 %v1197
        %v1294 = vunpack.c.l.b16 %v1198
        %v1295 = vunpack.c.l.b16 %v1199
        %v1296 = vunpack.c.l.b16 %v1200
        %v1297 = vunpack.c.l.b16 %v1201
        %v1298 = vunpack.c.l.b16 %v1202
        %v1299 = vunpack.c.l.b16 %v1203
        %v1300 = vunpack.c.l.b16 %v1204
        %v1301 = vunpack.c.l.b16 %v1205
        %v1302 = vunpack.c.l.b16 %v1206
        %v1303 = vunpack.c.l.b16 %v1207
        %v1304 = vunpack.c.l.b16 %v1208
        %v1305 = vunpack.c.l.b16 %v1209
        %v1306 = vunpack.c.l.b16 %v1210
        %v1307 = vunpack.c.l.b16 %v1211
        %v1308 = vunpack.c.l.b16 %v1212
        %v1309 = vunpack.c.l.b16 %v1213
        %v1310 = vunpack.c.l.b16 %v1214
        %v1311 = vunpack.c.l.b16 %v1215
        %v1312 = vunpack.c.l.b16 %v1216
        %v1313 = vunpack.c.l.b16 %v1217
        %v1314 = vunpack.c.l.b16 %v1218
        %v1315 = vunpack.c.l.b16 %v1219
        %v1316 = vunpack.c.l.b16 %v1220
        %v1317 = vunpack.c.l.b16 %v1221
        %v1318 = vunpack.c.l.b16 %v1222
        %v1319 = vunpack.c.l.b16 %v1223
        %v1320 = vunpack.c.l.b16 %v1224
        %v1321 = vpack.c.b16 %v1274, %v1273
        %v1322 = vpack.c.b16 %v1276, %v1275
        %v1323 = vpack.c.b16 %v1278, %v1277
        %v1324 = vpack.c.b16 %v1280, %v1279
        %v1325 = vpack.c.b16 %v1282, %v1281
        %v1326 = vpack.c.b16 %v1284, %v1283
        %v1327 = vpack.c.b16 %v1286, %v1285
        %v1328 = vpack.c.b16 %v1288, %v1287
        %v1329 = vpack.c.b16 %v1290, %v1289
        %v1330 = vpack.c.b16 %v1292, %v1291
        %v1331 = vpack.c.b16 %v1294, %v1293
        %v1332 = vpack.c.b16 %v1296, %v1295
        %v1333 = vpack.c.b16 %v1298, %v1297
        %v1334 = vpack.c.b16 %v1300, %v1299
        %v1335 = vpack.c.b16 %v1302, %v1301
        %v1336 = vpack.c.b16 %v1304, %v1303
        %v1337 = vpack.c.b16 %v1306, %v1305
        %v1338 = vpack.c.b16 %v1308, %v1307
        %v1339 = vpack.c.b16 %v1310, %v1309
        %v1340 = vpack.c.b16 %v1312, %v1311
        %v1341 = vpack.c.b16 %v1314, %v1313
        %v1342 = vpack.c.b16 %v1316, %v1315
        %v1343 = vpack.c.b16 %v1318, %v1317
        %v1344 = vpack.c.b16 %v1320, %v1319
        %1369 = vmatprep.subr.bf16.mxu0 0
        %1370 = vmatpush1.bf16.msra.mxu0 %v1321
        %1371 = vmatprep.subr.bf16.mxu0 0
        %1372 = vmatpush1.bf16.msra.mxu0 %v1322
        %1373 = vmatprep.subr.bf16.mxu0 0
        %1374 = vmatpush1.bf16.msra.mxu0 %v1323
        %1375 = vmatprep.subr.bf16.mxu0 0
        %1376 = vmatpush1.bf16.msra.mxu0 %v1324
        %1377 = vmatprep.subr.bf16.mxu0 0
        %1378 = vmatpush1.bf16.msra.mxu0 %v1325
        %1379 = vmatprep.subr.bf16.mxu0 0
        %1380 = vmatpush1.bf16.msra.mxu0 %v1326
        %1381 = vmatprep.subr.bf16.mxu0 0
        %1382 = vmatpush1.bf16.msra.mxu0 %v1327
        %1383 = vmatprep.subr.bf16.mxu0 0
        %1384 = vmatpush1.bf16.msra.mxu0 %v1328
        %1385 = vmatprep.subr.bf16.mxu0 0
        %1386 = vmatpush1.bf16.msra.mxu0 %v1329
        %1387 = vmatprep.subr.bf16.mxu0 0
        %1388 = vmatpush1.bf16.msra.mxu0 %v1330
        %1389 = vmatprep.subr.bf16.mxu0 0
        %1390 = vmatpush1.bf16.msra.mxu0 %v1331
        %1391 = vmatprep.subr.bf16.mxu0 0
        %1392 = vmatpush1.bf16.msra.mxu0 %v1332
        %1393 = vmatprep.subr.bf16.mxu0 0
        %1394 = vmatpush1.bf16.msra.mxu0 %v1333
        %1395 = vmatprep.subr.bf16.mxu0 0
        %1396 = vmatpush1.bf16.msra.mxu0 %v1334
        %1397 = vmatprep.subr.bf16.mxu0 0
        %1398 = vmatpush1.bf16.msra.mxu0 %v1335
        %1399 = vmatprep.subr.bf16.mxu0 0
        %1400 = vmatpush1.bf16.msra.mxu0 %v1336
        %1401 = vmatprep.mubr.bf16.mxu0 %v1129
        %1402 = vmatmul.mubr.bf16.gmra.mrb[0].mxu0 %v1128
        %v1403 = vpop.f32.mrb[0].mxu0
        %v1404 = vadd.f32 0.0, %v1403
        %v1405 = vpop.f32.mrb[0].mxu0
        %v1406 = vpop.f32.mrb[0].mxu0
        %v1407 = vadd.f32 0.0, %v1406
        %v1408 = vpop.f32.mrb[0].mxu0
        %1409 = vmatprep.mubr.bf16.mxu0 %v1132
        %1410 = vmatmul.mubr.bf16.gmra.mrb[0].mxu0 %v1131
        %v1411 = vpop.f32.mrb[0].mxu0
        %v1412 = vadd.f32 0.0, %v1411
        %v1413 = vpop.f32.mrb[0].mxu0
        %v1414 = vpop.f32.mrb[0].mxu0
        %v1415 = vadd.f32 0.0, %v1414
        %v1416 = vpop.f32.mrb[0].mxu0
        %1417 = vmatprep.mubr.bf16.mxu0 %v1135
        %1418 = vmatmul.mubr.bf16.gmra.mrb[0].mxu0 %v1134
        %v1419 = vpop.f32.mrb[0].mxu0
        %v1420 = vadd.f32 0.0, %v1419
        %v1421 = vpop.f32.mrb[0].mxu0
        %v1422 = vpop.f32.mrb[0].mxu0
        %v1423 = vadd.f32 0.0, %v1422
        %v1424 = vpop.f32.mrb[0].mxu0
        %1425 = vmatprep.mubr.bf16.mxu0 %v1138
        %1426 = vmatmul.mubr.bf16.gmra.mrb[0].mxu0 %v1137
        %v1427 = vpop.f32.mrb[0].mxu0
        %v1428 = vadd.f32 0.0, %v1427
        %v1429 = vpop.f32.mrb[0].mxu0
        %v1430 = vpop.f32.mrb[0].mxu0
        %v1431 = vadd.f32 0.0, %v1430
        %v1432 = vpop.f32.mrb[0].mxu0
        %1433 = vmatprep.mubr.bf16.mxu0 %v1141
        %1434 = vmatmul.mubr.bf16.gmra.mrb[0].mxu0 %v1140
        %v1435 = vpop.f32.mrb[0].mxu0
        %v1436 = vadd.f32 0.0, %v1435
        %v1437 = vpop.f32.mrb[0].mxu0
        %v1438 = vpop.f32.mrb[0].mxu0
        %v1439 = vadd.f32 0.0, %v1438
        %v1440 = vpop.f32.mrb[0].mxu0
        %1441 = vmatprep.mubr.bf16.mxu0 %v1144
        %1442 = vmatmul.mubr.bf16.gmra.mrb[0].mxu0 %v1143
        %v1443 = vpop.f32.mrb[0].mxu0
        %v1444 = vadd.f32 0.0, %v1443
        %v1445 = vpop.f32.mrb[0].mxu0
        %v1446 = vpop.f32.mrb[0].mxu0
        %v1447 = vadd.f32 0.0, %v1446
        %v1448 = vpop.f32.mrb[0].mxu0
        %1449 = vmatprep.mubr.bf16.mxu0 %v1147
        %1450 = vmatmul.mubr.bf16.gmra.mrb[0].mxu0 %v1146
        %v1451 = vpop.f32.mrb[0].mxu0
        %v1452 = vadd.f32 0.0, %v1451
        %v1453 = vpop.f32.mrb[0].mxu0
        %v1454 = vpop.f32.mrb[0].mxu0
        %v1455 = vadd.f32 0.0, %v1454
        %v1456 = vpop.f32.mrb[0].mxu0
        %1457 = vmatprep.mubr.bf16.mxu0 %v1150
        %1458 = vmatmul.mubr.bf16.gmra.mrb[0].mxu0 %v1149
        %v1459 = vpop.f32.mrb[0].mxu0
        %v1460 = vadd.f32 0.0, %v1459
        %v1461 = vpop.f32.mrb[0].mxu0
        %v1462 = vpop.f32.mrb[0].mxu0
        %v1463 = vadd.f32 0.0, %v1462
        %v1464 = vpop.f32.mrb[0].mxu0
        %1465 = vmatprep.mubr.bf16.mxu0 %v1153
        %1466 = vmatmul.mubr.bf16.gmra.mrb[0].mxu0 %v1152
        %v1467 = vpop.f32.mrb[0].mxu0
        %v1468 = vadd.f32 0.0, %v1467
        %v1469 = vpop.f32.mrb[0].mxu0
        %v1470 = vpop.f32.mrb[0].mxu0
        %v1471 = vadd.f32 0.0, %v1470
        %v1472 = vpop.f32.mrb[0].mxu0
        %1473 = vmatprep.mubr.bf16.mxu0 %v1156
        %1474 = vmatmul.mubr.bf16.gmra.mrb[0].mxu0 %v1155
        %v1475 = vpop.f32.mrb[0].mxu0
        %v1476 = vadd.f32 0.0, %v1475
        %v1477 = vpop.f32.mrb[0].mxu0
        %v1478 = vpop.f32.mrb[0].mxu0
        %v1479 = vadd.f32 0.0, %v1478
        %v1480 = vpop.f32.mrb[0].mxu0
        %1481 = vmatprep.mubr.bf16.mxu0 %v1159
        %1482 = vmatmul.mubr.bf16.gmra.mrb[0].mxu0 %v1158
        %v1483 = vpop.f32.mrb[0].mxu0
        %v1484 = vadd.f32 0.0, %v1483
        %v1485 = vpop.f32.mrb[0].mxu0
        %v1486 = vpop.f32.mrb[0].mxu0
        %v1487 = vadd.f32 0.0, %v1486
        %v1488 = vpop.f32.mrb[0].mxu0
        %1489 = vmatprep.mubr.bf16.mxu0 %v1162
        %1490 = vmatmul.mubr.bf16.gmra.mrb[0].mxu0 %v1161
        %v1491 = vpop.f32.mrb[0].mxu0
        %v1492 = vadd.f32 0.0, %v1491
        %v1493 = vpop.f32.mrb[0].mxu0
        %v1494 = vpop.f32.mrb[0].mxu0
        %v1495 = vadd.f32 0.0, %v1494
        %v1496 = vpop.f32.mrb[0].mxu0
        %1497 = vmatprep.mubr.bf16.mxu0 %v1165
        %1498 = vmatmul.mubr.bf16.gmra.mrb[0].mxu0 %v1164
        %v1499 = vpop.f32.mrb[0].mxu0
        %v1500 = vadd.f32 0.0, %v1499
        %v1501 = vpop.f32.mrb[0].mxu0
        %v1502 = vpop.f32.mrb[0].mxu0
        %v1503 = vadd.f32 0.0, %v1502
        %v1504 = vpop.f32.mrb[0].mxu0
        %1505 = vmatprep.mubr.bf16.mxu0 %v1168
        %1506 = vmatmul.mubr.bf16.gmra.mrb[0].mxu0 %v1167
        %v1507 = vpop.f32.mrb[0].mxu0
        %v1508 = vadd.f32 0.0, %v1507
        %v1509 = vpop.f32.mrb[0].mxu0
        %v1510 = vpop.f32.mrb[0].mxu0
        %v1511 = vadd.f32 0.0, %v1510
        %v1512 = vpop.f32.mrb[0].mxu0
        %1513 = vmatprep.mubr.bf16.mxu0 %v1171
        %1514 = vmatmul.mubr.bf16.gmra.mrb[0].mxu0 %v1170
        %v1515 = vpop.f32.mrb[0].mxu0
        %v1516 = vadd.f32 0.0, %v1515
        %v1517 = vpop.f32.mrb[0].mxu0
        %v1518 = vpop.f32.mrb[0].mxu0
        %v1519 = vadd.f32 0.0, %v1518
        %v1520 = vpop.f32.mrb[0].mxu0
        %1521 = vmatprep.mubr.bf16.mxu0 %v1174
        %1522 = vmatmul.mubr.bf16.gmra.mrb[0].mxu0 %v1173
        %v1523 = vpop.f32.mrb[0].mxu0
        %v1524 = vadd.f32 0.0, %v1523
        %v1525 = vpop.f32.mrb[0].mxu0
        %v1526 = vpop.f32.mrb[0].mxu0
        %v1527 = vadd.f32 0.0, %v1526
        %v1528 = vpop.f32.mrb[0].mxu0
        %1529 = vdwg.mxu0
        %1530 = vmatprep.subr.bf16.mxu0 0
        %1531 = vmatpush1.bf16.msra.mxu0 %v1337
        %1532 = vmatprep.subr.bf16.mxu0 0
        %1533 = vmatpush1.bf16.msra.mxu0 %v1338
        %1534 = vmatprep.subr.bf16.mxu0 0
        %1535 = vmatpush1.bf16.msra.mxu0 %v1339
        %1536 = vmatprep.subr.bf16.mxu0 0
        %1537 = vmatpush1.bf16.msra.mxu0 %v1340
        %1538 = vmatprep.subr.bf16.mxu0 0
        %1539 = vmatpush1.bf16.msra.mxu0 %v1341
        %1540 = vmatprep.subr.bf16.mxu0 0
        %1541 = vmatpush1.bf16.msra.mxu0 %v1342
        %1542 = vmatprep.subr.bf16.mxu0 0
        %1543 = vmatpush1.bf16.msra.mxu0 %v1343
        %1544 = vmatprep.subr.bf16.mxu0 0
        %1545 = vmatpush1.bf16.msra.mxu0 %v1344
        %1546 = vmatprep.subr.bf16.mxu0 0
        %1547 = vmatpush1.bf16.msra.mxu0 0
        %1548 = vmatprep.subr.bf16.mxu0 0
        %1549 = vmatpush1.bf16.msra.mxu0 0
        %1550 = vmatprep.subr.bf16.mxu0 0
        %1551 = vmatpush1.bf16.msra.mxu0 0
        %1552 = vmatprep.subr.bf16.mxu0 0
        %1553 = vmatpush1.bf16.msra.mxu0 0
        %1554 = vmatprep.subr.bf16.mxu0 0
        %1555 = vmatpush1.bf16.msra.mxu0 0
        %1556 = vmatprep.subr.bf16.mxu0 0
        %1557 = vmatpush1.bf16.msra.mxu0 0
        %1558 = vmatprep.subr.bf16.mxu0 0
        %1559 = vmatpush1.bf16.msra.mxu0 0
        %1560 = vmatprep.subr.bf16.mxu0 0
        %1561 = vmatpush1.bf16.msra.mxu0 0
        %1562 = vmatprep.mubr.bf16.mxu0 0
        %1563 = vmatmul.mubr.bf16.gmra.mrb[0].mxu0 %v1130
        %v1564 = vpop.f32.mrb[0].mxu0
        %v1565 = vadd.f32 %v1404, %v1564
        %v1566 = vpop.f32.mrb[0].mxu0
        %v1567 = vpop.f32.mrb[0].mxu0
        %v1568 = vadd.f32 %v1407, %v1567
        %v1569 = vpop.f32.mrb[0].mxu0
        %1570 = vmatprep.mubr.bf16.mxu0 0
        %1571 = vmatmul.mubr.bf16.gmra.mrb[0].mxu0 %v1133
        %v1572 = vpop.f32.mrb[0].mxu0
        %v1573 = vadd.f32 %v1412, %v1572
        %v1574 = vpop.f32.mrb[0].mxu0
        %v1575 = vpop.f32.mrb[0].mxu0
        %v1576 = vadd.f32 %v1415, %v1575
        %v1577 = vpop.f32.mrb[0].mxu0
        %1578 = vmatprep.mubr.bf16.mxu0 0
        %1579 = vmatmul.mubr.bf16.gmra.mrb[0].mxu0 %v1136
        %v1580 = vpop.f32.mrb[0].mxu0
        %v1581 = vadd.f32 %v1420, %v1580
        %v1582 = vpop.f32.mrb[0].mxu0
        %v1583 = vpop.f32.mrb[0].mxu0
        %v1584 = vadd.f32 %v1423, %v1583
        %v1585 = vpop.f32.mrb[0].mxu0
        %1586 = vmatprep.mubr.bf16.mxu0 0
        %1587 = vmatmul.mubr.bf16.gmra.mrb[0].mxu0 %v1139
        %v1588 = vpop.f32.mrb[0].mxu0
        %v1589 = vadd.f32 %v1428, %v1588
        %v1590 = vpop.f32.mrb[0].mxu0
        %v1591 = vpop.f32.mrb[0].mxu0
        %v1592 = vadd.f32 %v1431, %v1591
        %v1593 = vpop.f32.mrb[0].mxu0
        %1594 = vmatprep.mubr.bf16.mxu0 0
        %1595 = vmatmul.mubr.bf16.gmra.mrb[0].mxu0 %v1142
        %v1596 = vpop.f32.mrb[0].mxu0
        %v1597 = vadd.f32 %v1436, %v1596
        %v1598 = vpop.f32.mrb[0].mxu0
        %v1599 = vpop.f32.mrb[0].mxu0
        %v1600 = vadd.f32 %v1439, %v1599
        %v1601 = vpop.f32.mrb[0].mxu0
        %1602 = vmatprep.mubr.bf16.mxu0 0
        %1603 = vmatmul.mubr.bf16.gmra.mrb[0].mxu0 %v1145
        %v1604 = vpop.f32.mrb[0].mxu0
        %v1605 = vadd.f32 %v1444, %v1604
        %v1606 = vpop.f32.mrb[0].mxu0
        %v1607 = vpop.f32.mrb[0].mxu0
        %v1608 = vadd.f32 %v1447, %v1607
        %v1609 = vpop.f32.mrb[0].mxu0
        %1610 = vmatprep.mubr.bf16.mxu0 0
        %1611 = vmatmul.mubr.bf16.gmra.mrb[0].mxu0 %v1148
        %v1612 = vpop.f32.mrb[0].mxu0
        %v1613 = vadd.f32 %v1452, %v1612
        %v1614 = vpop.f32.mrb[0].mxu0
        %v1615 = vpop.f32.mrb[0].mxu0
        %v1616 = vadd.f32 %v1455, %v1615
        %v1617 = vpop.f32.mrb[0].mxu0
        %1618 = vmatprep.mubr.bf16.mxu0 0
        %1619 = vmatmul.mubr.bf16.gmra.mrb[0].mxu0 %v1151
        %v1620 = vpop.f32.mrb[0].mxu0
        %v1621 = vadd.f32 %v1460, %v1620
        %v1622 = vpop.f32.mrb[0].mxu0
        %v1623 = vpop.f32.mrb[0].mxu0
        %v1624 = vadd.f32 %v1463, %v1623
        %v1625 = vpop.f32.mrb[0].mxu0
        %1626 = vmatprep.mubr.bf16.mxu0 0
        %1627 = vmatmul.mubr.bf16.gmra.mrb[0].mxu0 %v1154
        %v1628 = vpop.f32.mrb[0].mxu0
        %v1629 = vadd.f32 %v1468, %v1628
        %v1630 = vpop.f32.mrb[0].mxu0
        %v1631 = vpop.f32.mrb[0].mxu0
        %v1632 = vadd.f32 %v1471, %v1631
        %v1633 = vpop.f32.mrb[0].mxu0
        %1634 = vmatprep.mubr.bf16.mxu0 0
        %1635 = vmatmul.mubr.bf16.gmra.mrb[0].mxu0 %v1157
        %v1636 = vpop.f32.mrb[0].mxu0
        %v1637 = vadd.f32 %v1476, %v1636
        %v1638 = vpop.f32.mrb[0].mxu0
        %v1639 = vpop.f32.mrb[0].mxu0
        %v1640 = vadd.f32 %v1479, %v1639
        %v1641 = vpop.f32.mrb[0].mxu0
        %1642 = vmatprep.mubr.bf16.mxu0 0
        %1643 = vmatmul.mubr.bf16.gmra.mrb[0].mxu0 %v1160
        %v1644 = vpop.f32.mrb[0].mxu0
        %v1645 = vadd.f32 %v1484, %v1644
        %v1646 = vpop.f32.mrb[0].mxu0
        %v1647 = vpop.f32.mrb[0].mxu0
        %v1648 = vadd.f32 %v1487, %v1647
        %v1649 = vpop.f32.mrb[0].mxu0
        %1650 = vmatprep.mubr.bf16.mxu0 0
        %1651 = vmatmul.mubr.bf16.gmra.mrb[0].mxu0 %v1163
        %v1652 = vpop.f32.mrb[0].mxu0
        %v1653 = vadd.f32 %v1492, %v1652
        %v1654 = vpop.f32.mrb[0].mxu0
        %v1655 = vpop.f32.mrb[0].mxu0
        %v1656 = vadd.f32 %v1495, %v1655
        %v1657 = vpop.f32.mrb[0].mxu0
        %1658 = vmatprep.mubr.bf16.mxu0 0
        %1659 = vmatmul.mubr.bf16.gmra.mrb[0].mxu0 %v1166
        %v1660 = vpop.f32.mrb[0].mxu0
        %v1661 = vadd.f32 %v1500, %v1660
        %v1662 = vpop.f32.mrb[0].mxu0
        %v1663 = vpop.f32.mrb[0].mxu0
        %v1664 = vadd.f32 %v1503, %v1663
        %v1665 = vpop.f32.mrb[0].mxu0
        %1666 = vmatprep.mubr.bf16.mxu0 0
        %1667 = vmatmul.mubr.bf16.gmra.mrb[0].mxu0 %v1169
        %v1668 = vpop.f32.mrb[0].mxu0
        %v1669 = vadd.f32 %v1508, %v1668
        %v1670 = vpop.f32.mrb[0].mxu0
        %v1671 = vpop.f32.mrb[0].mxu0
        %v1672 = vadd.f32 %v1511, %v1671
        %v1673 = vpop.f32.mrb[0].mxu0
        %1674 = vmatprep.mubr.bf16.mxu0 0
        %1675 = vmatmul.mubr.bf16.gmra.mrb[0].mxu0 %v1172
        %v1676 = vpop.f32.mrb[0].mxu0
        %v1677 = vadd.f32 %v1516, %v1676
        %v1678 = vpop.f32.mrb[0].mxu0
        %v1679 = vpop.f32.mrb[0].mxu0
        %v1680 = vadd.f32 %v1519, %v1679
        %v1681 = vpop.f32.mrb[0].mxu0
        %1682 = vmatprep.mubr.bf16.mxu0 0
        %1683 = vmatmul.mubr.bf16.gmra.mrb[0].mxu0 %v1175
        %v1684 = vpop.f32.mrb[0].mxu0
        %v1685 = vadd.f32 %v1524, %v1684
        %v1686 = vpop.f32.mrb[0].mxu0
        %v1687 = vpop.f32.mrb[0].mxu0
        %v1688 = vadd.f32 %v1527, %v1687
        %v1689 = vpop.f32.mrb[0].mxu0
        %1690 = vdwg.mxu0
        %1691 = vst [vmem:[#allocation2] sm:$0xff] %v1565
        %1692 = vst [vmem:[#allocation2 + $0x8] sm:$0xff] %v1568
        %1693 = vst [vmem:[#allocation2 + $0x10] sm:$0xff] %v1573
        %1694 = vst [vmem:[#allocation2 + $0x18] sm:$0xff] %v1576
        %1695 = vst [vmem:[#allocation2 + $0x20] sm:$0xff] %v1581
        %1696 = vst [vmem:[#allocation2 + $0x28] sm:$0xff] %v1584
        %1697 = vst [vmem:[#allocation2 + $0x30] sm:$0xff] %v1589
        %1698 = vst [vmem:[#allocation2 + $0x38] sm:$0xff] %v1592
        %1699 = vst [vmem:[#allocation2 + $0x40] sm:$0xff] %v1597
        %1700 = vst [vmem:[#allocation2 + $0x48] sm:$0xff] %v1600
        %1701 = vst [vmem:[#allocation2 + $0x50] sm:$0xff] %v1605
        %1702 = vst [vmem:[#allocation2 + $0x58] sm:$0xff] %v1608
        %1703 = vst [vmem:[#allocation2 + $0x60] sm:$0xff] %v1613
        %1704 = vst [vmem:[#allocation2 + $0x68] sm:$0xff] %v1616
        %1705 = vst [vmem:[#allocation2 + $0x70] sm:$0xff] %v1621
        %1706 = vst [vmem:[#allocation2 + $0x78] sm:$0xff] %v1624
        %1707 = vst [vmem:[#allocation2 + $0x80] sm:$0xff] %v1629
        %1708 = vst [vmem:[#allocation2 + $0x88] sm:$0xff] %v1632
        %1709 = vst [vmem:[#allocation2 + $0x90] sm:$0xff] %v1637
        %1710 = vst [vmem:[#allocation2 + $0x98] sm:$0xff] %v1640
        %1711 = vst [vmem:[#allocation2 + $0xa0] sm:$0xff] %v1645
        %1712 = vst [vmem:[#allocation2 + $0xa8] sm:$0xff] %v1648
        %1713 = vst [vmem:[#allocation2 + $0xb0] sm:$0xff] %v1653
        %1714 = vst [vmem:[#allocation2 + $0xb8] sm:$0xff] %v1656
        %1715 = vst [vmem:[#allocation2 + $0xc0] sm:$0xff] %v1661
        %1716 = vst [vmem:[#allocation2 + $0xc8] sm:$0xff] %v1664
        %1717 = vst [vmem:[#allocation2 + $0xd0] sm:$0xff] %v1669
        %1718 = vst [vmem:[#allocation2 + $0xd8] sm:$0xff] %v1672
        %1719 = vst [vmem:[#allocation2 + $0xe0] sm:$0xff] %v1677
        %1720 = vst [vmem:[#allocation2 + $0xe8] sm:$0xff] %v1680
        %1721 = vst [vmem:[#allocation2 + $0xf0] sm:$0xff] %v1685
        %1722 = vst [vmem:[#allocation2 + $0xf8] sm:$0xff] %v1688
        %v1723 = vld [vmem:[#allocation2 + $0x10] sm:$0xff]
        %v1724 = vld [vmem:[#allocation2 + $0x18] sm:$0xff]
        %v1725 = vld [vmem:[#allocation2 + $0x20] sm:$0xff]
        %v1726 = vld [vmem:[#allocation2 + $0x28] sm:$0xff]
        %v1727 = vld [vmem:[#allocation2 + $0x30] sm:$0xff]
        %v1728 = vld [vmem:[#allocation2 + $0x38] sm:$0xff]
        %v1729 = vld [vmem:[#allocation2 + $0x40] sm:$0xff]
        %v1730 = vld [vmem:[#allocation2 + $0x48] sm:$0xff]
        %v1731 = vld [vmem:[#allocation2 + $0x50] sm:$0xff]
        %v1732 = vld [vmem:[#allocation2 + $0x58] sm:$0xff]
        %v1733 = vld [vmem:[#allocation2 + $0x60] sm:$0xff]
        %v1734 = vld [vmem:[#allocation2 + $0x68] sm:$0xff]
        %v1735 = vld [vmem:[#allocation2 + $0x70] sm:$0xff]
        %v1736 = vld [vmem:[#allocation2 + $0x78] sm:$0xff]
        %v1737 = vld [vmem:[#allocation2 + $0x80] sm:$0xff]
        %v1738 = vld [vmem:[#allocation2 + $0x88] sm:$0xff]
        %v1739 = vld [vmem:[#allocation2 + $0x90] sm:$0xff]
        %v1740 = vld [vmem:[#allocation2 + $0x98] sm:$0xff]
        %v1741 = vld [vmem:[#allocation2 + $0xa0] sm:$0xff]
        %v1742 = vld [vmem:[#allocation2 + $0xa8] sm:$0xff]
        %v1743 = vld [vmem:[#allocation2 + $0xb0] sm:$0xff]
        %v1744 = vld [vmem:[#allocation2 + $0xb8] sm:$0xff]
        %v1745 = vld [vmem:[#allocation2 + $0xc0] sm:$0xff]
        %v1746 = vld [vmem:[#allocation2 + $0xc8] sm:$0xff]
        %v1747 = vld [vmem:[#allocation2 + $0xd0] sm:$0xff]
        %v1748 = vld [vmem:[#allocation2 + $0xd8] sm:$0xff]
        %v1749 = vld [vmem:[#allocation2 + $0xe0] sm:$0xff]
        %v1750 = vld [vmem:[#allocation2 + $0xe8] sm:$0xff]
        %v1751 = vld [vmem:[#allocation2 + $0xf0] sm:$0xff]
        %v1752 = vld [vmem:[#allocation2 + $0xf8] sm:$0xff]
        %v1753 = vld [vmem:[#allocation6] sm:$0xf]
        %v1754 = vld [vmem:[#allocation6 + $0x4] sm:$0xf]
        %v1755 = vld [vmem:[#allocation6 + $0x8] sm:$0xf]
        %v1756 = vld [vmem:[#allocation6 + $0xc] sm:$0xf]
        %v1757 = vld [vmem:[#allocation6 + $0x10] sm:$0xf]
        %v1758 = vld [vmem:[#allocation6 + $0x14] sm:$0xf]
        %v1759 = vld [vmem:[#allocation6 + $0x18] sm:$0xf]
        %v1760 = vld [vmem:[#allocation6 + $0x1c] sm:$0xf]
        %v1761 = vld [vmem:[#allocation6 + $0x20] sm:$0xf]
        %v1762 = vld [vmem:[#allocation6 + $0x24] sm:$0xf]
        %v1763 = vld [vmem:[#allocation6 + $0x28] sm:$0xf]
        %v1764 = vld [vmem:[#allocation6 + $0x2c] sm:$0xf]
        %v1765 = vld [vmem:[#allocation6 + $0x30] sm:$0xf]
        %v1766 = vld [vmem:[#allocation6 + $0x34] sm:$0xf]
        %v1767 = vld [vmem:[#allocation6 + $0x38] sm:$0xf]
        %v1768 = vld [vmem:[#allocation6 + $0x3c] sm:$0xf]
        %v1769 = vld [vmem:[#allocation6 + $0x40] sm:$0xf]
        %v1770 = vld [vmem:[#allocation6 + $0x44] sm:$0xf]
        %v1771 = vld [vmem:[#allocation6 + $0x48] sm:$0xf]
        %v1772 = vld [vmem:[#allocation6 + $0x4c] sm:$0xf]
        %v1773 = vld [vmem:[#allocation6 + $0x50] sm:$0xf]
        %v1774 = vld [vmem:[#allocation6 + $0x54] sm:$0xf]
        %v1775 = vld [vmem:[#allocation6 + $0x58] sm:$0xf]
        %v1776 = vld [vmem:[#allocation6 + $0x5c] sm:$0xf]
        %v1777 = vld [vmem:[#allocation6 + $0x60] sm:$0xf]
        %v1778 = vld [vmem:[#allocation6 + $0x64] sm:$0xf]
        %v1779 = vld [vmem:[#allocation6 + $0x68] sm:$0xf]
        %v1780 = vld [vmem:[#allocation6 + $0x6c] sm:$0xf]
        %v1781 = vld [vmem:[#allocation6 + $0x70] sm:$0xf]
        %v1782 = vld [vmem:[#allocation6 + $0x74] sm:$0xf]
        %v1783 = vld [vmem:[#allocation6 + $0x78] sm:$0xf]
        %v1784 = vld [vmem:[#allocation6 + $0x7c] sm:$0xf]
        %v1785 = vld [vmem:[#allocation6 + $0x80] sm:$0xf]
        %v1786 = vld [vmem:[#allocation6 + $0x84] sm:$0xf]
        %v1787 = vld [vmem:[#allocation6 + $0x88] sm:$0xf]
        %v1788 = vld [vmem:[#allocation6 + $0x8c] sm:$0xf]
        %v1789 = vld [vmem:[#allocation6 + $0x90] sm:$0xf]
        %v1790 = vld [vmem:[#allocation6 + $0x94] sm:$0xf]
        %v1791 = vld [vmem:[#allocation6 + $0x98] sm:$0xf]
        %v1792 = vld [vmem:[#allocation6 + $0x9c] sm:$0xf]
        %v1793 = vld [vmem:[#allocation6 + $0xa0] sm:$0xf]
        %v1794 = vld [vmem:[#allocation6 + $0xa4] sm:$0xf]
        %v1795 = vld [vmem:[#allocation6 + $0xa8] sm:$0xf]
        %v1796 = vld [vmem:[#allocation6 + $0xac] sm:$0xf]
        %v1797 = vld [vmem:[#allocation6 + $0xb0] sm:$0xf]
        %v1798 = vld [vmem:[#allocation6 + $0xb4] sm:$0xf]
        %v1799 = vld [vmem:[#allocation6 + $0xb8] sm:$0xf]
        %v1800 = vld [vmem:[#allocation6 + $0xbc] sm:$0xf]
        %v1849 = vunpack.c.l.b16 %v1753
        %v1850 = vunpack.c.l.b16 %v1754
        %v1851 = vunpack.c.l.b16 %v1755
        %v1852 = vunpack.c.l.b16 %v1756
        %v1853 = vunpack.c.l.b16 %v1757
        %v1854 = vunpack.c.l.b16 %v1758
        %v1855 = vunpack.c.l.b16 %v1759
        %v1856 = vunpack.c.l.b16 %v1760
        %v1857 = vunpack.c.l.b16 %v1761
        %v1858 = vunpack.c.l.b16 %v1762
        %v1859 = vunpack.c.l.b16 %v1763
        %v1860 = vunpack.c.l.b16 %v1764
        %v1861 = vunpack.c.l.b16 %v1765
        %v1862 = vunpack.c.l.b16 %v1766
        %v1863 = vunpack.c.l.b16 %v1767
        %v1864 = vunpack.c.l.b16 %v1768
        %v1865 = vunpack.c.l.b16 %v1769
        %v1866 = vunpack.c.l.b16 %v1770
        %v1867 = vunpack.c.l.b16 %v1771
        %v1868 = vunpack.c.l.b16 %v1772
        %v1869 = vunpack.c.l.b16 %v1773
        %v1870 = vunpack.c.l.b16 %v1774
        %v1871 = vunpack.c.l.b16 %v1775
        %v1872 = vunpack.c.l.b16 %v1776
        %v1873 = vunpack.c.l.b16 %v1777
        %v1874 = vunpack.c.l.b16 %v1778
        %v1875 = vunpack.c.l.b16 %v1779
        %v1876 = vunpack.c.l.b16 %v1780
        %v1877 = vunpack.c.l.b16 %v1781
        %v1878 = vunpack.c.l.b16 %v1782
        %v1879 = vunpack.c.l.b16 %v1783
        %v1880 = vunpack.c.l.b16 %v1784
        %v1881 = vunpack.c.l.b16 %v1785
        %v1882 = vunpack.c.l.b16 %v1786
        %v1883 = vunpack.c.l.b16 %v1787
        %v1884 = vunpack.c.l.b16 %v1788
        %v1885 = vunpack.c.l.b16 %v1789
        %v1886 = vunpack.c.l.b16 %v1790
        %v1887 = vunpack.c.l.b16 %v1791
        %v1888 = vunpack.c.l.b16 %v1792
        %v1889 = vunpack.c.l.b16 %v1793
        %v1890 = vunpack.c.l.b16 %v1794
        %v1891 = vunpack.c.l.b16 %v1795
        %v1892 = vunpack.c.l.b16 %v1796
        %v1893 = vunpack.c.l.b16 %v1797
        %v1894 = vunpack.c.l.b16 %v1798
        %v1895 = vunpack.c.l.b16 %v1799
        %v1896 = vunpack.c.l.b16 %v1800
        %v1897 = vpack.c.b16 %v1850, %v1849
        %v1898 = vpack.c.b16 %v1852, %v1851
        %v1899 = vpack.c.b16 %v1854, %v1853
        %v1900 = vpack.c.b16 %v1856, %v1855
        %v1901 = vpack.c.b16 %v1858, %v1857
        %v1902 = vpack.c.b16 %v1860, %v1859
        %v1903 = vpack.c.b16 %v1862, %v1861
        %v1904 = vpack.c.b16 %v1864, %v1863
        %v1905 = vpack.c.b16 %v1866, %v1865
        %v1906 = vpack.c.b16 %v1868, %v1867
        %v1907 = vpack.c.b16 %v1870, %v1869
        %v1908 = vpack.c.b16 %v1872, %v1871
        %v1909 = vpack.c.b16 %v1874, %v1873
        %v1910 = vpack.c.b16 %v1876, %v1875
        %v1911 = vpack.c.b16 %v1878, %v1877
        %v1912 = vpack.c.b16 %v1880, %v1879
        %v1913 = vpack.c.b16 %v1882, %v1881
        %v1914 = vpack.c.b16 %v1884, %v1883
        %v1915 = vpack.c.b16 %v1886, %v1885
        %v1916 = vpack.c.b16 %v1888, %v1887
        %v1917 = vpack.c.b16 %v1890, %v1889
        %v1918 = vpack.c.b16 %v1892, %v1891
        %v1919 = vpack.c.b16 %v1894, %v1893
        %v1920 = vpack.c.b16 %v1896, %v1895
        %1945 = vmatprep.subr.bf16.mxu0 0
        %1946 = vmatpush1.bf16.msra.mxu0 %v1897
        %1947 = vmatprep.subr.bf16.mxu0 0
        %1948 = vmatpush1.bf16.msra.mxu0 %v1898
        %1949 = vmatprep.subr.bf16.mxu0 0
        %1950 = vmatpush1.bf16.msra.mxu0 %v1899
        %1951 = vmatprep.subr.bf16.mxu0 0
        %1952 = vmatpush1.bf16.msra.mxu0 %v1900
        %1953 = vmatprep.subr.bf16.mxu0 0
        %1954 = vmatpush1.bf16.msra.mxu0 %v1901
        %1955 = vmatprep.subr.bf16.mxu0 0
        %1956 = vmatpush1.bf16.msra.mxu0 %v1902
        %1957 = vmatprep.subr.bf16.mxu0 0
        %1958 = vmatpush1.bf16.msra.mxu0 %v1903
        %1959 = vmatprep.subr.bf16.mxu0 0
        %1960 = vmatpush1.bf16.msra.mxu0 %v1904
        %1961 = vmatprep.subr.bf16.mxu0 0
        %1962 = vmatpush1.bf16.msra.mxu0 %v1905
        %1963 = vmatprep.subr.bf16.mxu0 0
        %1964 = vmatpush1.bf16.msra.mxu0 %v1906
        %1965 = vmatprep.subr.bf16.mxu0 0
        %1966 = vmatpush1.bf16.msra.mxu0 %v1907
        %1967 = vmatprep.subr.bf16.mxu0 0
        %1968 = vmatpush1.bf16.msra.mxu0 %v1908
        %1969 = vmatprep.subr.bf16.mxu0 0
        %1970 = vmatpush1.bf16.msra.mxu0 %v1909
        %1971 = vmatprep.subr.bf16.mxu0 0
        %1972 = vmatpush1.bf16.msra.mxu0 %v1910
        %1973 = vmatprep.subr.bf16.mxu0 0
        %1974 = vmatpush1.bf16.msra.mxu0 %v1911
        %1975 = vmatprep.subr.bf16.mxu0 0
        %1976 = vmatpush1.bf16.msra.mxu0 %v1912
        %1977 = vmatprep.mubr.bf16.mxu0 %v1129
        %1978 = vmatmul.mubr.bf16.gmra.mrb[0].mxu0 %v1128
        %v1979 = vpop.f32.mrb[0].mxu0
        %v1980 = vadd.f32 0.0, %v1979
        %v1981 = vpop.f32.mrb[0].mxu0
        %v1982 = vpop.f32.mrb[0].mxu0
        %v1983 = vadd.f32 0.0, %v1982
        %v1984 = vpop.f32.mrb[0].mxu0
        %1985 = vmatprep.mubr.bf16.mxu0 %v1132
        %1986 = vmatmul.mubr.bf16.gmra.mrb[0].mxu0 %v1131
        %v1987 = vpop.f32.mrb[0].mxu0
        %v1988 = vadd.f32 0.0, %v1987
        %v1989 = vpop.f32.mrb[0].mxu0
        %v1990 = vpop.f32.mrb[0].mxu0
        %v1991 = vadd.f32 0.0, %v1990
        %v1992 = vpop.f32.mrb[0].mxu0
        %1993 = vmatprep.mubr.bf16.mxu0 %v1135
        %1994 = vmatmul.mubr.bf16.gmra.mrb[0].mxu0 %v1134
        %v1995 = vpop.f32.mrb[0].mxu0
        %v1996 = vadd.f32 0.0, %v1995
        %v1997 = vpop.f32.mrb[0].mxu0
        %v1998 = vpop.f32.mrb[0].mxu0
        %v1999 = vadd.f32 0.0, %v1998
        %v2000 = vpop.f32.mrb[0].mxu0
        %2001 = vmatprep.mubr.bf16.mxu0 %v1138
        %2002 = vmatmul.mubr.bf16.gmra.mrb[0].mxu0 %v1137
        %v2003 = vpop.f32.mrb[0].mxu0
        %v2004 = vadd.f32 0.0, %v2003
        %v2005 = vpop.f32.mrb[0].mxu0
        %v2006 = vpop.f32.mrb[0].mxu0
        %v2007 = vadd.f32 0.0, %v2006
        %v2008 = vpop.f32.mrb[0].mxu0
        %2009 = vmatprep.mubr.bf16.mxu0 %v1141
        %2010 = vmatmul.mubr.bf16.gmra.mrb[0].mxu0 %v1140
        %v2011 = vpop.f32.mrb[0].mxu0
        %v2012 = vadd.f32 0.0, %v2011
        %v2013 = vpop.f32.mrb[0].mxu0
        %v2014 = vpop.f32.mrb[0].mxu0
        %v2015 = vadd.f32 0.0, %v2014
        %v2016 = vpop.f32.mrb[0].mxu0
        %2017 = vmatprep.mubr.bf16.mxu0 %v1144
        %2018 = vmatmul.mubr.bf16.gmra.mrb[0].mxu0 %v1143
        %v2019 = vpop.f32.mrb[0].mxu0
        %v2020 = vadd.f32 0.0, %v2019
        %v2021 = vpop.f32.mrb[0].mxu0
        %v2022 = vpop.f32.mrb[0].mxu0
        %v2023 = vadd.f32 0.0, %v2022
        %v2024 = vpop.f32.mrb[0].mxu0
        %2025 = vmatprep.mubr.bf16.mxu0 %v1147
        %2026 = vmatmul.mubr.bf16.gmra.mrb[0].mxu0 %v1146
        %v2027 = vpop.f32.mrb[0].mxu0
        %v2028 = vadd.f32 0.0, %v2027
        %v2029 = vpop.f32.mrb[0].mxu0
        %v2030 = vpop.f32.mrb[0].mxu0
        %v2031 = vadd.f32 0.0, %v2030
        %v2032 = vpop.f32.mrb[0].mxu0
        %2033 = vmatprep.mubr.bf16.mxu0 %v1150
        %2034 = vmatmul.mubr.bf16.gmra.mrb[0].mxu0 %v1149
        %v2035 = vpop.f32.mrb[0].mxu0
        %v2036 = vadd.f32 0.0, %v2035
        %v2037 = vpop.f32.mrb[0].mxu0
        %v2038 = vpop.f32.mrb[0].mxu0
        %v2039 = vadd.f32 0.0, %v2038
        %v2040 = vpop.f32.mrb[0].mxu0
        %2041 = vmatprep.mubr.bf16.mxu0 %v1153
        %2042 = vmatmul.mubr.bf16.gmra.mrb[0].mxu0 %v1152
        %v2043 = vpop.f32.mrb[0].mxu0
        %v2044 = vadd.f32 0.0, %v2043
        %v2045 = vpop.f32.mrb[0].mxu0
        %v2046 = vpop.f32.mrb[0].mxu0
        %v2047 = vadd.f32 0.0, %v2046
        %v2048 = vpop.f32.mrb[0].mxu0
        %2049 = vmatprep.mubr.bf16.mxu0 %v1156
        %2050 = vmatmul.mubr.bf16.gmra.mrb[0].mxu0 %v1155
        %v2051 = vpop.f32.mrb[0].mxu0
        %v2052 = vadd.f32 0.0, %v2051
        %v2053 = vpop.f32.mrb[0].mxu0
        %v2054 = vpop.f32.mrb[0].mxu0
        %v2055 = vadd.f32 0.0, %v2054
        %v2056 = vpop.f32.mrb[0].mxu0
        %2057 = vmatprep.mubr.bf16.mxu0 %v1159
        %2058 = vmatmul.mubr.bf16.gmra.mrb[0].mxu0 %v1158
        %v2059 = vpop.f32.mrb[0].mxu0
        %v2060 = vadd.f32 0.0, %v2059
        %v2061 = vpop.f32.mrb[0].mxu0
        %v2062 = vpop.f32.mrb[0].mxu0
        %v2063 = vadd.f32 0.0, %v2062
        %v2064 = vpop.f32.mrb[0].mxu0
        %2065 = vmatprep.mubr.bf16.mxu0 %v1162
        %2066 = vmatmul.mubr.bf16.gmra.mrb[0].mxu0 %v1161
        %v2067 = vpop.f32.mrb[0].mxu0
        %v2068 = vadd.f32 0.0, %v2067
        %v2069 = vpop.f32.mrb[0].mxu0
        %v2070 = vpop.f32.mrb[0].mxu0
        %v2071 = vadd.f32 0.0, %v2070
        %v2072 = vpop.f32.mrb[0].mxu0
        %2073 = vmatprep.mubr.bf16.mxu0 %v1165
        %2074 = vmatmul.mubr.bf16.gmra.mrb[0].mxu0 %v1164
        %v2075 = vpop.f32.mrb[0].mxu0
        %v2076 = vadd.f32 0.0, %v2075
        %v2077 = vpop.f32.mrb[0].mxu0
        %v2078 = vpop.f32.mrb[0].mxu0
        %v2079 = vadd.f32 0.0, %v2078
        %v2080 = vpop.f32.mrb[0].mxu0
        %2081 = vmatprep.mubr.bf16.mxu0 %v1168
        %2082 = vmatmul.mubr.bf16.gmra.mrb[0].mxu0 %v1167
        %v2083 = vpop.f32.mrb[0].mxu0
        %v2084 = vadd.f32 0.0, %v2083
        %v2085 = vpop.f32.mrb[0].mxu0
        %v2086 = vpop.f32.mrb[0].mxu0
        %v2087 = vadd.f32 0.0, %v2086
        %v2088 = vpop.f32.mrb[0].mxu0
        %2089 = vmatprep.mubr.bf16.mxu0 %v1171
        %2090 = vmatmul.mubr.bf16.gmra.mrb[0].mxu0 %v1170
        %v2091 = vpop.f32.mrb[0].mxu0
        %v2092 = vadd.f32 0.0, %v2091
        %v2093 = vpop.f32.mrb[0].mxu0
        %v2094 = vpop.f32.mrb[0].mxu0
        %v2095 = vadd.f32 0.0, %v2094
        %v2096 = vpop.f32.mrb[0].mxu0
        %2097 = vdwg.mxu0
        %2098 = vmatprep.subr.bf16.mxu0 0
        %2099 = vmatpush1.bf16.msra.mxu0 %v1913
        %2100 = vmatprep.subr.bf16.mxu0 0
        %2101 = vmatpush1.bf16.msra.mxu0 %v1914
        %2102 = vmatprep.subr.bf16.mxu0 0
        %2103 = vmatpush1.bf16.msra.mxu0 %v1915
        %2104 = vmatprep.subr.bf16.mxu0 0
        %2105 = vmatpush1.bf16.msra.mxu0 %v1916
        %2106 = vmatprep.subr.bf16.mxu0 0
        %2107 = vmatpush1.bf16.msra.mxu0 %v1917
        %2108 = vmatprep.subr.bf16.mxu0 0
        %2109 = vmatpush1.bf16.msra.mxu0 %v1918
        %2110 = vmatprep.subr.bf16.mxu0 0
        %2111 = vmatpush1.bf16.msra.mxu0 %v1919
        %2112 = vmatprep.subr.bf16.mxu0 0
        %2113 = vmatpush1.bf16.msra.mxu0 %v1920
        %2114 = vmatprep.subr.bf16.mxu0 0
        %2115 = vmatpush1.bf16.msra.mxu0 0
        %2116 = vmatprep.subr.bf16.mxu0 0
        %2117 = vmatpush1.bf16.msra.mxu0 0
        %2118 = vmatprep.subr.bf16.mxu0 0
        %2119 = vmatpush1.bf16.msra.mxu0 0
        %2120 = vmatprep.subr.bf16.mxu0 0
        %2121 = vmatpush1.bf16.msra.mxu0 0
        %2122 = vmatprep.subr.bf16.mxu0 0
        %2123 = vmatpush1.bf16.msra.mxu0 0
        %2124 = vmatprep.subr.bf16.mxu0 0
        %2125 = vmatpush1.bf16.msra.mxu0 0
        %2126 = vmatprep.subr.bf16.mxu0 0
        %2127 = vmatpush1.bf16.msra.mxu0 0
        %2128 = vmatprep.subr.bf16.mxu0 0
        %2129 = vmatpush1.bf16.msra.mxu0 0
        %2130 = vmatprep.mubr.bf16.mxu0 0
        %2131 = vmatmul.mubr.bf16.gmra.mrb[0].mxu0 %v1130
        %v2132 = vpop.f32.mrb[0].mxu0
        %v2133 = vadd.f32 %v1980, %v2132
        %v2134 = vpop.f32.mrb[0].mxu0
        %v2135 = vpop.f32.mrb[0].mxu0
        %v2136 = vadd.f32 %v1983, %v2135
        %v2137 = vpop.f32.mrb[0].mxu0
        %2138 = vmatprep.mubr.bf16.mxu0 0
        %2139 = vmatmul.mubr.bf16.gmra.mrb[0].mxu0 %v1133
        %v2140 = vpop.f32.mrb[0].mxu0
        %v2141 = vadd.f32 %v1988, %v2140
        %v2142 = vpop.f32.mrb[0].mxu0
        %v2143 = vpop.f32.mrb[0].mxu0
        %v2144 = vadd.f32 %v1991, %v2143
        %v2145 = vpop.f32.mrb[0].mxu0
        %2146 = vmatprep.mubr.bf16.mxu0 0
        %2147 = vmatmul.mubr.bf16.gmra.mrb[0].mxu0 %v1136
        %v2148 = vpop.f32.mrb[0].mxu0
        %v2149 = vadd.f32 %v1996, %v2148
        %v2150 = vpop.f32.mrb[0].mxu0
        %v2151 = vpop.f32.mrb[0].mxu0
        %v2152 = vadd.f32 %v1999, %v2151
        %v2153 = vpop.f32.mrb[0].mxu0
        %2154 = vmatprep.mubr.bf16.mxu0 0
        %2155 = vmatmul.mubr.bf16.gmra.mrb[0].mxu0 %v1139
        %v2156 = vpop.f32.mrb[0].mxu0
        %v2157 = vadd.f32 %v2004, %v2156
        %v2158 = vpop.f32.mrb[0].mxu0
        %v2159 = vpop.f32.mrb[0].mxu0
        %v2160 = vadd.f32 %v2007, %v2159
        %v2161 = vpop.f32.mrb[0].mxu0
        %2162 = vmatprep.mubr.bf16.mxu0 0
        %2163 = vmatmul.mubr.bf16.gmra.mrb[0].mxu0 %v1142
        %v2164 = vpop.f32.mrb[0].mxu0
        %v2165 = vadd.f32 %v2012, %v2164
        %v2166 = vpop.f32.mrb[0].mxu0
        %v2167 = vpop.f32.mrb[0].mxu0
        %v2168 = vadd.f32 %v2015, %v2167
        %v2169 = vpop.f32.mrb[0].mxu0
        %2170 = vmatprep.mubr.bf16.mxu0 0
        %2171 = vmatmul.mubr.bf16.gmra.mrb[0].mxu0 %v1145
        %v2172 = vpop.f32.mrb[0].mxu0
        %v2173 = vadd.f32 %v2020, %v2172
        %v2174 = vpop.f32.mrb[0].mxu0
        %v2175 = vpop.f32.mrb[0].mxu0
        %v2176 = vadd.f32 %v2023, %v2175
        %v2177 = vpop.f32.mrb[0].mxu0
        %2178 = vmatprep.mubr.bf16.mxu0 0
        %2179 = vmatmul.mubr.bf16.gmra.mrb[0].mxu0 %v1148
        %v2180 = vpop.f32.mrb[0].mxu0
        %v2181 = vadd.f32 %v2028, %v2180
        %v2182 = vpop.f32.mrb[0].mxu0
        %v2183 = vpop.f32.mrb[0].mxu0
        %v2184 = vadd.f32 %v2031, %v2183
        %v2185 = vpop.f32.mrb[0].mxu0
        %2186 = vmatprep.mubr.bf16.mxu0 0
        %2187 = vmatmul.mubr.bf16.gmra.mrb[0].mxu0 %v1151
        %v2188 = vpop.f32.mrb[0].mxu0
        %v2189 = vadd.f32 %v2036, %v2188
        %v2190 = vpop.f32.mrb[0].mxu0
        %v2191 = vpop.f32.mrb[0].mxu0
        %v2192 = vadd.f32 %v2039, %v2191
        %v2193 = vpop.f32.mrb[0].mxu0
        %2194 = vmatprep.mubr.bf16.mxu0 0
        %2195 = vmatmul.mubr.bf16.gmra.mrb[0].mxu0 %v1154
        %v2196 = vpop.f32.mrb[0].mxu0
        %v2197 = vadd.f32 %v2044, %v2196
        %v2198 = vpop.f32.mrb[0].mxu0
        %v2199 = vpop.f32.mrb[0].mxu0
        %v2200 = vadd.f32 %v2047, %v2199
        %v2201 = vpop.f32.mrb[0].mxu0
        %2202 = vmatprep.mubr.bf16.mxu0 0
        %2203 = vmatmul.mubr.bf16.gmra.mrb[0].mxu0 %v1157
        %v2204 = vpop.f32.mrb[0].mxu0
        %v2205 = vadd.f32 %v2052, %v2204
        %v2206 = vpop.f32.mrb[0].mxu0
        %v2207 = vpop.f32.mrb[0].mxu0
        %v2208 = vadd.f32 %v2055, %v2207
        %v2209 = vpop.f32.mrb[0].mxu0
        %2210 = vmatprep.mubr.bf16.mxu0 0
        %2211 = vmatmul.mubr.bf16.gmra.mrb[0].mxu0 %v1160
        %v2212 = vpop.f32.mrb[0].mxu0
        %v2213 = vadd.f32 %v2060, %v2212
        %v2214 = vpop.f32.mrb[0].mxu0
        %v2215 = vpop.f32.mrb[0].mxu0
        %v2216 = vadd.f32 %v2063, %v2215
        %v2217 = vpop.f32.mrb[0].mxu0
        %2218 = vmatprep.mubr.bf16.mxu0 0
        %2219 = vmatmul.mubr.bf16.gmra.mrb[0].mxu0 %v1163
        %v2220 = vpop.f32.mrb[0].mxu0
        %v2221 = vadd.f32 %v2068, %v2220
        %v2222 = vpop.f32.mrb[0].mxu0
        %v2223 = vpop.f32.mrb[0].mxu0
        %v2224 = vadd.f32 %v2071, %v2223
        %v2225 = vpop.f32.mrb[0].mxu0
        %2226 = vmatprep.mubr.bf16.mxu0 0
        %2227 = vmatmul.mubr.bf16.gmra.mrb[0].mxu0 %v1166
        %v2228 = vpop.f32.mrb[0].mxu0
        %v2229 = vadd.f32 %v2076, %v2228
        %v2230 = vpop.f32.mrb[0].mxu0
        %v2231 = vpop.f32.mrb[0].mxu0
        %v2232 = vadd.f32 %v2079, %v2231
        %v2233 = vpop.f32.mrb[0].mxu0
        %2234 = vmatprep.mubr.bf16.mxu0 0
        %2235 = vmatmul.mubr.bf16.gmra.mrb[0].mxu0 %v1169
        %v2236 = vpop.f32.mrb[0].mxu0
        %v2237 = vadd.f32 %v2084, %v2236
        %v2238 = vpop.f32.mrb[0].mxu0
        %v2239 = vpop.f32.mrb[0].mxu0
        %v2240 = vadd.f32 %v2087, %v2239
        %v2241 = vpop.f32.mrb[0].mxu0
        %2242 = vmatprep.mubr.bf16.mxu0 0
        %2243 = vmatmul.mubr.bf16.gmra.mrb[0].mxu0 %v1172
        %v2244 = vpop.f32.mrb[0].mxu0
        %v2245 = vadd.f32 %v2092, %v2244
        %v2246 = vpop.f32.mrb[0].mxu0
        %v2247 = vpop.f32.mrb[0].mxu0
        %v2248 = vadd.f32 %v2095, %v2247
        %v2249 = vpop.f32.mrb[0].mxu0
        %2250 = vdwg.mxu0
        %v2251 = vadd.f32 %v1723, %v2133
        %v2252 = vadd.f32 %v1724, %v2136
        %v2253 = vadd.f32 %v1725, %v2141
        %v2254 = vadd.f32 %v1726, %v2144
        %v2255 = vadd.f32 %v1727, %v2149
        %v2256 = vadd.f32 %v1728, %v2152
        %v2257 = vadd.f32 %v1729, %v2157
        %v2258 = vadd.f32 %v1730, %v2160
        %v2259 = vadd.f32 %v1731, %v2165
        %v2260 = vadd.f32 %v1732, %v2168
        %v2261 = vadd.f32 %v1733, %v2173
        %v2262 = vadd.f32 %v1734, %v2176
        %v2263 = vadd.f32 %v1735, %v2181
        %v2264 = vadd.f32 %v1736, %v2184
        %v2265 = vadd.f32 %v1737, %v2189
        %v2266 = vadd.f32 %v1738, %v2192
        %v2267 = vadd.f32 %v1739, %v2197
        %v2268 = vadd.f32 %v1740, %v2200
        %v2269 = vadd.f32 %v1741, %v2205
        %v2270 = vadd.f32 %v1742, %v2208
        %v2271 = vadd.f32 %v1743, %v2213
        %v2272 = vadd.f32 %v1744, %v2216
        %v2273 = vadd.f32 %v1745, %v2221
        %v2274 = vadd.f32 %v1746, %v2224
        %v2275 = vadd.f32 %v1747, %v2229
        %v2276 = vadd.f32 %v1748, %v2232
        %v2277 = vadd.f32 %v1749, %v2237
        %v2278 = vadd.f32 %v1750, %v2240
        %v2279 = vadd.f32 %v1751, %v2245
        %v2280 = vadd.f32 %v1752, %v2248
        %2281 = vst [vmem:[#allocation2 + $0x10] sm:$0xff] %v2251
        %2282 = vst [vmem:[#allocation2 + $0x18] sm:$0xff] %v2252
        %2283 = vst [vmem:[#allocation2 + $0x20] sm:$0xff] %v2253
        %2284 = vst [vmem:[#allocation2 + $0x28] sm:$0xff] %v2254
        %2285 = vst [vmem:[#allocation2 + $0x30] sm:$0xff] %v2255
        %2286 = vst [vmem:[#allocation2 + $0x38] sm:$0xff] %v2256
        %2287 = vst [vmem:[#allocation2 + $0x40] sm:$0xff] %v2257
        %2288 = vst [vmem:[#allocation2 + $0x48] sm:$0xff] %v2258
        %2289 = vst [vmem:[#allocation2 + $0x50] sm:$0xff] %v2259
        %2290 = vst [vmem:[#allocation2 + $0x58] sm:$0xff] %v2260
        %2291 = vst [vmem:[#allocation2 + $0x60] sm:$0xff] %v2261
        %2292 = vst [vmem:[#allocation2 + $0x68] sm:$0xff] %v2262
        %2293 = vst [vmem:[#allocation2 + $0x70] sm:$0xff] %v2263
        %2294 = vst [vmem:[#allocation2 + $0x78] sm:$0xff] %v2264
        %2295 = vst [vmem:[#allocation2 + $0x80] sm:$0xff] %v2265
        %2296 = vst [vmem:[#allocation2 + $0x88] sm:$0xff] %v2266
        %2297 = vst [vmem:[#allocation2 + $0x90] sm:$0xff] %v2267
        %2298 = vst [vmem:[#allocation2 + $0x98] sm:$0xff] %v2268
        %2299 = vst [vmem:[#allocation2 + $0xa0] sm:$0xff] %v2269
        %2300 = vst [vmem:[#allocation2 + $0xa8] sm:$0xff] %v2270
        %2301 = vst [vmem:[#allocation2 + $0xb0] sm:$0xff] %v2271
        %2302 = vst [vmem:[#allocation2 + $0xb8] sm:$0xff] %v2272
        %2303 = vst [vmem:[#allocation2 + $0xc0] sm:$0xff] %v2273
        %2304 = vst [vmem:[#allocation2 + $0xc8] sm:$0xff] %v2274
        %2305 = vst [vmem:[#allocation2 + $0xd0] sm:$0xff] %v2275
        %2306 = vst [vmem:[#allocation2 + $0xd8] sm:$0xff] %v2276
        %2307 = vst [vmem:[#allocation2 + $0xe0] sm:$0xff] %v2277
        %2308 = vst [vmem:[#allocation2 + $0xe8] sm:$0xff] %v2278
        %2309 = vst [vmem:[#allocation2 + $0xf0] sm:$0xff] %v2279
        %2310 = vst [vmem:[#allocation2 + $0xf8] sm:$0xff] %v2280
        %v2311 = vld [vmem:[#allocation2] sm:$0xff]
        %v2312 = vld [vmem:[#allocation2 + $0x8] sm:$0xff]
        %v2313 = vld [vmem:[#allocation2 + $0x10] sm:$0xff]
        %v2314 = vld [vmem:[#allocation2 + $0x18] sm:$0xff]
        %v2315 = vld [vmem:[#allocation2 + $0x20] sm:$0xff]
        %v2316 = vld [vmem:[#allocation2 + $0x28] sm:$0xff]
        %v2317 = vld [vmem:[#allocation2 + $0x30] sm:$0xff]
        %v2318 = vld [vmem:[#allocation2 + $0x38] sm:$0xff]
        %v2319 = vld [vmem:[#allocation2 + $0x40] sm:$0xff]
        %v2320 = vld [vmem:[#allocation2 + $0x48] sm:$0xff]
        %v2321 = vld [vmem:[#allocation2 + $0x50] sm:$0xff]
        %v2322 = vld [vmem:[#allocation2 + $0x58] sm:$0xff]
        %v2323 = vld [vmem:[#allocation2 + $0x60] sm:$0xff]
        %v2324 = vld [vmem:[#allocation2 + $0x68] sm:$0xff]
        %v2325 = vld [vmem:[#allocation2 + $0x70] sm:$0xff]
        %v2326 = vld [vmem:[#allocation2 + $0x78] sm:$0xff]
        %v2327 = vld [vmem:[#allocation2 + $0x80] sm:$0xff]
        %v2328 = vld [vmem:[#allocation2 + $0x88] sm:$0xff]
        %v2329 = vld [vmem:[#allocation2 + $0x90] sm:$0xff]
        %v2330 = vld [vmem:[#allocation2 + $0x98] sm:$0xff]
        %v2331 = vld [vmem:[#allocation2 + $0xa0] sm:$0xff]
        %v2332 = vld [vmem:[#allocation2 + $0xa8] sm:$0xff]
        %v2333 = vld [vmem:[#allocation2 + $0xb0] sm:$0xff]
        %v2334 = vld [vmem:[#allocation2 + $0xb8] sm:$0xff]
        %v2335 = vld [vmem:[#allocation2 + $0xc0] sm:$0xff]
        %v2336 = vld [vmem:[#allocation2 + $0xc8] sm:$0xff]
        %v2337 = vld [vmem:[#allocation2 + $0xd0] sm:$0xff]
        %v2338 = vld [vmem:[#allocation2 + $0xd8] sm:$0xff]
        %v2339 = vld [vmem:[#allocation2 + $0xe0] sm:$0xff]
        %v2340 = vld [vmem:[#allocation2 + $0xe8] sm:$0xff]
        %s2341 = scalar_lea.vmem [#allocation6], 384
        %v2342 = vld [vmem:[%s2341] sm:$0xf]
        %v2343 = vld [vmem:[%s2341 + $0x4] sm:$0xf]
        %v2344 = vld [vmem:[%s2341 + $0x8] sm:$0xf]
        %v2345 = vld [vmem:[%s2341 + $0xc] sm:$0xf]
        %v2346 = vld [vmem:[%s2341 + $0x10] sm:$0xf]
        %v2347 = vld [vmem:[%s2341 + $0x14] sm:$0xf]
        %v2348 = vld [vmem:[%s2341 + $0x18] sm:$0xf]
        %v2349 = vld [vmem:[%s2341 + $0x1c] sm:$0xf]
        %v2350 = vld [vmem:[%s2341 + $0x20] sm:$0xf]
        %v2351 = vld [vmem:[%s2341 + $0x24] sm:$0xf]
        %v2352 = vld [vmem:[%s2341 + $0x28] sm:$0xf]
        %v2353 = vld [vmem:[%s2341 + $0x2c] sm:$0xf]
        %v2354 = vld [vmem:[%s2341 + $0x30] sm:$0xf]
        %v2355 = vld [vmem:[%s2341 + $0x34] sm:$0xf]
        %v2356 = vld [vmem:[%s2341 + $0x38] sm:$0xf]
        %v2357 = vld [vmem:[%s2341 + $0x3c] sm:$0xf]
        %v2358 = vld [vmem:[%s2341 + $0x40] sm:$0xf]
        %v2359 = vld [vmem:[%s2341 + $0x44] sm:$0xf]
        %v2360 = vld [vmem:[%s2341 + $0x48] sm:$0xf]
        %v2361 = vld [vmem:[%s2341 + $0x4c] sm:$0xf]
        %v2362 = vld [vmem:[%s2341 + $0x50] sm:$0xf]
        %v2363 = vld [vmem:[%s2341 + $0x54] sm:$0xf]
        %v2364 = vld [vmem:[%s2341 + $0x58] sm:$0xf]
        %v2365 = vld [vmem:[%s2341 + $0x5c] sm:$0xf]
        %v2366 = vld [vmem:[%s2341 + $0x60] sm:$0xf]
        %v2367 = vld [vmem:[%s2341 + $0x64] sm:$0xf]
        %v2368 = vld [vmem:[%s2341 + $0x68] sm:$0xf]
        %v2369 = vld [vmem:[%s2341 + $0x6c] sm:$0xf]
        %v2370 = vld [vmem:[%s2341 + $0x70] sm:$0xf]
        %v2371 = vld [vmem:[%s2341 + $0x74] sm:$0xf]
        %v2372 = vld [vmem:[%s2341 + $0x78] sm:$0xf]
        %v2373 = vld [vmem:[%s2341 + $0x7c] sm:$0xf]
        %v2374 = vld [vmem:[%s2341 + $0x80] sm:$0xf]
        %v2375 = vld [vmem:[%s2341 + $0x84] sm:$0xf]
        %v2376 = vld [vmem:[%s2341 + $0x88] sm:$0xf]
        %v2377 = vld [vmem:[%s2341 + $0x8c] sm:$0xf]
        %v2378 = vld [vmem:[%s2341 + $0x90] sm:$0xf]
        %v2379 = vld [vmem:[%s2341 + $0x94] sm:$0xf]
        %v2380 = vld [vmem:[%s2341 + $0x98] sm:$0xf]
        %v2381 = vld [vmem:[%s2341 + $0x9c] sm:$0xf]
        %v2382 = vld [vmem:[%s2341 + $0xa0] sm:$0xf]
        %v2383 = vld [vmem:[%s2341 + $0xa4] sm:$0xf]
        %v2384 = vld [vmem:[%s2341 + $0xa8] sm:$0xf]
        %v2385 = vld [vmem:[%s2341 + $0xac] sm:$0xf]
        %v2386 = vld [vmem:[%s2341 + $0xb0] sm:$0xf]
        %v2387 = vld [vmem:[%s2341 + $0xb4] sm:$0xf]
        %v2388 = vld [vmem:[%s2341 + $0xb8] sm:$0xf]
        %v2389 = vld [vmem:[%s2341 + $0xbc] sm:$0xf]
        %v2438 = vunpack.c.l.b16 %v2342
        %v2439 = vunpack.c.l.b16 %v2343
        %v2440 = vunpack.c.l.b16 %v2344
        %v2441 = vunpack.c.l.b16 %v2345
        %v2442 = vunpack.c.l.b16 %v2346
        %v2443 = vunpack.c.l.b16 %v2347
        %v2444 = vunpack.c.l.b16 %v2348
        %v2445 = vunpack.c.l.b16 %v2349
        %v2446 = vunpack.c.l.b16 %v2350
        %v2447 = vunpack.c.l.b16 %v2351
        %v2448 = vunpack.c.l.b16 %v2352
        %v2449 = vunpack.c.l.b16 %v2353
        %v2450 = vunpack.c.l.b16 %v2354
        %v2451 = vunpack.c.l.b16 %v2355
        %v2452 = vunpack.c.l.b16 %v2356
        %v2453 = vunpack.c.l.b16 %v2357
        %v2454 = vunpack.c.l.b16 %v2358
        %v2455 = vunpack.c.l.b16 %v2359
        %v2456 = vunpack.c.l.b16 %v2360
        %v2457 = vunpack.c.l.b16 %v2361
        %v2458 = vunpack.c.l.b16 %v2362
        %v2459 = vunpack.c.l.b16 %v2363
        %v2460 = vunpack.c.l.b16 %v2364
        %v2461 = vunpack.c.l.b16 %v2365
        %v2462 = vunpack.c.l.b16 %v2366
        %v2463 = vunpack.c.l.b16 %v2367
        %v2464 = vunpack.c.l.b16 %v2368
        %v2465 = vunpack.c.l.b16 %v2369
        %v2466 = vunpack.c.l.b16 %v2370
        %v2467 = vunpack.c.l.b16 %v2371
        %v2468 = vunpack.c.l.b16 %v2372
        %v2469 = vunpack.c.l.b16 %v2373
        %v2470 = vunpack.c.l.b16 %v2374
        %v2471 = vunpack.c.l.b16 %v2375
        %v2472 = vunpack.c.l.b16 %v2376
        %v2473 = vunpack.c.l.b16 %v2377
        %v2474 = vunpack.c.l.b16 %v2378
        %v2475 = vunpack.c.l.b16 %v2379
        %v2476 = vunpack.c.l.b16 %v2380
        %v2477 = vunpack.c.l.b16 %v2381
        %v2478 = vunpack.c.l.b16 %v2382
        %v2479 = vunpack.c.l.b16 %v2383
        %v2480 = vunpack.c.l.b16 %v2384
        %v2481 = vunpack.c.l.b16 %v2385
        %v2482 = vunpack.c.l.b16 %v2386
        %v2483 = vunpack.c.l.b16 %v2387
        %v2484 = vunpack.c.l.b16 %v2388
        %v2485 = vunpack.c.l.b16 %v2389
        %v2486 = vpack.c.b16 %v2439, %v2438
        %v2487 = vpack.c.b16 %v2441, %v2440
        %v2488 = vpack.c.b16 %v2443, %v2442
        %v2489 = vpack.c.b16 %v2445, %v2444
        %v2490 = vpack.c.b16 %v2447, %v2446
        %v2491 = vpack.c.b16 %v2449, %v2448
        %v2492 = vpack.c.b16 %v2451, %v2450
        %v2493 = vpack.c.b16 %v2453, %v2452
        %v2494 = vpack.c.b16 %v2455, %v2454
        %v2495 = vpack.c.b16 %v2457, %v2456
        %v2496 = vpack.c.b16 %v2459, %v2458
        %v2497 = vpack.c.b16 %v2461, %v2460
        %v2498 = vpack.c.b16 %v2463, %v2462
        %v2499 = vpack.c.b16 %v2465, %v2464
        %v2500 = vpack.c.b16 %v2467, %v2466
        %v2501 = vpack.c.b16 %v2469, %v2468
        %v2502 = vpack.c.b16 %v2471, %v2470
        %v2503 = vpack.c.b16 %v2473, %v2472
        %v2504 = vpack.c.b16 %v2475, %v2474
        %v2505 = vpack.c.b16 %v2477, %v2476
        %v2506 = vpack.c.b16 %v2479, %v2478
        %v2507 = vpack.c.b16 %v2481, %v2480
        %v2508 = vpack.c.b16 %v2483, %v2482
        %v2509 = vpack.c.b16 %v2485, %v2484
        %2534 = vmatprep.subr.bf16.mxu0 0
        %2535 = vmatpush1.bf16.msra.mxu0 %v2486
        %2536 = vmatprep.subr.bf16.mxu0 0
        %2537 = vmatpush1.bf16.msra.mxu0 %v2487
        %2538 = vmatprep.subr.bf16.mxu0 0
        %2539 = vmatpush1.bf16.msra.mxu0 %v2488
        %2540 = vmatprep.subr.bf16.mxu0 0
        %2541 = vmatpush1.bf16.msra.mxu0 %v2489
        %2542 = vmatprep.subr.bf16.mxu0 0
        %2543 = vmatpush1.bf16.msra.mxu0 %v2490
        %2544 = vmatprep.subr.bf16.mxu0 0
        %2545 = vmatpush1.bf16.msra.mxu0 %v2491
        %2546 = vmatprep.subr.bf16.mxu0 0
        %2547 = vmatpush1.bf16.msra.mxu0 %v2492
        %2548 = vmatprep.subr.bf16.mxu0 0
        %2549 = vmatpush1.bf16.msra.mxu0 %v2493
        %2550 = vmatprep.subr.bf16.mxu0 0
        %2551 = vmatpush1.bf16.msra.mxu0 %v2494
        %2552 = vmatprep.subr.bf16.mxu0 0
        %2553 = vmatpush1.bf16.msra.mxu0 %v2495
        %2554 = vmatprep.subr.bf16.mxu0 0
        %2555 = vmatpush1.bf16.msra.mxu0 %v2496
        %2556 = vmatprep.subr.bf16.mxu0 0
        %2557 = vmatpush1.bf16.msra.mxu0 %v2497
        %2558 = vmatprep.subr.bf16.mxu0 0
        %2559 = vmatpush1.bf16.msra.mxu0 %v2498
        %2560 = vmatprep.subr.bf16.mxu0 0
        %2561 = vmatpush1.bf16.msra.mxu0 %v2499
        %2562 = vmatprep.subr.bf16.mxu0 0
        %2563 = vmatpush1.bf16.msra.mxu0 %v2500
        %2564 = vmatprep.subr.bf16.mxu0 0
        %2565 = vmatpush1.bf16.msra.mxu0 %v2501
        %2566 = vmatprep.mubr.bf16.mxu0 %v1132
        %2567 = vmatmul.mubr.bf16.gmra.mrb[0].mxu0 %v1131
        %v2568 = vpop.f32.mrb[0].mxu0
        %v2569 = vadd.f32 0.0, %v2568
        %v2570 = vpop.f32.mrb[0].mxu0
        %v2571 = vpop.f32.mrb[0].mxu0
        %v2572 = vadd.f32 0.0, %v2571
        %v2573 = vpop.f32.mrb[0].mxu0
        %2574 = vmatprep.mubr.bf16.mxu0 %v1135
        %2575 = vmatmul.mubr.bf16.gmra.mrb[0].mxu0 %v1134
        %v2576 = vpop.f32.mrb[0].mxu0
        %v2577 = vadd.f32 0.0, %v2576
        %v2578 = vpop.f32.mrb[0].mxu0
        %v2579 = vpop.f32.mrb[0].mxu0
        %v2580 = vadd.f32 0.0, %v2579
        %v2581 = vpop.f32.mrb[0].mxu0
        %2582 = vmatprep.mubr.bf16.mxu0 %v1138
        %2583 = vmatmul.mubr.bf16.gmra.mrb[0].mxu0 %v1137
        %v2584 = vpop.f32.mrb[0].mxu0
        %v2585 = vadd.f32 0.0, %v2584
        %v2586 = vpop.f32.mrb[0].mxu0
        %v2587 = vpop.f32.mrb[0].mxu0
        %v2588 = vadd.f32 0.0, %v2587
        %v2589 = vpop.f32.mrb[0].mxu0
        %2590 = vmatprep.mubr.bf16.mxu0 %v1141
        %2591 = vmatmul.mubr.bf16.gmra.mrb[0].mxu0 %v1140
        %v2592 = vpop.f32.mrb[0].mxu0
        %v2593 = vadd.f32 0.0, %v2592
        %v2594 = vpop.f32.mrb[0].mxu0
        %v2595 = vpop.f32.mrb[0].mxu0
        %v2596 = vadd.f32 0.0, %v2595
        %v2597 = vpop.f32.mrb[0].mxu0
        %2598 = vmatprep.mubr.bf16.mxu0 %v1144
        %2599 = vmatmul.mubr.bf16.gmra.mrb[0].mxu0 %v1143
        %v2600 = vpop.f32.mrb[0].mxu0
        %v2601 = vadd.f32 0.0, %v2600
        %v2602 = vpop.f32.mrb[0].mxu0
        %v2603 = vpop.f32.mrb[0].mxu0
        %v2604 = vadd.f32 0.0, %v2603
        %v2605 = vpop.f32.mrb[0].mxu0
        %2606 = vmatprep.mubr.bf16.mxu0 %v1147
        %2607 = vmatmul.mubr.bf16.gmra.mrb[0].mxu0 %v1146
        %v2608 = vpop.f32.mrb[0].mxu0
        %v2609 = vadd.f32 0.0, %v2608
        %v2610 = vpop.f32.mrb[0].mxu0
        %v2611 = vpop.f32.mrb[0].mxu0
        %v2612 = vadd.f32 0.0, %v2611
        %v2613 = vpop.f32.mrb[0].mxu0
        %2614 = vmatprep.mubr.bf16.mxu0 %v1150
        %2615 = vmatmul.mubr.bf16.gmra.mrb[0].mxu0 %v1149
        %v2616 = vpop.f32.mrb[0].mxu0
        %v2617 = vadd.f32 0.0, %v2616
        %v2618 = vpop.f32.mrb[0].mxu0
        %v2619 = vpop.f32.mrb[0].mxu0
        %v2620 = vadd.f32 0.0, %v2619
        %v2621 = vpop.f32.mrb[0].mxu0
        %2622 = vmatprep.mubr.bf16.mxu0 %v1153
        %2623 = vmatmul.mubr.bf16.gmra.mrb[0].mxu0 %v1152
        %v2624 = vpop.f32.mrb[0].mxu0
        %v2625 = vadd.f32 0.0, %v2624
        %v2626 = vpop.f32.mrb[0].mxu0
        %v2627 = vpop.f32.mrb[0].mxu0
        %v2628 = vadd.f32 0.0, %v2627
        %v2629 = vpop.f32.mrb[0].mxu0
        %2630 = vmatprep.mubr.bf16.mxu0 %v1156
        %2631 = vmatmul.mubr.bf16.gmra.mrb[0].mxu0 %v1155
        %v2632 = vpop.f32.mrb[0].mxu0
        %v2633 = vadd.f32 0.0, %v2632
        %v2634 = vpop.f32.mrb[0].mxu0
        %v2635 = vpop.f32.mrb[0].mxu0
        %v2636 = vadd.f32 0.0, %v2635
        %v2637 = vpop.f32.mrb[0].mxu0
        %2638 = vmatprep.mubr.bf16.mxu0 %v1159
        %2639 = vmatmul.mubr.bf16.gmra.mrb[0].mxu0 %v1158
        %v2640 = vpop.f32.mrb[0].mxu0
        %v2641 = vadd.f32 0.0, %v2640
        %v2642 = vpop.f32.mrb[0].mxu0
        %v2643 = vpop.f32.mrb[0].mxu0
        %v2644 = vadd.f32 0.0, %v2643
        %v2645 = vpop.f32.mrb[0].mxu0
        %2646 = vmatprep.mubr.bf16.mxu0 %v1162
        %2647 = vmatmul.mubr.bf16.gmra.mrb[0].mxu0 %v1161
        %v2648 = vpop.f32.mrb[0].mxu0
        %v2649 = vadd.f32 0.0, %v2648
        %v2650 = vpop.f32.mrb[0].mxu0
        %v2651 = vpop.f32.mrb[0].mxu0
        %v2652 = vadd.f32 0.0, %v2651
        %v2653 = vpop.f32.mrb[0].mxu0
        %2654 = vmatprep.mubr.bf16.mxu0 %v1165
        %2655 = vmatmul.mubr.bf16.gmra.mrb[0].mxu0 %v1164
        %v2656 = vpop.f32.mrb[0].mxu0
        %v2657 = vadd.f32 0.0, %v2656
        %v2658 = vpop.f32.mrb[0].mxu0
        %v2659 = vpop.f32.mrb[0].mxu0
        %v2660 = vadd.f32 0.0, %v2659
        %v2661 = vpop.f32.mrb[0].mxu0
        %2662 = vmatprep.mubr.bf16.mxu0 %v1168
        %2663 = vmatmul.mubr.bf16.gmra.mrb[0].mxu0 %v1167
        %v2664 = vpop.f32.mrb[0].mxu0
        %v2665 = vadd.f32 0.0, %v2664
        %v2666 = vpop.f32.mrb[0].mxu0
        %v2667 = vpop.f32.mrb[0].mxu0
        %v2668 = vadd.f32 0.0, %v2667
        %v2669 = vpop.f32.mrb[0].mxu0
        %2670 = vmatprep.mubr.bf16.mxu0 %v1171
        %2671 = vmatmul.mubr.bf16.gmra.mrb[0].mxu0 %v1170
        %v2672 = vpop.f32.mrb[0].mxu0
        %v2673 = vadd.f32 0.0, %v2672
        %v2674 = vpop.f32.mrb[0].mxu0
        %v2675 = vpop.f32.mrb[0].mxu0
        %v2676 = vadd.f32 0.0, %v2675
        %v2677 = vpop.f32.mrb[0].mxu0
        %2678 = vmatprep.mubr.bf16.mxu0 %v1174
        %2679 = vmatmul.mubr.bf16.gmra.mrb[0].mxu0 %v1173
        %v2680 = vpop.f32.mrb[0].mxu0
        %v2681 = vadd.f32 0.0, %v2680
        %v2682 = vpop.f32.mrb[0].mxu0
        %v2683 = vpop.f32.mrb[0].mxu0
        %v2684 = vadd.f32 0.0, %v2683
        %v2685 = vpop.f32.mrb[0].mxu0
        %2686 = vdwg.mxu0
        %2687 = vmatprep.subr.bf16.mxu0 0
        %2688 = vmatpush1.bf16.msra.mxu0 %v2502
        %2689 = vmatprep.subr.bf16.mxu0 0
        %2690 = vmatpush1.bf16.msra.mxu0 %v2503
        %2691 = vmatprep.subr.bf16.mxu0 0
        %2692 = vmatpush1.bf16.msra.mxu0 %v2504
        %2693 = vmatprep.subr.bf16.mxu0 0
        %2694 = vmatpush1.bf16.msra.mxu0 %v2505
        %2695 = vmatprep.subr.bf16.mxu0 0
        %2696 = vmatpush1.bf16.msra.mxu0 %v2506
        %2697 = vmatprep.subr.bf16.mxu0 0
        %2698 = vmatpush1.bf16.msra.mxu0 %v2507
        %2699 = vmatprep.subr.bf16.mxu0 0
        %2700 = vmatpush1.bf16.msra.mxu0 %v2508
        %2701 = vmatprep.subr.bf16.mxu0 0
        %2702 = vmatpush1.bf16.msra.mxu0 %v2509
        %2703 = vmatprep.subr.bf16.mxu0 0
        %2704 = vmatpush1.bf16.msra.mxu0 0
        %2705 = vmatprep.subr.bf16.mxu0 0
        %2706 = vmatpush1.bf16.msra.mxu0 0
        %2707 = vmatprep.subr.bf16.mxu0 0
        %2708 = vmatpush1.bf16.msra.mxu0 0
        %2709 = vmatprep.subr.bf16.mxu0 0
        %2710 = vmatpush1.bf16.msra.mxu0 0
        %2711 = vmatprep.subr.bf16.mxu0 0
        %2712 = vmatpush1.bf16.msra.mxu0 0
        %2713 = vmatprep.subr.bf16.mxu0 0
        %2714 = vmatpush1.bf16.msra.mxu0 0
        %2715 = vmatprep.subr.bf16.mxu0 0
        %2716 = vmatpush1.bf16.msra.mxu0 0
        %2717 = vmatprep.subr.bf16.mxu0 0
        %2718 = vmatpush1.bf16.msra.mxu0 0
        %2719 = vmatprep.mubr.bf16.mxu0 0
        %2720 = vmatmul.mubr.bf16.gmra.mrb[0].mxu0 %v1133
        %v2721 = vpop.f32.mrb[0].mxu0
        %v2722 = vadd.f32 %v2569, %v2721
        %v2723 = vpop.f32.mrb[0].mxu0
        %v2724 = vpop.f32.mrb[0].mxu0
        %v2725 = vadd.f32 %v2572, %v2724
        %v2726 = vpop.f32.mrb[0].mxu0
        %2727 = vmatprep.mubr.bf16.mxu0 0
        %2728 = vmatmul.mubr.bf16.gmra.mrb[0].mxu0 %v1136
        %v2729 = vpop.f32.mrb[0].mxu0
        %v2730 = vadd.f32 %v2577, %v2729
        %v2731 = vpop.f32.mrb[0].mxu0
        %v2732 = vpop.f32.mrb[0].mxu0
        %v2733 = vadd.f32 %v2580, %v2732
        %v2734 = vpop.f32.mrb[0].mxu0
        %2735 = vmatprep.mubr.bf16.mxu0 0
        %2736 = vmatmul.mubr.bf16.gmra.mrb[0].mxu0 %v1139
        %v2737 = vpop.f32.mrb[0].mxu0
        %v2738 = vadd.f32 %v2585, %v2737
        %v2739 = vpop.f32.mrb[0].mxu0
        %v2740 = vpop.f32.mrb[0].mxu0
        %v2741 = vadd.f32 %v2588, %v2740
        %v2742 = vpop.f32.mrb[0].mxu0
        %2743 = vmatprep.mubr.bf16.mxu0 0
        %2744 = vmatmul.mubr.bf16.gmra.mrb[0].mxu0 %v1142
        %v2745 = vpop.f32.mrb[0].mxu0
        %v2746 = vadd.f32 %v2593, %v2745
        %v2747 = vpop.f32.mrb[0].mxu0
        %v2748 = vpop.f32.mrb[0].mxu0
        %v2749 = vadd.f32 %v2596, %v2748
        %v2750 = vpop.f32.mrb[0].mxu0
        %2751 = vmatprep.mubr.bf16.mxu0 0
        %2752 = vmatmul.mubr.bf16.gmra.mrb[0].mxu0 %v1145
        %v2753 = vpop.f32.mrb[0].mxu0
        %v2754 = vadd.f32 %v2601, %v2753
        %v2755 = vpop.f32.mrb[0].mxu0
        %v2756 = vpop.f32.mrb[0].mxu0
        %v2757 = vadd.f32 %v2604, %v2756
        %v2758 = vpop.f32.mrb[0].mxu0
        %2759 = vmatprep.mubr.bf16.mxu0 0
        %2760 = vmatmul.mubr.bf16.gmra.mrb[0].mxu0 %v1148
        %v2761 = vpop.f32.mrb[0].mxu0
        %v2762 = vadd.f32 %v2609, %v2761
        %v2763 = vpop.f32.mrb[0].mxu0
        %v2764 = vpop.f32.mrb[0].mxu0
        %v2765 = vadd.f32 %v2612, %v2764
        %v2766 = vpop.f32.mrb[0].mxu0
        %2767 = vmatprep.mubr.bf16.mxu0 0
        %2768 = vmatmul.mubr.bf16.gmra.mrb[0].mxu0 %v1151
        %v2769 = vpop.f32.mrb[0].mxu0
        %v2770 = vadd.f32 %v2617, %v2769
        %v2771 = vpop.f32.mrb[0].mxu0
        %v2772 = vpop.f32.mrb[0].mxu0
        %v2773 = vadd.f32 %v2620, %v2772
        %v2774 = vpop.f32.mrb[0].mxu0
        %2775 = vmatprep.mubr.bf16.mxu0 0
        %2776 = vmatmul.mubr.bf16.gmra.mrb[0].mxu0 %v1154
        %v2777 = vpop.f32.mrb[0].mxu0
        %v2778 = vadd.f32 %v2625, %v2777
        %v2779 = vpop.f32.mrb[0].mxu0
        %v2780 = vpop.f32.mrb[0].mxu0
        %v2781 = vadd.f32 %v2628, %v2780
        %v2782 = vpop.f32.mrb[0].mxu0
        %2783 = vmatprep.mubr.bf16.mxu0 0
        %2784 = vmatmul.mubr.bf16.gmra.mrb[0].mxu0 %v1157
        %v2785 = vpop.f32.mrb[0].mxu0
        %v2786 = vadd.f32 %v2633, %v2785
        %v2787 = vpop.f32.mrb[0].mxu0
        %v2788 = vpop.f32.mrb[0].mxu0
        %v2789 = vadd.f32 %v2636, %v2788
        %v2790 = vpop.f32.mrb[0].mxu0
        %2791 = vmatprep.mubr.bf16.mxu0 0
        %2792 = vmatmul.mubr.bf16.gmra.mrb[0].mxu0 %v1160
        %v2793 = vpop.f32.mrb[0].mxu0
        %v2794 = vadd.f32 %v2641, %v2793
        %v2795 = vpop.f32.mrb[0].mxu0
        %v2796 = vpop.f32.mrb[0].mxu0
        %v2797 = vadd.f32 %v2644, %v2796
        %v2798 = vpop.f32.mrb[0].mxu0
        %2799 = vmatprep.mubr.bf16.mxu0 0
        %2800 = vmatmul.mubr.bf16.gmra.mrb[0].mxu0 %v1163
        %v2801 = vpop.f32.mrb[0].mxu0
        %v2802 = vadd.f32 %v2649, %v2801
        %v2803 = vpop.f32.mrb[0].mxu0
        %v2804 = vpop.f32.mrb[0].mxu0
        %v2805 = vadd.f32 %v2652, %v2804
        %v2806 = vpop.f32.mrb[0].mxu0
        %2807 = vmatprep.mubr.bf16.mxu0 0
        %2808 = vmatmul.mubr.bf16.gmra.mrb[0].mxu0 %v1166
        %v2809 = vpop.f32.mrb[0].mxu0
        %v2810 = vadd.f32 %v2657, %v2809
        %v2811 = vpop.f32.mrb[0].mxu0
        %v2812 = vpop.f32.mrb[0].mxu0
        %v2813 = vadd.f32 %v2660, %v2812
        %v2814 = vpop.f32.mrb[0].mxu0
        %2815 = vmatprep.mubr.bf16.mxu0 0
        %2816 = vmatmul.mubr.bf16.gmra.mrb[0].mxu0 %v1169
        %v2817 = vpop.f32.mrb[0].mxu0
        %v2818 = vadd.f32 %v2665, %v2817
        %v2819 = vpop.f32.mrb[0].mxu0
        %v2820 = vpop.f32.mrb[0].mxu0
        %v2821 = vadd.f32 %v2668, %v2820
        %v2822 = vpop.f32.mrb[0].mxu0
        %2823 = vmatprep.mubr.bf16.mxu0 0
        %2824 = vmatmul.mubr.bf16.gmra.mrb[0].mxu0 %v1172
        %v2825 = vpop.f32.mrb[0].mxu0
        %v2826 = vadd.f32 %v2673, %v2825
        %v2827 = vpop.f32.mrb[0].mxu0
        %v2828 = vpop.f32.mrb[0].mxu0
        %v2829 = vadd.f32 %v2676, %v2828
        %v2830 = vpop.f32.mrb[0].mxu0
        %2831 = vmatprep.mubr.bf16.mxu0 0
        %2832 = vmatmul.mubr.bf16.gmra.mrb[0].mxu0 %v1175
        %v2833 = vpop.f32.mrb[0].mxu0
        %v2834 = vadd.f32 %v2681, %v2833
        %v2835 = vpop.f32.mrb[0].mxu0
        %v2836 = vpop.f32.mrb[0].mxu0
        %v2837 = vadd.f32 %v2684, %v2836
        %v2838 = vpop.f32.mrb[0].mxu0
        %2839 = vdwg.mxu0
        %v2840 = vadd.f32 %v2311, %v2722
        %v2841 = vadd.f32 %v2312, %v2725
        %v2842 = vadd.f32 %v2313, %v2730
        %v2843 = vadd.f32 %v2314, %v2733
        %v2844 = vadd.f32 %v2315, %v2738
        %v2845 = vadd.f32 %v2316, %v2741
        %v2846 = vadd.f32 %v2317, %v2746
        %v2847 = vadd.f32 %v2318, %v2749
        %v2848 = vadd.f32 %v2319, %v2754
        %v2849 = vadd.f32 %v2320, %v2757
        %v2850 = vadd.f32 %v2321, %v2762
        %v2851 = vadd.f32 %v2322, %v2765
        %v2852 = vadd.f32 %v2323, %v2770
        %v2853 = vadd.f32 %v2324, %v2773
        %v2854 = vadd.f32 %v2325, %v2778
        %v2855 = vadd.f32 %v2326, %v2781
        %v2856 = vadd.f32 %v2327, %v2786
        %v2857 = vadd.f32 %v2328, %v2789
        %v2858 = vadd.f32 %v2329, %v2794
        %v2859 = vadd.f32 %v2330, %v2797
        %v2860 = vadd.f32 %v2331, %v2802
        %v2861 = vadd.f32 %v2332, %v2805
        %v2862 = vadd.f32 %v2333, %v2810
        %v2863 = vadd.f32 %v2334, %v2813
        %v2864 = vadd.f32 %v2335, %v2818
        %v2865 = vadd.f32 %v2336, %v2821
        %v2866 = vadd.f32 %v2337, %v2826
        %v2867 = vadd.f32 %v2338, %v2829
        %v2868 = vadd.f32 %v2339, %v2834
        %v2869 = vadd.f32 %v2340, %v2837
        %2870 = vst [vmem:[#allocation2] sm:$0xff] %v2840
        %2871 = vst [vmem:[#allocation2 + $0x8] sm:$0xff] %v2841
        %2872 = vst [vmem:[#allocation2 + $0x10] sm:$0xff] %v2842
        %2873 = vst [vmem:[#allocation2 + $0x18] sm:$0xff] %v2843
        %2874 = vst [vmem:[#allocation2 + $0x20] sm:$0xff] %v2844
        %2875 = vst [vmem:[#allocation2 + $0x28] sm:$0xff] %v2845
        %2876 = vst [vmem:[#allocation2 + $0x30] sm:$0xff] %v2846
        %2877 = vst [vmem:[#allocation2 + $0x38] sm:$0xff] %v2847
        %2878 = vst [vmem:[#allocation2 + $0x40] sm:$0xff] %v2848
        %2879 = vst [vmem:[#allocation2 + $0x48] sm:$0xff] %v2849
        %2880 = vst [vmem:[#allocation2 + $0x50] sm:$0xff] %v2850
        %2881 = vst [vmem:[#allocation2 + $0x58] sm:$0xff] %v2851
        %2882 = vst [vmem:[#allocation2 + $0x60] sm:$0xff] %v2852
        %2883 = vst [vmem:[#allocation2 + $0x68] sm:$0xff] %v2853
        %2884 = vst [vmem:[#allocation2 + $0x70] sm:$0xff] %v2854
        %2885 = vst [vmem:[#allocation2 + $0x78] sm:$0xff] %v2855
        %2886 = vst [vmem:[#allocation2 + $0x80] sm:$0xff] %v2856
        %2887 = vst [vmem:[#allocation2 + $0x88] sm:$0xff] %v2857
        %2888 = vst [vmem:[#allocation2 + $0x90] sm:$0xff] %v2858
        %2889 = vst [vmem:[#allocation2 + $0x98] sm:$0xff] %v2859
        %2890 = vst [vmem:[#allocation2 + $0xa0] sm:$0xff] %v2860
        %2891 = vst [vmem:[#allocation2 + $0xa8] sm:$0xff] %v2861
        %2892 = vst [vmem:[#allocation2 + $0xb0] sm:$0xff] %v2862
        %2893 = vst [vmem:[#allocation2 + $0xb8] sm:$0xff] %v2863
        %2894 = vst [vmem:[#allocation2 + $0xc0] sm:$0xff] %v2864
        %2895 = vst [vmem:[#allocation2 + $0xc8] sm:$0xff] %v2865
        %2896 = vst [vmem:[#allocation2 + $0xd0] sm:$0xff] %v2866
        %2897 = vst [vmem:[#allocation2 + $0xd8] sm:$0xff] %v2867
        %2898 = vst [vmem:[#allocation2 + $0xe0] sm:$0xff] %v2868
        %2899 = vst [vmem:[#allocation2 + $0xe8] sm:$0xff] %v2869
        %v2900 = vld [vmem:[#allocation2] sm:$0xff]
        %v2901 = vld [vmem:[#allocation2 + $0x8] sm:$0xff]
        %v2902 = vld [vmem:[#allocation2 + $0x10] sm:$0xff]
        %v2903 = vld [vmem:[#allocation2 + $0x18] sm:$0xff]
        %v2904 = vld [vmem:[#allocation2 + $0x20] sm:$0xff]
        %v2905 = vld [vmem:[#allocation2 + $0x28] sm:$0xff]
        %v2906 = vld [vmem:[#allocation2 + $0x30] sm:$0xff]
        %v2907 = vld [vmem:[#allocation2 + $0x38] sm:$0xff]
        %v2908 = vld [vmem:[#allocation2 + $0x40] sm:$0xff]
        %v2909 = vld [vmem:[#allocation2 + $0x48] sm:$0xff]
        %v2910 = vld [vmem:[#allocation2 + $0x50] sm:$0xff]
        %v2911 = vld [vmem:[#allocation2 + $0x58] sm:$0xff]
        %v2912 = vld [vmem:[#allocation2 + $0x60] sm:$0xff]
        %v2913 = vld [vmem:[#allocation2 + $0x68] sm:$0xff]
        %v2914 = vld [vmem:[#allocation2 + $0x70] sm:$0xff]
        %v2915 = vld [vmem:[#allocation2 + $0x78] sm:$0xff]
        %v2916 = vld [vmem:[#allocation2 + $0x80] sm:$0xff]
        %v2917 = vld [vmem:[#allocation2 + $0x88] sm:$0xff]
        %v2918 = vld [vmem:[#allocation2 + $0x90] sm:$0xff]
        %v2919 = vld [vmem:[#allocation2 + $0x98] sm:$0xff]
        %v2920 = vld [vmem:[#allocation2 + $0xa0] sm:$0xff]
        %v2921 = vld [vmem:[#allocation2 + $0xa8] sm:$0xff]
        %v2922 = vld [vmem:[#allocation2 + $0xb0] sm:$0xff]
        %v2923 = vld [vmem:[#allocation2 + $0xb8] sm:$0xff]
        %v2924 = vld [vmem:[#allocation2 + $0xc0] sm:$0xff]
        %v2925 = vld [vmem:[#allocation2 + $0xc8] sm:$0xff]
        %v2926 = vld [vmem:[#allocation2 + $0xd0] sm:$0xff]
        %v2927 = vld [vmem:[#allocation2 + $0xd8] sm:$0xff]
        %v2928 = vld [vmem:[#allocation2 + $0xe0] sm:$0xff]
        %v2929 = vld [vmem:[#allocation2 + $0xe8] sm:$0xff]
        %v2930 = vld [vmem:[#allocation2 + $0xf0] sm:$0xff]
        %v2931 = vld [vmem:[#allocation2 + $0xf8] sm:$0xff]
        %v2932 = vld [vmem:[%s6] sm:$0x1]
        %v2934 = vlaneseq
        %v2935 = vshrl.u32 %v2934, 7
        %v2936 = vsub.s32 0, %v2935
        %v2937 = vrot.slane %v2932, %v2936
        %v2939 = vmul.f32 %v2900, %v2937
        %v2940 = vmul.f32 %v2901, %v2937
        %v2941 = vmul.f32 %v2902, %v2937
        %v2942 = vmul.f32 %v2903, %v2937
        %v2943 = vmul.f32 %v2904, %v2937
        %v2944 = vmul.f32 %v2905, %v2937
        %v2945 = vmul.f32 %v2906, %v2937
        %v2946 = vmul.f32 %v2907, %v2937
        %v2947 = vmul.f32 %v2908, %v2937
        %v2948 = vmul.f32 %v2909, %v2937
        %v2949 = vmul.f32 %v2910, %v2937
        %v2950 = vmul.f32 %v2911, %v2937
        %v2951 = vmul.f32 %v2912, %v2937
        %v2952 = vmul.f32 %v2913, %v2937
        %v2953 = vmul.f32 %v2914, %v2937
        %v2954 = vmul.f32 %v2915, %v2937
        %v2955 = vmul.f32 %v2916, %v2937
        %v2956 = vmul.f32 %v2917, %v2937
        %v2957 = vmul.f32 %v2918, %v2937
        %v2958 = vmul.f32 %v2919, %v2937
        %v2959 = vmul.f32 %v2920, %v2937
        %v2960 = vmul.f32 %v2921, %v2937
        %v2961 = vmul.f32 %v2922, %v2937
        %v2962 = vmul.f32 %v2923, %v2937
        %v2963 = vmul.f32 %v2924, %v2937
        %v2964 = vmul.f32 %v2925, %v2937
        %v2965 = vmul.f32 %v2926, %v2937
        %v2966 = vmul.f32 %v2927, %v2937
        %v2967 = vmul.f32 %v2928, %v2937
        %v2968 = vmul.f32 %v2929, %v2937
        %v2969 = vmul.f32 %v2930, %v2937
        %v2970 = vmul.f32 %v2931, %v2937
        %v2971 = vld [vmem:[%s7] sm:$0x1]
        %v2973 = vlaneseq
        %v2974 = vshrl.u32 %v2973, 7
        %v2975 = vsub.s32 0, %v2974
        %v2976 = vrot.slane %v2971, %v2975
        %v2978 = vadd.f32 %v2939, %v2976
        %v2979 = vadd.f32 %v2940, %v2976
        %v2980 = vadd.f32 %v2941, %v2976
        %v2981 = vadd.f32 %v2942, %v2976
        %v2982 = vadd.f32 %v2943, %v2976
        %v2983 = vadd.f32 %v2944, %v2976
        %v2984 = vadd.f32 %v2945, %v2976
        %v2985 = vadd.f32 %v2946, %v2976
        %v2986 = vadd.f32 %v2947, %v2976
        %v2987 = vadd.f32 %v2948, %v2976
        %v2988 = vadd.f32 %v2949, %v2976
        %v2989 = vadd.f32 %v2950, %v2976
        %v2990 = vadd.f32 %v2951, %v2976
        %v2991 = vadd.f32 %v2952, %v2976
        %v2992 = vadd.f32 %v2953, %v2976
        %v2993 = vadd.f32 %v2954, %v2976
        %v2994 = vadd.f32 %v2955, %v2976
        %v2995 = vadd.f32 %v2956, %v2976
        %v2996 = vadd.f32 %v2957, %v2976
        %v2997 = vadd.f32 %v2958, %v2976
        %v2998 = vadd.f32 %v2959, %v2976
        %v2999 = vadd.f32 %v2960, %v2976
        %v3000 = vadd.f32 %v2961, %v2976
        %v3001 = vadd.f32 %v2962, %v2976
        %v3002 = vadd.f32 %v2963, %v2976
        %v3003 = vadd.f32 %v2964, %v2976
        %v3004 = vadd.f32 %v2965, %v2976
        %v3005 = vadd.f32 %v2966, %v2976
        %v3006 = vadd.f32 %v2967, %v2976
        %v3007 = vadd.f32 %v2968, %v2976
        %v3008 = vadd.f32 %v2969, %v2976
        %v3009 = vadd.f32 %v2970, %v2976
        %v3010 = vmax.f32 %v2978, 0.0
        %v3011 = vmax.f32 %v2979, 0.0
        %v3012 = vmax.f32 %v2980, 0.0
        %v3013 = vmax.f32 %v2981, 0.0
        %v3014 = vmax.f32 %v2982, 0.0
        %v3015 = vmax.f32 %v2983, 0.0
        %v3016 = vmax.f32 %v2984, 0.0
        %v3017 = vmax.f32 %v2985, 0.0
        %v3018 = vmax.f32 %v2986, 0.0
        %v3019 = vmax.f32 %v2987, 0.0
        %v3020 = vmax.f32 %v2988, 0.0
        %v3021 = vmax.f32 %v2989, 0.0
        %v3022 = vmax.f32 %v2990, 0.0
        %v3023 = vmax.f32 %v2991, 0.0
        %v3024 = vmax.f32 %v2992, 0.0
        %v3025 = vmax.f32 %v2993, 0.0
        %v3026 = vmax.f32 %v2994, 0.0
        %v3027 = vmax.f32 %v2995, 0.0
        %v3028 = vmax.f32 %v2996, 0.0
        %v3029 = vmax.f32 %v2997, 0.0
        %v3030 = vmax.f32 %v2998, 0.0
        %v3031 = vmax.f32 %v2999, 0.0
        %v3032 = vmax.f32 %v3000, 0.0
        %v3033 = vmax.f32 %v3001, 0.0
        %v3034 = vmax.f32 %v3002, 0.0
        %v3035 = vmax.f32 %v3003, 0.0
        %v3036 = vmax.f32 %v3004, 0.0
        %v3037 = vmax.f32 %v3005, 0.0
        %v3038 = vmax.f32 %v3006, 0.0
        %v3039 = vmax.f32 %v3007, 0.0
        %v3040 = vmax.f32 %v3008, 0.0
        %v3041 = vmax.f32 %v3009, 0.0
        %v3042 = vpack.c.bf16 %v3011, %v3010
        %v3043 = vpack.c.bf16 %v3013, %v3012
        %v3044 = vpack.c.bf16 %v3015, %v3014
        %v3045 = vpack.c.bf16 %v3017, %v3016
        %v3046 = vpack.c.bf16 %v3019, %v3018
        %v3047 = vpack.c.bf16 %v3021, %v3020
        %v3048 = vpack.c.bf16 %v3023, %v3022
        %v3049 = vpack.c.bf16 %v3025, %v3024
        %v3050 = vpack.c.bf16 %v3027, %v3026
        %v3051 = vpack.c.bf16 %v3029, %v3028
        %v3052 = vpack.c.bf16 %v3031, %v3030
        %v3053 = vpack.c.bf16 %v3033, %v3032
        %v3054 = vpack.c.bf16 %v3035, %v3034
        %v3055 = vpack.c.bf16 %v3037, %v3036
        %v3056 = vpack.c.bf16 %v3039, %v3038
        %v3057 = vpack.c.bf16 %v3041, %v3040
        %v3058 = vld [vmem:[%s3] sm:$0xf]
        %v3059 = vld [vmem:[%s3 + $0x4] sm:$0xf]
        %v3060 = vld [vmem:[%s3 + $0x8] sm:$0xf]
        %v3061 = vld [vmem:[%s3 + $0xc] sm:$0xf]
        %v3062 = vld [vmem:[%s3 + $0x10] sm:$0xf]
        %v3063 = vld [vmem:[%s3 + $0x14] sm:$0xf]
        %v3064 = vld [vmem:[%s3 + $0x18] sm:$0xf]
        %v3065 = vld [vmem:[%s3 + $0x1c] sm:$0xf]
        %v3066 = vld [vmem:[%s3 + $0x20] sm:$0xf]
        %v3067 = vld [vmem:[%s3 + $0x24] sm:$0xf]
        %v3068 = vld [vmem:[%s3 + $0x28] sm:$0xf]
        %v3069 = vld [vmem:[%s3 + $0x2c] sm:$0xf]
        %v3070 = vld [vmem:[%s3 + $0x30] sm:$0xf]
        %v3071 = vld [vmem:[%s3 + $0x34] sm:$0xf]
        %v3072 = vld [vmem:[%s3 + $0x38] sm:$0xf]
        %v3073 = vld [vmem:[%s3 + $0x3c] sm:$0xf]
        %v3090 = vunpack.c.l.b16 %v3058
        %v3091 = vunpack.c.l.b16 %v3059
        %v3092 = vunpack.c.l.b16 %v3060
        %v3093 = vunpack.c.l.b16 %v3061
        %v3094 = vunpack.c.l.b16 %v3062
        %v3095 = vunpack.c.l.b16 %v3063
        %v3096 = vunpack.c.l.b16 %v3064
        %v3097 = vunpack.c.l.b16 %v3065
        %v3098 = vunpack.c.l.b16 %v3066
        %v3099 = vunpack.c.l.b16 %v3067
        %v3100 = vunpack.c.l.b16 %v3068
        %v3101 = vunpack.c.l.b16 %v3069
        %v3102 = vunpack.c.l.b16 %v3070
        %v3103 = vunpack.c.l.b16 %v3071
        %v3104 = vunpack.c.l.b16 %v3072
        %v3105 = vunpack.c.l.b16 %v3073
        %v3106 = vpack.c.b16 %v3091, %v3090
        %v3107 = vpack.c.b16 %v3093, %v3092
        %v3108 = vpack.c.b16 %v3095, %v3094
        %v3109 = vpack.c.b16 %v3097, %v3096
        %v3110 = vpack.c.b16 %v3099, %v3098
        %v3111 = vpack.c.b16 %v3101, %v3100
        %v3112 = vpack.c.b16 %v3103, %v3102
        %v3113 = vpack.c.b16 %v3105, %v3104
        %3122 = vmatprep.subr.bf16.mxu0 0
        %3123 = vmatpush1.bf16.msra.mxu0 %v3106
        %3124 = vmatprep.subr.bf16.mxu0 0
        %3125 = vmatpush1.bf16.msra.mxu0 %v3107
        %3126 = vmatprep.subr.bf16.mxu0 0
        %3127 = vmatpush1.bf16.msra.mxu0 %v3108
        %3128 = vmatprep.subr.bf16.mxu0 0
        %3129 = vmatpush1.bf16.msra.mxu0 %v3109
        %3130 = vmatprep.subr.bf16.mxu0 0
        %3131 = vmatpush1.bf16.msra.mxu0 %v3110
        %3132 = vmatprep.subr.bf16.mxu0 0
        %3133 = vmatpush1.bf16.msra.mxu0 %v3111
        %3134 = vmatprep.subr.bf16.mxu0 0
        %3135 = vmatpush1.bf16.msra.mxu0 %v3112
        %3136 = vmatprep.subr.bf16.mxu0 0
        %3137 = vmatpush1.bf16.msra.mxu0 %v3113
        %3138 = vmatprep.subr.bf16.mxu0 0
        %3139 = vmatpush1.bf16.msra.mxu0 0
        %3140 = vmatprep.subr.bf16.mxu0 0
        %3141 = vmatpush1.bf16.msra.mxu0 0
        %3142 = vmatprep.subr.bf16.mxu0 0
        %3143 = vmatpush1.bf16.msra.mxu0 0
        %3144 = vmatprep.subr.bf16.mxu0 0
        %3145 = vmatpush1.bf16.msra.mxu0 0
        %3146 = vmatprep.subr.bf16.mxu0 0
        %3147 = vmatpush1.bf16.msra.mxu0 0
        %3148 = vmatprep.subr.bf16.mxu0 0
        %3149 = vmatpush1.bf16.msra.mxu0 0
        %3150 = vmatprep.subr.bf16.mxu0 0
        %3151 = vmatpush1.bf16.msra.mxu0 0
        %3152 = vmatprep.subr.bf16.mxu0 0
        %3153 = vmatpush1.bf16.msra.mxu0 0
        %3154 = vmatprep.mubr.bf16.mxu0 0
        %3155 = vmatmul.mubr.bf16.gmra.mrb[0].mxu0 %v3042
        %v3156 = vpop.f32.mrb[0].mxu0
        %v3157 = vadd.f32 0.0, %v3156
        %v3158 = vpop.f32.mrb[0].mxu0
        %v3159 = vpop.f32.mrb[0].mxu0
        %v3160 = vadd.f32 0.0, %v3159
        %v3161 = vpop.f32.mrb[0].mxu0
        %3162 = vmatprep.mubr.bf16.mxu0 0
        %3163 = vmatmul.mubr.bf16.gmra.mrb[0].mxu0 %v3043
        %v3164 = vpop.f32.mrb[0].mxu0
        %v3165 = vadd.f32 0.0, %v3164
        %v3166 = vpop.f32.mrb[0].mxu0
        %v3167 = vpop.f32.mrb[0].mxu0
        %v3168 = vadd.f32 0.0, %v3167
        %v3169 = vpop.f32.mrb[0].mxu0
        %3170 = vmatprep.mubr.bf16.mxu0 0
        %3171 = vmatmul.mubr.bf16.gmra.mrb[0].mxu0 %v3044
        %v3172 = vpop.f32.mrb[0].mxu0
        %v3173 = vadd.f32 0.0, %v3172
        %v3174 = vpop.f32.mrb[0].mxu0
        %v3175 = vpop.f32.mrb[0].mxu0
        %v3176 = vadd.f32 0.0, %v3175
        %v3177 = vpop.f32.mrb[0].mxu0
        %3178 = vmatprep.mubr.bf16.mxu0 0
        %3179 = vmatmul.mubr.bf16.gmra.mrb[0].mxu0 %v3045
        %v3180 = vpop.f32.mrb[0].mxu0
        %v3181 = vadd.f32 0.0, %v3180
        %v3182 = vpop.f32.mrb[0].mxu0
        %v3183 = vpop.f32.mrb[0].mxu0
        %v3184 = vadd.f32 0.0, %v3183
        %v3185 = vpop.f32.mrb[0].mxu0
        %3186 = vmatprep.mubr.bf16.mxu0 0
        %3187 = vmatmul.mubr.bf16.gmra.mrb[0].mxu0 %v3046
        %v3188 = vpop.f32.mrb[0].mxu0
        %v3189 = vadd.f32 0.0, %v3188
        %v3190 = vpop.f32.mrb[0].mxu0
        %v3191 = vpop.f32.mrb[0].mxu0
        %v3192 = vadd.f32 0.0, %v3191
        %v3193 = vpop.f32.mrb[0].mxu0
        %3194 = vmatprep.mubr.bf16.mxu0 0
        %3195 = vmatmul.mubr.bf16.gmra.mrb[0].mxu0 %v3047
        %v3196 = vpop.f32.mrb[0].mxu0
        %v3197 = vadd.f32 0.0, %v3196
        %v3198 = vpop.f32.mrb[0].mxu0
        %v3199 = vpop.f32.mrb[0].mxu0
        %v3200 = vadd.f32 0.0, %v3199
        %v3201 = vpop.f32.mrb[0].mxu0
        %3202 = vmatprep.mubr.bf16.mxu0 0
        %3203 = vmatmul.mubr.bf16.gmra.mrb[0].mxu0 %v3048
        %v3204 = vpop.f32.mrb[0].mxu0
        %v3205 = vadd.f32 0.0, %v3204
        %v3206 = vpop.f32.mrb[0].mxu0
        %v3207 = vpop.f32.mrb[0].mxu0
        %v3208 = vadd.f32 0.0, %v3207
        %v3209 = vpop.f32.mrb[0].mxu0
        %3210 = vmatprep.mubr.bf16.mxu0 0
        %3211 = vmatmul.mubr.bf16.gmra.mrb[0].mxu0 %v3049
        %v3212 = vpop.f32.mrb[0].mxu0
        %v3213 = vadd.f32 0.0, %v3212
        %v3214 = vpop.f32.mrb[0].mxu0
        %v3215 = vpop.f32.mrb[0].mxu0
        %v3216 = vadd.f32 0.0, %v3215
        %v3217 = vpop.f32.mrb[0].mxu0
        %3218 = vmatprep.mubr.bf16.mxu0 0
        %3219 = vmatmul.mubr.bf16.gmra.mrb[0].mxu0 %v3050
        %v3220 = vpop.f32.mrb[0].mxu0
        %v3221 = vadd.f32 0.0, %v3220
        %v3222 = vpop.f32.mrb[0].mxu0
        %v3223 = vpop.f32.mrb[0].mxu0
        %v3224 = vadd.f32 0.0, %v3223
        %v3225 = vpop.f32.mrb[0].mxu0
        %3226 = vmatprep.mubr.bf16.mxu0 0
        %3227 = vmatmul.mubr.bf16.gmra.mrb[0].mxu0 %v3051
        %v3228 = vpop.f32.mrb[0].mxu0
        %v3229 = vadd.f32 0.0, %v3228
        %v3230 = vpop.f32.mrb[0].mxu0
        %v3231 = vpop.f32.mrb[0].mxu0
        %v3232 = vadd.f32 0.0, %v3231
        %v3233 = vpop.f32.mrb[0].mxu0
        %3234 = vmatprep.mubr.bf16.mxu0 0
        %3235 = vmatmul.mubr.bf16.gmra.mrb[0].mxu0 %v3052
        %v3236 = vpop.f32.mrb[0].mxu0
        %v3237 = vadd.f32 0.0, %v3236
        %v3238 = vpop.f32.mrb[0].mxu0
        %v3239 = vpop.f32.mrb[0].mxu0
        %v3240 = vadd.f32 0.0, %v3239
        %v3241 = vpop.f32.mrb[0].mxu0
        %3242 = vmatprep.mubr.bf16.mxu0 0
        %3243 = vmatmul.mubr.bf16.gmra.mrb[0].mxu0 %v3053
        %v3244 = vpop.f32.mrb[0].mxu0
        %v3245 = vadd.f32 0.0, %v3244
        %v3246 = vpop.f32.mrb[0].mxu0
        %v3247 = vpop.f32.mrb[0].mxu0
        %v3248 = vadd.f32 0.0, %v3247
        %v3249 = vpop.f32.mrb[0].mxu0
        %3250 = vmatprep.mubr.bf16.mxu0 0
        %3251 = vmatmul.mubr.bf16.gmra.mrb[0].mxu0 %v3054
        %v3252 = vpop.f32.mrb[0].mxu0
        %v3253 = vadd.f32 0.0, %v3252
        %v3254 = vpop.f32.mrb[0].mxu0
        %v3255 = vpop.f32.mrb[0].mxu0
        %v3256 = vadd.f32 0.0, %v3255
        %v3257 = vpop.f32.mrb[0].mxu0
        %3258 = vmatprep.mubr.bf16.mxu0 0
        %3259 = vmatmul.mubr.bf16.gmra.mrb[0].mxu0 %v3055
        %v3260 = vpop.f32.mrb[0].mxu0
        %v3261 = vadd.f32 0.0, %v3260
        %v3262 = vpop.f32.mrb[0].mxu0
        %v3263 = vpop.f32.mrb[0].mxu0
        %v3264 = vadd.f32 0.0, %v3263
        %v3265 = vpop.f32.mrb[0].mxu0
        %3266 = vmatprep.mubr.bf16.mxu0 0
        %3267 = vmatmul.mubr.bf16.gmra.mrb[0].mxu0 %v3056
        %v3268 = vpop.f32.mrb[0].mxu0
        %v3269 = vadd.f32 0.0, %v3268
        %v3270 = vpop.f32.mrb[0].mxu0
        %v3271 = vpop.f32.mrb[0].mxu0
        %v3272 = vadd.f32 0.0, %v3271
        %v3273 = vpop.f32.mrb[0].mxu0
        %3274 = vmatprep.mubr.bf16.mxu0 0
        %3275 = vmatmul.mubr.bf16.gmra.mrb[0].mxu0 %v3057
        %v3276 = vpop.f32.mrb[0].mxu0
        %v3277 = vadd.f32 0.0, %v3276
        %v3278 = vpop.f32.mrb[0].mxu0
        %v3279 = vpop.f32.mrb[0].mxu0
        %v3280 = vadd.f32 0.0, %v3279
        %v3281 = vpop.f32.mrb[0].mxu0
        %3282 = vdwg.mxu0
        %v3283 = vld [vmem:[%s8] sm:$0x1]
        %v3285 = vlaneseq
        %v3286 = vshrl.u32 %v3285, 7
        %v3287 = vsub.s32 0, %v3286
        %v3288 = vrot.slane %v3283, %v3287
        %v3290 = vmul.f32 %v3157, %v3288
        %v3291 = vmul.f32 %v3160, %v3288
        %v3292 = vmul.f32 %v3165, %v3288
        %v3293 = vmul.f32 %v3168, %v3288
        %v3294 = vmul.f32 %v3173, %v3288
        %v3295 = vmul.f32 %v3176, %v3288
        %v3296 = vmul.f32 %v3181, %v3288
        %v3297 = vmul.f32 %v3184, %v3288
        %v3298 = vmul.f32 %v3189, %v3288
        %v3299 = vmul.f32 %v3192, %v3288
        %v3300 = vmul.f32 %v3197, %v3288
        %v3301 = vmul.f32 %v3200, %v3288
        %v3302 = vmul.f32 %v3205, %v3288
        %v3303 = vmul.f32 %v3208, %v3288
        %v3304 = vmul.f32 %v3213, %v3288
        %v3305 = vmul.f32 %v3216, %v3288
        %v3306 = vmul.f32 %v3221, %v3288
        %v3307 = vmul.f32 %v3224, %v3288
        %v3308 = vmul.f32 %v3229, %v3288
        %v3309 = vmul.f32 %v3232, %v3288
        %v3310 = vmul.f32 %v3237, %v3288
        %v3311 = vmul.f32 %v3240, %v3288
        %v3312 = vmul.f32 %v3245, %v3288
        %v3313 = vmul.f32 %v3248, %v3288
        %v3314 = vmul.f32 %v3253, %v3288
        %v3315 = vmul.f32 %v3256, %v3288
        %v3316 = vmul.f32 %v3261, %v3288
        %v3317 = vmul.f32 %v3264, %v3288
        %v3318 = vmul.f32 %v3269, %v3288
        %v3319 = vmul.f32 %v3272, %v3288
        %v3320 = vmul.f32 %v3277, %v3288
        %v3321 = vmul.f32 %v3280, %v3288
        %v3322 = vld [vmem:[%s9] sm:$0x1]
        %v3324 = vlaneseq
        %v3325 = vshrl.u32 %v3324, 7
        %v3326 = vsub.s32 0, %v3325
        %v3327 = vrot.slane %v3322, %v3326
        %v3329 = vadd.f32 %v3290, %v3327
        %v3330 = vadd.f32 %v3291, %v3327
        %v3331 = vadd.f32 %v3292, %v3327
        %v3332 = vadd.f32 %v3293, %v3327
        %v3333 = vadd.f32 %v3294, %v3327
        %v3334 = vadd.f32 %v3295, %v3327
        %v3335 = vadd.f32 %v3296, %v3327
        %v3336 = vadd.f32 %v3297, %v3327
        %v3337 = vadd.f32 %v3298, %v3327
        %v3338 = vadd.f32 %v3299, %v3327
        %v3339 = vadd.f32 %v3300, %v3327
        %v3340 = vadd.f32 %v3301, %v3327
        %v3341 = vadd.f32 %v3302, %v3327
        %v3342 = vadd.f32 %v3303, %v3327
        %v3343 = vadd.f32 %v3304, %v3327
        %v3344 = vadd.f32 %v3305, %v3327
        %v3345 = vadd.f32 %v3306, %v3327
        %v3346 = vadd.f32 %v3307, %v3327
        %v3347 = vadd.f32 %v3308, %v3327
        %v3348 = vadd.f32 %v3309, %v3327
        %v3349 = vadd.f32 %v3310, %v3327
        %v3350 = vadd.f32 %v3311, %v3327
        %v3351 = vadd.f32 %v3312, %v3327
        %v3352 = vadd.f32 %v3313, %v3327
        %v3353 = vadd.f32 %v3314, %v3327
        %v3354 = vadd.f32 %v3315, %v3327
        %v3355 = vadd.f32 %v3316, %v3327
        %v3356 = vadd.f32 %v3317, %v3327
        %v3357 = vadd.f32 %v3318, %v3327
        %v3358 = vadd.f32 %v3319, %v3327
        %v3359 = vadd.f32 %v3320, %v3327
        %v3360 = vadd.f32 %v3321, %v3327
        %v3361 = vsel %vm582, %v3329, 0.0
        %v3362 = vsel %vm582, %v3330, 0.0
        %v3363 = vadd.f32 %v3361, %v3362
        %v3364 = vsel %vm582, %v3331, 0.0
        %v3365 = vadd.f32 %v3363, %v3364
        %v3366 = vsel %vm582, %v3332, 0.0
        %v3367 = vadd.f32 %v3365, %v3366
        %v3368 = vsel %vm582, %v3333, 0.0
        %v3369 = vadd.f32 %v3367, %v3368
        %v3370 = vsel %vm582, %v3334, 0.0
        %v3371 = vadd.f32 %v3369, %v3370
        %v3372 = vsel %vm582, %v3335, 0.0
        %v3373 = vadd.f32 %v3371, %v3372
        %v3374 = vsel %vm582, %v3336, 0.0
        %v3375 = vadd.f32 %v3373, %v3374
        %v3376 = vsel %vm582, %v3337, 0.0
        %v3377 = vadd.f32 %v3375, %v3376
        %v3378 = vsel %vm582, %v3338, 0.0
        %v3379 = vadd.f32 %v3377, %v3378
        %v3380 = vsel %vm582, %v3339, 0.0
        %v3381 = vadd.f32 %v3379, %v3380
        %v3382 = vsel %vm582, %v3340, 0.0
        %v3383 = vadd.f32 %v3381, %v3382
        %v3384 = vsel %vm582, %v3341, 0.0
        %v3385 = vadd.f32 %v3383, %v3384
        %v3386 = vsel %vm582, %v3342, 0.0
        %v3387 = vadd.f32 %v3385, %v3386
        %v3388 = vsel %vm582, %v3343, 0.0
        %v3389 = vadd.f32 %v3387, %v3388
        %v3390 = vsel %vm582, %v3344, 0.0
        %v3391 = vadd.f32 %v3389, %v3390
        %v3392 = vsel %vm582, %v3345, 0.0
        %v3393 = vadd.f32 %v3391, %v3392
        %v3394 = vsel %vm582, %v3346, 0.0
        %v3395 = vadd.f32 %v3393, %v3394
        %v3396 = vsel %vm582, %v3347, 0.0
        %v3397 = vadd.f32 %v3395, %v3396
        %v3398 = vsel %vm582, %v3348, 0.0
        %v3399 = vadd.f32 %v3397, %v3398
        %v3400 = vsel %vm582, %v3349, 0.0
        %v3401 = vadd.f32 %v3399, %v3400
        %v3402 = vsel %vm582, %v3350, 0.0
        %v3403 = vadd.f32 %v3401, %v3402
        %v3404 = vsel %vm582, %v3351, 0.0
        %v3405 = vadd.f32 %v3403, %v3404
        %v3406 = vsel %vm582, %v3352, 0.0
        %v3407 = vadd.f32 %v3405, %v3406
        %v3408 = vsel %vm582, %v3353, 0.0
        %v3409 = vadd.f32 %v3407, %v3408
        %v3410 = vsel %vm582, %v3354, 0.0
        %v3411 = vadd.f32 %v3409, %v3410
        %v3412 = vsel %vm582, %v3355, 0.0
        %v3413 = vadd.f32 %v3411, %v3412
        %v3414 = vsel %vm582, %v3356, 0.0
        %v3415 = vadd.f32 %v3413, %v3414
        %v3416 = vsel %vm582, %v3357, 0.0
        %v3417 = vadd.f32 %v3415, %v3416
        %v3418 = vsel %vm582, %v3358, 0.0
        %v3419 = vadd.f32 %v3417, %v3418
        %v3420 = vsel %vm582, %v3359, 0.0
        %v3421 = vadd.f32 %v3419, %v3420
        %v3422 = vsel %vm582, %v3360, 0.0
        %v3423 = vadd.f32 %v3421, %v3422
        %v3424 = vrot.slane %v3423, 4
        %v3425 = vadd.f32 %v3423, %v3424
        %v3426 = vrot.slane %v3425, 2
        %v3427 = vadd.f32 %v3425, %v3426
        %v3428 = vrot.slane %v3427, 1
        %v3429 = vadd.f32 %v3427, %v3428
        %v3430 = vmul.f32 %v3329, %v3329
        %v3431 = vmul.f32 %v3330, %v3330
        %v3432 = vmul.f32 %v3331, %v3331
        %v3433 = vmul.f32 %v3332, %v3332
        %v3434 = vmul.f32 %v3333, %v3333
        %v3435 = vmul.f32 %v3334, %v3334
        %v3436 = vmul.f32 %v3335, %v3335
        %v3437 = vmul.f32 %v3336, %v3336
        %v3438 = vmul.f32 %v3337, %v3337
        %v3439 = vmul.f32 %v3338, %v3338
        %v3440 = vmul.f32 %v3339, %v3339
        %v3441 = vmul.f32 %v3340, %v3340
        %v3442 = vmul.f32 %v3341, %v3341
        %v3443 = vmul.f32 %v3342, %v3342
        %v3444 = vmul.f32 %v3343, %v3343
        %v3445 = vmul.f32 %v3344, %v3344
        %v3446 = vmul.f32 %v3345, %v3345
        %v3447 = vmul.f32 %v3346, %v3346
        %v3448 = vmul.f32 %v3347, %v3347
        %v3449 = vmul.f32 %v3348, %v3348
        %v3450 = vmul.f32 %v3349, %v3349
        %v3451 = vmul.f32 %v3350, %v3350
        %v3452 = vmul.f32 %v3351, %v3351
        %v3453 = vmul.f32 %v3352, %v3352
        %v3454 = vmul.f32 %v3353, %v3353
        %v3455 = vmul.f32 %v3354, %v3354
        %v3456 = vmul.f32 %v3355, %v3355
        %v3457 = vmul.f32 %v3356, %v3356
        %v3458 = vmul.f32 %v3357, %v3357
        %v3459 = vmul.f32 %v3358, %v3358
        %v3460 = vmul.f32 %v3359, %v3359
        %v3461 = vmul.f32 %v3360, %v3360
        %v3462 = vsel %vm582, %v3430, 0.0
        %v3463 = vsel %vm582, %v3431, 0.0
        %v3464 = vadd.f32 %v3462, %v3463
        %v3465 = vsel %vm582, %v3432, 0.0
        %v3466 = vadd.f32 %v3464, %v3465
        %v3467 = vsel %vm582, %v3433, 0.0
        %v3468 = vadd.f32 %v3466, %v3467
        %v3469 = vsel %vm582, %v3434, 0.0
        %v3470 = vadd.f32 %v3468, %v3469
        %v3471 = vsel %vm582, %v3435, 0.0
        %v3472 = vadd.f32 %v3470, %v3471
        %v3473 = vsel %vm582, %v3436, 0.0
        %v3474 = vadd.f32 %v3472, %v3473
        %v3475 = vsel %vm582, %v3437, 0.0
        %v3476 = vadd.f32 %v3474, %v3475
        %v3477 = vsel %vm582, %v3438, 0.0
        %v3478 = vadd.f32 %v3476, %v3477
        %v3479 = vsel %vm582, %v3439, 0.0
        %v3480 = vadd.f32 %v3478, %v3479
        %v3481 = vsel %vm582, %v3440, 0.0
        %v3482 = vadd.f32 %v3480, %v3481
        %v3483 = vsel %vm582, %v3441, 0.0
        %v3484 = vadd.f32 %v3482, %v3483
        %v3485 = vsel %vm582, %v3442, 0.0
        %v3486 = vadd.f32 %v3484, %v3485
        %v3487 = vsel %vm582, %v3443, 0.0
        %v3488 = vadd.f32 %v3486, %v3487
        %v3489 = vsel %vm582, %v3444, 0.0
        %v3490 = vadd.f32 %v3488, %v3489
        %v3491 = vsel %vm582, %v3445, 0.0
        %v3492 = vadd.f32 %v3490, %v3491
        %v3493 = vsel %vm582, %v3446, 0.0
        %v3494 = vadd.f32 %v3492, %v3493
        %v3495 = vsel %vm582, %v3447, 0.0
        %v3496 = vadd.f32 %v3494, %v3495
        %v3497 = vsel %vm582, %v3448, 0.0
        %v3498 = vadd.f32 %v3496, %v3497
        %v3499 = vsel %vm582, %v3449, 0.0
        %v3500 = vadd.f32 %v3498, %v3499
        %v3501 = vsel %vm582, %v3450, 0.0
        %v3502 = vadd.f32 %v3500, %v3501
        %v3503 = vsel %vm582, %v3451, 0.0
        %v3504 = vadd.f32 %v3502, %v3503
        %v3505 = vsel %vm582, %v3452, 0.0
        %v3506 = vadd.f32 %v3504, %v3505
        %v3507 = vsel %vm582, %v3453, 0.0
        %v3508 = vadd.f32 %v3506, %v3507
        %v3509 = vsel %vm582, %v3454, 0.0
        %v3510 = vadd.f32 %v3508, %v3509
        %v3511 = vsel %vm582, %v3455, 0.0
        %v3512 = vadd.f32 %v3510, %v3511
        %v3513 = vsel %vm582, %v3456, 0.0
        %v3514 = vadd.f32 %v3512, %v3513
        %v3515 = vsel %vm582, %v3457, 0.0
        %v3516 = vadd.f32 %v3514, %v3515
        %v3517 = vsel %vm582, %v3458, 0.0
        %v3518 = vadd.f32 %v3516, %v3517
        %v3519 = vsel %vm582, %v3459, 0.0
        %v3520 = vadd.f32 %v3518, %v3519
        %v3521 = vsel %vm582, %v3460, 0.0
        %v3522 = vadd.f32 %v3520, %v3521
        %v3523 = vsel %vm582, %v3461, 0.0
        %v3524 = vadd.f32 %v3522, %v3523
        %v3525 = vrot.slane %v3524, 4
        %v3526 = vadd.f32 %v3524, %v3525
        %v3527 = vrot.slane %v3526, 2
        %v3528 = vadd.f32 %v3526, %v3527
        %v3529 = vrot.slane %v3528, 1
        %v3530 = vadd.f32 %v3528, %v3529
        %v3531 = vmul.f32 %v3429, 0.00390625
        %v3532 = vmul.f32 %v3531, %v3429
        %v3533 = vsub.f32 %v3530, %v3532
        %v3534 = vmax.f32 %v3533, 0.0
        %v3535 = vmul.f32 %v3534, 0.003921569
        %v3536 = vrsqrt.pop %v3535
        %v3537 = vmul.f32 %v3535, %v3536
        %vm3538 = vcmp.eq.f32.partialorder %v3535, inf
        %v3539 = vsel %vm3538, %v3535, %v3537
        %vm3540 = vcmp.eq.f32.partialorder %v3535, 0.0
        %v3541 = vand.u32 %v3535, 2147483648
        %v3542 = vsel %vm3540, %v3541, %v3539
        %v3543 = vld [vmem:[%s10] sm:$0x1]
        %v3544 = vmul.f32 %v3531, %v3543
        %v3545 = vld [vmem:[%s11] sm:$0x1]
        %v3546 = vmul.f32 %v3542, %v3545
        %v3547 = vadd.f32 %v3544, %v3546
        %v3548 = vld [vmem:[%s12] sm:$0x1]
        %v3549 = vmul.f32 %v3547, %v3548
        %v3550 = vld [vmem:[%s13] sm:$0x1]
        %v3551 = vadd.f32 %v3549, %v3550
        %v3552 = vsub.f32 0.0, %v3551
        %v3553 = vmul.f32 %v3552, 1.442695
        %v3554 = vpow.pop %v3553
        %v3555 = vadd.f32 %v3554, 1.0
        %v3556 = vrcp.pop %v3555
        %v3557 = vmul.f32 1.0, %v3556
        %v3558 = vlaneseq
        %v3559 = vshrl.u32 %v3558, 7
        %v3560 = vsub.s32 0, %v3559
        %v3561 = vrot.slane %v3557, %v3560
        %v3562 = vmul.f32 %v3329, %v3561
        %v3563 = vmul.f32 %v3330, %v3561
        %v3564 = vmul.f32 %v3331, %v3561
        %v3565 = vmul.f32 %v3332, %v3561
        %v3566 = vmul.f32 %v3333, %v3561
        %v3567 = vmul.f32 %v3334, %v3561
        %v3568 = vmul.f32 %v3335, %v3561
        %v3569 = vmul.f32 %v3336, %v3561
        %v3570 = vmul.f32 %v3337, %v3561
        %v3571 = vmul.f32 %v3338, %v3561
        %v3572 = vmul.f32 %v3339, %v3561
        %v3573 = vmul.f32 %v3340, %v3561
        %v3574 = vmul.f32 %v3341, %v3561
        %v3575 = vmul.f32 %v3342, %v3561
        %v3576 = vmul.f32 %v3343, %v3561
        %v3577 = vmul.f32 %v3344, %v3561
        %v3578 = vmul.f32 %v3345, %v3561
        %v3579 = vmul.f32 %v3346, %v3561
        %v3580 = vmul.f32 %v3347, %v3561
        %v3581 = vmul.f32 %v3348, %v3561
        %v3582 = vmul.f32 %v3349, %v3561
        %v3583 = vmul.f32 %v3350, %v3561
        %v3584 = vmul.f32 %v3351, %v3561
        %v3585 = vmul.f32 %v3352, %v3561
        %v3586 = vmul.f32 %v3353, %v3561
        %v3587 = vmul.f32 %v3354, %v3561
        %v3588 = vmul.f32 %v3355, %v3561
        %v3589 = vmul.f32 %v3356, %v3561
        %v3590 = vmul.f32 %v3357, %v3561
        %v3591 = vmul.f32 %v3358, %v3561
        %v3592 = vmul.f32 %v3359, %v3561
        %v3593 = vmul.f32 %v3360, %v3561
        %v3594 = vadd.f32 %v3562, %v502
        %v3595 = vadd.f32 %v3563, %v503
        %v3596 = vadd.f32 %v3564, %v504
        %v3597 = vadd.f32 %v3565, %v505
        %v3598 = vadd.f32 %v3566, %v506
        %v3599 = vadd.f32 %v3567, %v507
        %v3600 = vadd.f32 %v3568, %v508
        %v3601 = vadd.f32 %v3569, %v509
        %v3602 = vadd.f32 %v3570, %v510
        %v3603 = vadd.f32 %v3571, %v511
        %v3604 = vadd.f32 %v3572, %v512
        %v3605 = vadd.f32 %v3573, %v513
        %v3606 = vadd.f32 %v3574, %v514
        %v3607 = vadd.f32 %v3575, %v515
        %v3608 = vadd.f32 %v3576, %v516
        %v3609 = vadd.f32 %v3577, %v517
        %v3610 = vadd.f32 %v3578, %v518
        %v3611 = vadd.f32 %v3579, %v519
        %v3612 = vadd.f32 %v3580, %v520
        %v3613 = vadd.f32 %v3581, %v521
        %v3614 = vadd.f32 %v3582, %v522
        %v3615 = vadd.f32 %v3583, %v523
        %v3616 = vadd.f32 %v3584, %v524
        %v3617 = vadd.f32 %v3585, %v525
        %v3618 = vadd.f32 %v3586, %v526
        %v3619 = vadd.f32 %v3587, %v527
        %v3620 = vadd.f32 %v3588, %v528
        %v3621 = vadd.f32 %v3589, %v529
        %v3622 = vadd.f32 %v3590, %v530
        %v3623 = vadd.f32 %v3591, %v531
        %v3624 = vadd.f32 %v3592, %v532
        %v3625 = vadd.f32 %v3593, %v533
        %v3626 = vmax.f32 %v3594, 0.0
        %v3627 = vmax.f32 %v3595, 0.0
        %v3628 = vmax.f32 %v3596, 0.0
        %v3629 = vmax.f32 %v3597, 0.0
        %v3630 = vmax.f32 %v3598, 0.0
        %v3631 = vmax.f32 %v3599, 0.0
        %v3632 = vmax.f32 %v3600, 0.0
        %v3633 = vmax.f32 %v3601, 0.0
        %v3634 = vmax.f32 %v3602, 0.0
        %v3635 = vmax.f32 %v3603, 0.0
        %v3636 = vmax.f32 %v3604, 0.0
        %v3637 = vmax.f32 %v3605, 0.0
        %v3638 = vmax.f32 %v3606, 0.0
        %v3639 = vmax.f32 %v3607, 0.0
        %v3640 = vmax.f32 %v3608, 0.0
        %v3641 = vmax.f32 %v3609, 0.0
        %v3642 = vmax.f32 %v3610, 0.0
        %v3643 = vmax.f32 %v3611, 0.0
        %v3644 = vmax.f32 %v3612, 0.0
        %v3645 = vmax.f32 %v3613, 0.0
        %v3646 = vmax.f32 %v3614, 0.0
        %v3647 = vmax.f32 %v3615, 0.0
        %v3648 = vmax.f32 %v3616, 0.0
        %v3649 = vmax.f32 %v3617, 0.0
        %v3650 = vmax.f32 %v3618, 0.0
        %v3651 = vmax.f32 %v3619, 0.0
        %v3652 = vmax.f32 %v3620, 0.0
        %v3653 = vmax.f32 %v3621, 0.0
        %v3654 = vmax.f32 %v3622, 0.0
        %v3655 = vmax.f32 %v3623, 0.0
        %v3656 = vmax.f32 %v3624, 0.0
        %v3657 = vmax.f32 %v3625, 0.0
        %3658 = vst.msk [vmem:[%s500] sm:$0xff] %vm582, %v3626
        %3659 = vst.msk [vmem:[%s500 + $0x8] sm:$0xff] %vm582, %v3627
        %3660 = vst.msk [vmem:[%s500 + $0x10] sm:$0xff] %vm582, %v3628
        %3661 = vst.msk [vmem:[%s500 + $0x18] sm:$0xff] %vm582, %v3629
        %3662 = vst.msk [vmem:[%s500 + $0x20] sm:$0xff] %vm582, %v3630
        %3663 = vst.msk [vmem:[%s500 + $0x28] sm:$0xff] %vm582, %v3631
        %3664 = vst.msk [vmem:[%s500 + $0x30] sm:$0xff] %vm582, %v3632
        %3665 = vst.msk [vmem:[%s500 + $0x38] sm:$0xff] %vm582, %v3633
        %3666 = vst.msk [vmem:[%s500 + $0x40] sm:$0xff] %vm582, %v3634
        %3667 = vst.msk [vmem:[%s500 + $0x48] sm:$0xff] %vm582, %v3635
        %3668 = vst.msk [vmem:[%s500 + $0x50] sm:$0xff] %vm582, %v3636
        %3669 = vst.msk [vmem:[%s500 + $0x58] sm:$0xff] %vm582, %v3637
        %3670 = vst.msk [vmem:[%s500 + $0x60] sm:$0xff] %vm582, %v3638
        %3671 = vst.msk [vmem:[%s500 + $0x68] sm:$0xff] %vm582, %v3639
        %3672 = vst.msk [vmem:[%s500 + $0x70] sm:$0xff] %vm582, %v3640
        %3673 = vst.msk [vmem:[%s500 + $0x78] sm:$0xff] %vm582, %v3641
        %3674 = vst.msk [vmem:[%s500 + $0x80] sm:$0xff] %vm582, %v3642
        %3675 = vst.msk [vmem:[%s500 + $0x88] sm:$0xff] %vm582, %v3643
        %3676 = vst.msk [vmem:[%s500 + $0x90] sm:$0xff] %vm582, %v3644
        %3677 = vst.msk [vmem:[%s500 + $0x98] sm:$0xff] %vm582, %v3645
        %3678 = vst.msk [vmem:[%s500 + $0xa0] sm:$0xff] %vm582, %v3646
        %3679 = vst.msk [vmem:[%s500 + $0xa8] sm:$0xff] %vm582, %v3647
        %3680 = vst.msk [vmem:[%s500 + $0xb0] sm:$0xff] %vm582, %v3648
        %3681 = vst.msk [vmem:[%s500 + $0xb8] sm:$0xff] %vm582, %v3649
        %3682 = vst.msk [vmem:[%s500 + $0xc0] sm:$0xff] %vm582, %v3650
        %3683 = vst.msk [vmem:[%s500 + $0xc8] sm:$0xff] %vm582, %v3651
        %3684 = vst.msk [vmem:[%s500 + $0xd0] sm:$0xff] %vm582, %v3652
        %3685 = vst.msk [vmem:[%s500 + $0xd8] sm:$0xff] %vm582, %v3653
        %3686 = vst.msk [vmem:[%s500 + $0xe0] sm:$0xff] %vm582, %v3654
        %3687 = vst.msk [vmem:[%s500 + $0xe8] sm:$0xff] %vm582, %v3655
        %3688 = vst.msk [vmem:[%s500 + $0xf0] sm:$0xff] %vm582, %v3656
        %3689 = vst.msk [vmem:[%s500 + $0xf8] sm:$0xff] %vm582, %v3657
        %s3690 = sand.u32 %s339, 1
        %s3691 = scalar_lea.sflag [#allocation5], %s3690
        %s3692 = sand.u32 %s339, 1
        %s3693 = smul.addr %s3692, 256
        %s3694 = scalar_lea.vmem [#allocation8], %s3693
        // Predicated region
        $region85: #{tpu_custom_call.1} parent=75 // pred_check
          %p3695 = pneg %p349
        $region86: #{tpu_custom_call.1} parent=75 // pred_check_branch
          %3697 = sbr.rel (%p3695) target = $region88
        $region87: #{tpu_custom_call.1} parent=75 // pred_region
          %s3699 = ssub.s32 4096, 4096
          %3700 = vsyncadd %s3691, %s3699
          %s3701 = smul.addr %s32, 32
          %s3702 = smul.addr %s3701, 128
          %s3703 = scalar_lea.hbm %s14, %s3702
          %s3704 = sshll.u32 %s3694, 4
          %s3705 = int_to_ptr.vmem [resolvable:$true] %s3704
          %3710 = dma.vmem_to_hbm [thread:$0]  %s3705, 4096, %s3703, %s3691, 128, 128, 8
        $region88: #{tpu_custom_call.1} parent=75 // pred_fallthru
          _
      $region76: #{tpu_custom_call.1} parent=5 // pred_fallthru
        _
      %p3711 = scmp.le.s32.totalorder 2, %s27
      // Predicated region
      $region89: #{tpu_custom_call.1} parent=5 // pred_check
        %p3712 = pneg %p3711
      $region90: #{tpu_custom_call.1} parent=5 // pred_check_branch
        %3714 = sbr.rel (%p3712) target = $region92
      $region91: #{tpu_custom_call.1} parent=5 // pred_region
        %s3715 = ssub.s32 %s27, 2
        // Predicated region
        $region93: #{tpu_custom_call.1} parent=91 // pred_check
          %p3716 = pneg %p355
        $region94: #{tpu_custom_call.1} parent=91 // pred_check_branch
          %3718 = sbr.rel (%p3716) target = $region96
        $region95: #{tpu_custom_call.1} parent=91 // pred_region
          %s3719 = sand.u32 %s340, 1
          %s3720 = scalar_lea.sflag [#allocation5], %s3719
          %s3721 = sand.u32 %s340, 1
          %s3722 = smul.addr %s3721, 256
          %s3723 = scalar_lea.vmem [#allocation8], %s3722
          %3724 = dma.done %s3720, 4096
        $region96: #{tpu_custom_call.1} parent=91 // pred_fallthru
          _
      $region92: #{tpu_custom_call.1} parent=5 // pred_fallthru
        _
    $region6: #{tpu_custom_call.1} parent=1 // loop_footer
      %s31 = sadd.s32 1, %s27
    $region7: #{tpu_custom_call.1} parent=1 // loop_footer_branch
      %26 = sbr.rel target = $region3
    $region8: #{tpu_custom_call.1} parent=1 // loop_exit
      _
    %3725 = vsyncpa [#allocation4], 1
    %s3726 = scalar_lea.sflag [#allocation4], 1
    %3727 = vsyncpa %s3726, 1
    %3728 = vsyncpa [#allocation7], 1
    %3729 = vsyncpa [#allocation5], 1
    %s3730 = scalar_lea.sflag [#allocation5], 1
    %3731 = vsyncpa %s3730, 1

</llo_original>
